<compile_context>
chip_gen: v7x
topology: tpu7x:2x2x1
jax: 0.10.0
libtpu: 0.0.40
codegen_flags: <defaults>
</compile_context>

<pallas_src>
import functools

import jax
import jax.numpy as jnp
from jax.experimental import pallas as pl
from jax.experimental.pallas import tpu as pltpu

IN_DIM = 1024   # in_features of first Linear
FC_DIM = 64     # fc_dim (out_features of second Linear)
FC_PAD = 128    # lane-padded output width (sliced back to FC_DIM outside)


def _round_up(n: int, m: int) -> int:
    return ((n + m - 1) // m) * m


def _default_bf16_epilogue() -> bool:
    """bf16 tanh epilogue only where the VPU/EUP have a bf16 path (v6e/v7x)."""
    try:
        kind = jax.devices()[0].device_kind.lower()
    except Exception:
        return False
    return any(tag in kind for tag in ("v6", "v7", "7x"))


def _pick_block(B: int, block_b: int) -> int:
    """Batch tile: multiple of 8, large for MXU, >=2 grid steps for big B."""
    target = max(256, _round_up(pl.cdiv(B, 2), 256))  # aim for >=2 iters (v7x: 2 TCs)
    return min(block_b, target, _round_up(B, 8))


def _fcs_kernel(x_ref, w1_ref, b1_ref, w2_ref, b2_ref, o_ref, *, bf16_epilogue):
    # Cast the streamed f32 activations to bf16 on-chip (hidden under the MXU).
    x = x_ref[...].astype(jnp.bfloat16)
    # First Linear(1024 -> 1024): bf16 MXU matmul, f32 accumulation.
    h = jnp.dot(x, w1_ref[...], preferred_element_type=jnp.float32)
    h = h + b1_ref[...]                       # f32 bias add
    if bf16_epilogue:
        # v6e/v7x: bf16 tanh (EUP bf16 path) also produces the bf16 MXU input.
        h = jnp.tanh(h.astype(jnp.bfloat16))
    else:
        # v5e and older: f32 tanh, then cast for the second MXU matmul.
        h = jnp.tanh(h).astype(jnp.bfloat16)
    # Second Linear(1024 -> 128 padded): bf16 MXU matmul, f32 accumulation.
    y = jnp.dot(h, w2_ref[...], preferred_element_type=jnp.float32)
    y = jnp.tanh(y + b2_ref[...])
    o_ref[...] = y.astype(o_ref.dtype)


def prepare_fcs_params(w1, b1, w2, b2):
    """One-time weight formatting (hoisted out of the per-call forward path).

    w1: (1024, 1024), b1: (1024,) or (1, 1024), w2: (1024, 64), b2: (64,) or (1, 64).
    Weights are stored (in_features, out_features), i.e. y = x @ W + b
    (equivalent to PyTorch's x @ W.T with its (out, in) layout).
    """
    w1b = w1.astype(jnp.bfloat16)
    b1f = jnp.asarray(b1, jnp.float32).reshape(1, IN_DIM)
    # Pad second-layer weights/bias from 64 -> 128 lanes with zero columns so
    # the kernel writes a full, unmasked 128-wide lane-dense output.
    w2p = jnp.zeros((IN_DIM, FC_PAD), jnp.bfloat16)
    w2p = w2p.at[:, :FC_DIM].set(w2.astype(jnp.bfloat16))
    b2p = jnp.zeros((1, FC_PAD), jnp.float32)
    b2p = b2p.at[:, :FC_DIM].set(jnp.asarray(b2, jnp.float32).reshape(1, FC_DIM))
    return w1b, b1f, w2p, b2p


def fcs_forward(x, params, *, block_b: int = 1024, bf16_epilogue=None):
    """x: (B, 1024) float32, params from prepare_fcs_params -> (B, 64) float32."""
    w1b, b1f, w2p, b2p = params
    B, D = x.shape
    assert D == IN_DIM
    if bf16_epilogue is None:
        bf16_epilogue = _default_bf16_epilogue()

    bb = _pick_block(B, block_b)
    grid = (pl.cdiv(B, bb),)   # ragged last block handled by pipeline masking

    out = pl.pallas_call(
        functools.partial(_fcs_kernel, bf16_epilogue=bf16_epilogue),
        out_shape=jax.ShapeDtypeStruct((B, FC_PAD), jnp.float32),
        grid_spec=pltpu.PrefetchScalarGridSpec(
            num_scalar_prefetch=0,
            grid=grid,
            in_specs=[
                pl.BlockSpec((bb, IN_DIM), lambda i: (i, 0)),       # x tile (f32, streamed)
                pl.BlockSpec((IN_DIM, IN_DIM), lambda i: (0, 0)),   # W1 (bf16, resident)
                pl.BlockSpec((1, IN_DIM), lambda i: (0, 0)),        # b1 (f32)
                pl.BlockSpec((IN_DIM, FC_PAD), lambda i: (0, 0)),   # W2 (bf16, resident, padded)
                pl.BlockSpec((1, FC_PAD), lambda i: (0, 0)),        # b2 (f32, padded)
            ],
            out_specs=pl.BlockSpec((bb, FC_PAD), lambda i: (i, 0)),
        ),
        compiler_params=pltpu.CompilerParams(
            dimension_semantics=("parallel",),
            # bb=1024 tile: ~8 MiB x (double-buffered f32) + 4.5 MiB weights
            # + ~6.5 MiB intermediates + 1 MiB out  => ~20 MiB peak; 48 MiB
            # scoped limit leaves headroom on v5e/v6e (128 MiB) and v7x (64 MiB).
            vmem_limit_bytes=48 * 1024 * 1024,
        ),
    )(x, w1b, b1f, w2p, b2p)

    # Drop the lane padding of the second layer (128 -> 64 columns).
    return out[:, :FC_DIM]


def init_params(key):
    """Deterministic init mimicking nn.Linear's uniform(-1/sqrt(fan_in), +)."""
    k1, k2, k3, k4 = jax.random.split(key, 4)
    bound = 1.0 / jnp.sqrt(IN_DIM)
    w1 = jax.random.uniform(k1, (IN_DIM, IN_DIM), jnp.float32, -bound, bound)
    b1 = jax.random.uniform(k2, (1, IN_DIM), jnp.float32, -bound, bound)
    w2 = jax.random.uniform(k3, (IN_DIM, FC_DIM), jnp.float32, -bound, bound)
    b2 = jax.random.uniform(k4, (1, FC_DIM), jnp.float32, -bound, bound)
    return w1, b1, w2, b2


if __name__ == "__main__":
    key = jax.random.PRNGKey(0)
    kx, kp = jax.random.split(key)
    # Small batch; 20 is deliberately not a multiple of 8 to exercise the
    # ragged-tail (masked last block) path. Feature dim is fixed at 1024.
    B = 20
    x = jax.random.normal(kx, (B, IN_DIM), jnp.float32)
    w1, b1, w2, b2 = init_params(kp)

    # One-time weight formatting (not part of the per-call forward path).
    params = prepare_fcs_params(w1, b1, w2, b2)

    # NOTE: dropout=0.1 exists in __init__ but is never applied in forward().
    out = fcs_forward(x, params)
    out = jax.block_until_ready(out)

    # Reference in plain JAX (f32). Kernel uses bf16 matmul inputs (and a bf16
    # tanh epilogue on v6e/v7x) with f32 accumulation -> loosened tolerance;
    # outputs are tanh-bounded.
    ref = jnp.tanh(jnp.tanh(x @ w1 + b1) @ w2 + b2)
    assert out.shape == (B, FC_DIM)
    assert jnp.allclose(out, ref, atol=3e-2, rtol=3e-2), (
        float(jnp.max(jnp.abs(out - ref))))
    print("KERNEL_OK")
</pallas_src>

<mosaic_0001>
module attributes {stable_mosaic.version = 11 : i64} {
  func.func @_fcs_kernel(%arg0: i32, %arg1: memref<24x1024xf32, #tpu.memory_space<vmem>>, %arg2: memref<1024x1024xbf16, #tpu.memory_space<vmem>>, %arg3: memref<1x1024xf32, #tpu.memory_space<vmem>>, %arg4: memref<1024x128xbf16, #tpu.memory_space<vmem>>, %arg5: memref<1x128xf32, #tpu.memory_space<vmem>>, %arg6: memref<24x128xf32, #tpu.memory_space<vmem>>) attributes {dimension_semantics = [#tpu.dimension_semantics<parallel>], iteration_bounds = array<i64: 1>, scalar_prefetch = 0 : i64, scratch_operands = 0 : i64, tpu.core_type = #tpu.core_type<tc>, window_params = [{transform_indices = @transform_0, window_bounds = array<i64: 24, 1024>}, {pipeline_mode = #tpu.pipeline_mode<synchronous>, transform_indices = @transform_1, window_bounds = array<i64: 1024, 1024>}, {pipeline_mode = #tpu.pipeline_mode<synchronous>, transform_indices = @transform_2, window_bounds = array<i64: 1, 1024>}, {pipeline_mode = #tpu.pipeline_mode<synchronous>, transform_indices = @transform_3, window_bounds = array<i64: 1024, 128>}, {pipeline_mode = #tpu.pipeline_mode<synchronous>, transform_indices = @transform_4, window_bounds = array<i64: 1, 128>}, {transform_indices = @transform_5, window_bounds = array<i64: 24, 128>}]} {
    %c0 = arith.constant 0 : index
    %c0_0 = arith.constant 0 : index
    %0 = vector.load %arg1[%c0, %c0_0] : memref<24x1024xf32, #tpu.memory_space<vmem>>, vector<24x1024xf32>
    %1 = arith.truncf %0 : vector<24x1024xf32> to vector<24x1024xbf16>
    %c0_1 = arith.constant 0 : index
    %c0_2 = arith.constant 0 : index
    %2 = vector.load %arg2[%c0_1, %c0_2] : memref<1024x1024xbf16, #tpu.memory_space<vmem>>, vector<1024x1024xbf16>
    %cst = arith.constant dense<0.000000e+00> : vector<24x1024xf32>
    %3 = tpu.matmul %1, %2, %cst {dimension_numbers = #tpu.dot_dimension_numbers<[1], [0], [0], [1], [0, 0, 1, 1], [], []>} : vector<24x1024xbf16>, vector<1024x1024xbf16>, vector<24x1024xf32> -> vector<24x1024xf32>
    %c0_3 = arith.constant 0 : index
    %c0_4 = arith.constant 0 : index
    %4 = vector.load %arg3[%c0_3, %c0_4] : memref<1x1024xf32, #tpu.memory_space<vmem>>, vector<1x1024xf32>
    %5 = vector.broadcast %4 : vector<1x1024xf32> to vector<24x1024xf32>
    %6 = arith.addf %3, %5 : vector<24x1024xf32>
    %7 = math.tanh %6 : vector<24x1024xf32>
    %8 = arith.truncf %7 : vector<24x1024xf32> to vector<24x1024xbf16>
    %c0_5 = arith.constant 0 : index
    %c0_6 = arith.constant 0 : index
    %9 = vector.load %arg4[%c0_5, %c0_6] : memref<1024x128xbf16, #tpu.memory_space<vmem>>, vector<1024x128xbf16>
    %cst_7 = arith.constant dense<0.000000e+00> : vector<24x128xf32>
    %10 = tpu.matmul %8, %9, %cst_7 {dimension_numbers = #tpu.dot_dimension_numbers<[1], [0], [0], [1], [0, 0, 1, 1], [], []>} : vector<24x1024xbf16>, vector<1024x128xbf16>, vector<24x128xf32> -> vector<24x128xf32>
    %c0_8 = arith.constant 0 : index
    %c0_9 = arith.constant 0 : index
    %11 = vector.load %arg5[%c0_8, %c0_9] : memref<1x128xf32, #tpu.memory_space<vmem>>, vector<1x128xf32>
    %12 = vector.broadcast %11 : vector<1x128xf32> to vector<24x128xf32>
    %13 = arith.addf %10, %12 : vector<24x128xf32>
    %14 = math.tanh %13 : vector<24x128xf32>
    %c0_10 = arith.constant 0 : index
    %c0_11 = arith.constant 0 : index
    %15 = vector.load %arg6[%c0_10, %c0_11] : memref<24x128xf32, #tpu.memory_space<vmem>>, vector<24x128xf32>
    tpu.vector_store %arg6[%c0_10, %c0_11], %14 {strides = array<i32>} : memref<24x128xf32, #tpu.memory_space<vmem>>, vector<24x128xf32>,
    return
  }
  func.func @transform_0(%arg0: i32) -> (i32, i32) {
    %c0_i32 = arith.constant 0 : i32
    %c0_i32_0 = arith.constant 0 : i32
    return %arg0, %c0_i32 : i32, i32
  }
  func.func @transform_1(%arg0: i32) -> (i32, i32) {
    %c0_i32 = arith.constant 0 : i32
    %c0_i32_0 = arith.constant 0 : i32
    %c0_i32_1 = arith.constant 0 : i32
    return %c0_i32, %c0_i32_0 : i32, i32
  }
  func.func @transform_2(%arg0: i32) -> (i32, i32) {
    %c0_i32 = arith.constant 0 : i32
    %c0_i32_0 = arith.constant 0 : i32
    %c0_i32_1 = arith.constant 0 : i32
    return %c0_i32, %c0_i32_0 : i32, i32
  }
  func.func @transform_3(%arg0: i32) -> (i32, i32) {
    %c0_i32 = arith.constant 0 : i32
    %c0_i32_0 = arith.constant 0 : i32
    %c0_i32_1 = arith.constant 0 : i32
    return %c0_i32, %c0_i32_0 : i32, i32
  }
  func.func @transform_4(%arg0: i32) -> (i32, i32) {
    %c0_i32 = arith.constant 0 : i32
    %c0_i32_0 = arith.constant 0 : i32
    %c0_i32_1 = arith.constant 0 : i32
    return %c0_i32, %c0_i32_0 : i32, i32
  }
  func.func @transform_5(%arg0: i32) -> (i32, i32) {
    %c0_i32 = arith.constant 0 : i32
    %c0_i32_0 = arith.constant 0 : i32
    return %arg0, %c0_i32 : i32, i32
  }
}

</mosaic_0001>

<llo_original>
// kernel: tpu_custom_call.1
$region0: #{tpu_custom_call.1}
  #allocation0 [shape = 'u32[]', space=smem, size = 0x4, offset = 0x4, fixed_abs, tag = 'smem constant byte address 0x4 - core index']
  #allocation1 [shape = 'u32[144,128]{1,0:T(1,128)}', space=vmem, size = 0x12000, scoped, tag = 'internal scratch']
  %s0 = inlined_call_operand.hbm [shape: f32[20,1024], index: 0, kind: input, shape index: {}]
  %s1 = inlined_call_operand.hbm [shape: bf16[1024,1024], index: 1, kind: input, shape index: {}]
  %s2 = inlined_call_operand.hbm [shape: f32[1,1024], index: 2, kind: input, shape index: {}]
  %s3 = inlined_call_operand.hbm [shape: bf16[1024,128], index: 3, kind: input, shape index: {}]
  %s4 = inlined_call_operand.hbm [shape: f32[1,128], index: 4, kind: input, shape index: {}]
  %s5 = inlined_call_operand.hbm [shape: f32[20,128], index: 5, kind: output, shape index: {}]
  %s6 = sld [smem:[#allocation0]]
  $region50: #{tpu_custom_call.1} parent=0
    _
  %s8 = ssub.s32 1, %s6
  %s9 = scalar_select 0, %s8, %s6
  $region1: #{tpu_custom_call.1} parent=0
    #allocation2 [shape = 'u8[98304]{0}', space=vmem, size = 0x18000, scoped, tag = 'input window, operand 0, single buffered']
    #allocation3 [shape = 's32[1]{0}', space=sflag, size = 0x4, scoped, tag = 'scoped memory for tpu_custom_call.1']
    #allocation4 [shape = 's32[1]{0}', space=sflag, size = 0x4, scoped, tag = 'scoped memory for tpu_custom_call.1']
    #allocation5 [shape = 'u8[2097152]{0}', space=vmem, size = 0x200000, scoped, tag = 'input window, operand 1, single buffered']
    #allocation6 [shape = 's32[1]{0}', space=sflag, size = 0x4, scoped, tag = 'scoped memory for tpu_custom_call.1']
    #allocation7 [shape = 'u8[4096]{0}', space=vmem, size = 0x1000, scoped, tag = 'input window, operand 2, single buffered']
    #allocation8 [shape = 'u8[262144]{0}', space=vmem, size = 0x40000, scoped, tag = 'input window, operand 3, single buffered']
    #allocation9 [shape = 's32[1]{0}', space=sflag, size = 0x4, scoped, tag = 'scoped memory for tpu_custom_call.1']
    #allocation10 [shape = 'u8[512]{0}', space=vmem, size = 0x400, scoped, tag = 'input window, operand 4, single buffered']
    #allocation11 [shape = 'u8[12288]{0}', space=vmem, size = 0x3000, scoped, tag = 'output window, operand 0, single buffered']
    %10 = vsyncpa [#allocation3], 0
    %11 = vsyncpa [#allocation6], 0
    %12 = vsyncpa [#allocation9], 0
    %13 = vsyncpa [#allocation4], 0
    // Predicated region
    $region2: #{tpu_custom_call.1} parent=1 // pred_check
      _
    $region3: #{tpu_custom_call.1} parent=1 // pred_check_branch
      %15 = sbr.rel (0) target = $region5
    $region4: #{tpu_custom_call.1} parent=1 // pred_region
      %s17 = ssub.s32 3072, 3072
      %18 = vsyncadd [#allocation3], %s17
      %s19 = sshll.u32 [#allocation2], 4
      %s20 = int_to_ptr.vmem [resolvable:$true] %s19
      %25 = dma.hbm_to_vmem [thread:$0]  %s0, 3072, %s20, [#allocation3], 1024, 1024, 64
    $region5: #{tpu_custom_call.1} parent=1 // pred_fallthru
      _
    // Predicated region
    $region6: #{tpu_custom_call.1} parent=1 // pred_check
      _
    $region7: #{tpu_custom_call.1} parent=1 // pred_check_branch
      %27 = sbr.rel (0) target = $region9
    $region8: #{tpu_custom_call.1} parent=1 // pred_region
      %s29 = ssub.s32 65536, 65536
      %30 = vsyncadd [#allocation6], %s29
      %s31 = sshll.u32 [#allocation5], 4
      %s32 = int_to_ptr.vmem [resolvable:$true] %s31
      %37 = dma.hbm_to_vmem [thread:$0]  %s1, 65536, %s32, [#allocation6], 512, 512, 32
    $region9: #{tpu_custom_call.1} parent=1 // pred_fallthru
      _
    // Predicated region
    $region10: #{tpu_custom_call.1} parent=1 // pred_check
      _
    $region11: #{tpu_custom_call.1} parent=1 // pred_check_branch
      %39 = sbr.rel (0) target = $region13
    $region12: #{tpu_custom_call.1} parent=1 // pred_region
      %s41 = ssub.s32 128, 128
      %42 = vsyncadd [#allocation6], %s41
      %s44 = sshll.u32 [#allocation7], 4
      %s45 = int_to_ptr.vmem [resolvable:$true] %s44
      %47 = dma.hbm_to_vmem [thread:$0]  %s2, 128, %s45, [#allocation6]
    $region13: #{tpu_custom_call.1} parent=1 // pred_fallthru
      _
    // Predicated region
    $region14: #{tpu_custom_call.1} parent=1 // pred_check
      _
    $region15: #{tpu_custom_call.1} parent=1 // pred_check_branch
      %49 = sbr.rel (0) target = $region17
    $region16: #{tpu_custom_call.1} parent=1 // pred_region
      %s51 = ssub.s32 8192, 8192
      %52 = vsyncadd [#allocation9], %s51
      %s53 = sshll.u32 [#allocation8], 4
      %s54 = int_to_ptr.vmem [resolvable:$true] %s53
      %59 = dma.hbm_to_vmem [thread:$0]  %s3, 8192, %s54, [#allocation9], 64, 64, 4
    $region17: #{tpu_custom_call.1} parent=1 // pred_fallthru
      _
    // Predicated region
    $region18: #{tpu_custom_call.1} parent=1 // pred_check
      _
    $region19: #{tpu_custom_call.1} parent=1 // pred_check_branch
      %61 = sbr.rel (0) target = $region21
    $region20: #{tpu_custom_call.1} parent=1 // pred_region
      %s63 = ssub.s32 16, 16
      %64 = vsyncadd [#allocation9], %s63
      %s66 = sshll.u32 [#allocation10], 4
      %s67 = int_to_ptr.vmem [resolvable:$true] %s66
      %69 = dma.hbm_to_vmem [thread:$0]  %s4, 16, %s67, [#allocation9]
    $region21: #{tpu_custom_call.1} parent=1 // pred_fallthru
      _
    // Predicated region
    $region22: #{tpu_custom_call.1} parent=1 // pred_check
      _
    $region23: #{tpu_custom_call.1} parent=1 // pred_check_branch
      %71 = sbr.rel (0) target = $region25
    $region24: #{tpu_custom_call.1} parent=1 // pred_region
      %72 = dma.done [#allocation3], 3072
    $region25: #{tpu_custom_call.1} parent=1 // pred_fallthru
      _
    // Predicated region
    $region26: #{tpu_custom_call.1} parent=1 // pred_check
      _
    $region27: #{tpu_custom_call.1} parent=1 // pred_check_branch
      %74 = sbr.rel (0) target = $region29
    $region28: #{tpu_custom_call.1} parent=1 // pred_region
      %75 = dma.done [#allocation6], 65536
    $region29: #{tpu_custom_call.1} parent=1 // pred_fallthru
      _
    // Predicated region
    $region30: #{tpu_custom_call.1} parent=1 // pred_check
      _
    $region31: #{tpu_custom_call.1} parent=1 // pred_check_branch
      %77 = sbr.rel (0) target = $region33
    $region32: #{tpu_custom_call.1} parent=1 // pred_region
      %78 = dma.done [#allocation6], 128
    $region33: #{tpu_custom_call.1} parent=1 // pred_fallthru
      _
    // Predicated region
    $region34: #{tpu_custom_call.1} parent=1 // pred_check
      _
    $region35: #{tpu_custom_call.1} parent=1 // pred_check_branch
      %80 = sbr.rel (0) target = $region37
    $region36: #{tpu_custom_call.1} parent=1 // pred_region
      %81 = dma.done [#allocation9], 8192
    $region37: #{tpu_custom_call.1} parent=1 // pred_fallthru
      _
    // Predicated region
    $region38: #{tpu_custom_call.1} parent=1 // pred_check
      _
    $region39: #{tpu_custom_call.1} parent=1 // pred_check_branch
      %83 = sbr.rel (0) target = $region41
    $region40: #{tpu_custom_call.1} parent=1 // pred_region
      %84 = dma.done [#allocation9], 16
    $region41: #{tpu_custom_call.1} parent=1 // pred_fallthru
      _
    %v86 = vld [vmem:[#allocation2] sm:$0xff]
    %v87 = vld [vmem:[#allocation2 + $0x8] sm:$0xff]
    %v88 = vld [vmem:[#allocation2 + $0x10] sm:$0xff]
    %v89 = vld [vmem:[#allocation2 + $0x18] sm:$0xff]
    %v90 = vld [vmem:[#allocation2 + $0x20] sm:$0xff]
    %v91 = vld [vmem:[#allocation2 + $0x28] sm:$0xff]
    %v92 = vld [vmem:[#allocation2 + $0x30] sm:$0xff]
    %v93 = vld [vmem:[#allocation2 + $0x38] sm:$0xff]
    %v94 = vld [vmem:[#allocation2 + $0x40] sm:$0xff]
    %v95 = vld [vmem:[#allocation2 + $0x48] sm:$0xff]
    %v96 = vld [vmem:[#allocation2 + $0x50] sm:$0xff]
    %v97 = vld [vmem:[#allocation2 + $0x58] sm:$0xff]
    %v98 = vld [vmem:[#allocation2 + $0x60] sm:$0xff]
    %v99 = vld [vmem:[#allocation2 + $0x68] sm:$0xff]
    %v100 = vld [vmem:[#allocation2 + $0x70] sm:$0xff]
    %v101 = vld [vmem:[#allocation2 + $0x78] sm:$0xff]
    %v102 = vld [vmem:[#allocation2 + $0x80] sm:$0xff]
    %v103 = vld [vmem:[#allocation2 + $0x88] sm:$0xff]
    %v104 = vld [vmem:[#allocation2 + $0x90] sm:$0xff]
    %v105 = vld [vmem:[#allocation2 + $0x98] sm:$0xff]
    %v106 = vld [vmem:[#allocation2 + $0xa0] sm:$0xff]
    %v107 = vld [vmem:[#allocation2 + $0xa8] sm:$0xff]
    %v108 = vld [vmem:[#allocation2 + $0xb0] sm:$0xff]
    %v109 = vld [vmem:[#allocation2 + $0xb8] sm:$0xff]
    %v110 = vpack.c.bf16 %v94, %v86
    %v111 = vpack.c.bf16 %v95, %v87
    %v112 = vpack.c.bf16 %v96, %v88
    %v113 = vpack.c.bf16 %v97, %v89
    %v114 = vpack.c.bf16 %v98, %v90
    %v115 = vpack.c.bf16 %v99, %v91
    %v116 = vpack.c.bf16 %v100, %v92
    %v117 = vpack.c.bf16 %v101, %v93
    %v118 = vpack.c.bf16 %v102, %v102
    %v119 = vpack.c.bf16 %v103, %v103
    %v120 = vpack.c.bf16 %v104, %v104
    %v121 = vpack.c.bf16 %v105, %v105
    %v122 = vpack.c.bf16 %v106, %v106
    %v123 = vpack.c.bf16 %v107, %v107
    %v124 = vpack.c.bf16 %v108, %v108
    %v125 = vpack.c.bf16 %v109, %v109
    %v126 = vld [vmem:[#allocation5] sm:$0xff]
    %v127 = vld [vmem:[#allocation5 + $0x8] sm:$0xff]
    %v128 = vld [vmem:[#allocation5 + $0x10] sm:$0xff]
    %v129 = vld [vmem:[#allocation5 + $0x18] sm:$0xff]
    %v130 = vld [vmem:[#allocation5 + $0x20] sm:$0xff]
    %v131 = vld [vmem:[#allocation5 + $0x28] sm:$0xff]
    %v132 = vld [vmem:[#allocation5 + $0x30] sm:$0xff]
    %v133 = vld [vmem:[#allocation5 + $0x38] sm:$0xff]
    %v134 = vld [vmem:[#allocation5 + $0x40] sm:$0xff]
    %v135 = vld [vmem:[#allocation5 + $0x48] sm:$0xff]
    %v136 = vld [vmem:[#allocation5 + $0x50] sm:$0xff]
    %v137 = vld [vmem:[#allocation5 + $0x58] sm:$0xff]
    %v138 = vld [vmem:[#allocation5 + $0x60] sm:$0xff]
    %v139 = vld [vmem:[#allocation5 + $0x68] sm:$0xff]
    %v140 = vld [vmem:[#allocation5 + $0x70] sm:$0xff]
    %v141 = vld [vmem:[#allocation5 + $0x78] sm:$0xff]
    %v142 = vld [vmem:[#allocation5 + $0x80] sm:$0xff]
    %v143 = vld [vmem:[#allocation5 + $0x88] sm:$0xff]
    %v144 = vld [vmem:[#allocation5 + $0x90] sm:$0xff]
    %v145 = vld [vmem:[#allocation5 + $0x98] sm:$0xff]
    %v146 = vld [vmem:[#allocation5 + $0xa0] sm:$0xff]
    %v147 = vld [vmem:[#allocation5 + $0xa8] sm:$0xff]
    %v148 = vld [vmem:[#allocation5 + $0xb0] sm:$0xff]
    %v149 = vld [vmem:[#allocation5 + $0xb8] sm:$0xff]
    %v150 = vld [vmem:[#allocation5 + $0xc0] sm:$0xff]
    %v151 = vld [vmem:[#allocation5 + $0xc8] sm:$0xff]
    %v152 = vld [vmem:[#allocation5 + $0xd0] sm:$0xff]
    %v153 = vld [vmem:[#allocation5 + $0xd8] sm:$0xff]
    %v154 = vld [vmem:[#allocation5 + $0xe0] sm:$0xff]
    %v155 = vld [vmem:[#allocation5 + $0xe8] sm:$0xff]
    %v156 = vld [vmem:[#allocation5 + $0xf0] sm:$0xff]
    %v157 = vld [vmem:[#allocation5 + $0xf8] sm:$0xff]
    %v158 = vld [vmem:[#allocation5 + $0x100] sm:$0xff]
    %v159 = vld [vmem:[#allocation5 + $0x108] sm:$0xff]
    %v160 = vld [vmem:[#allocation5 + $0x110] sm:$0xff]
    %v161 = vld [vmem:[#allocation5 + $0x118] sm:$0xff]
    %v162 = vld [vmem:[#allocation5 + $0x120] sm:$0xff]
    %v163 = vld [vmem:[#allocation5 + $0x128] sm:$0xff]
    %v164 = vld [vmem:[#allocation5 + $0x130] sm:$0xff]
    %v165 = vld [vmem:[#allocation5 + $0x138] sm:$0xff]
    %v166 = vld [vmem:[#allocation5 + $0x140] sm:$0xff]
    %v167 = vld [vmem:[#allocation5 + $0x148] sm:$0xff]
    %v168 = vld [vmem:[#allocation5 + $0x150] sm:$0xff]
    %v169 = vld [vmem:[#allocation5 + $0x158] sm:$0xff]
    %v170 = vld [vmem:[#allocation5 + $0x160] sm:$0xff]
    %v171 = vld [vmem:[#allocation5 + $0x168] sm:$0xff]
    %v172 = vld [vmem:[#allocation5 + $0x170] sm:$0xff]
    %v173 = vld [vmem:[#allocation5 + $0x178] sm:$0xff]
    %v174 = vld [vmem:[#allocation5 + $0x180] sm:$0xff]
    %v175 = vld [vmem:[#allocation5 + $0x188] sm:$0xff]
    %v176 = vld [vmem:[#allocation5 + $0x190] sm:$0xff]
    %v177 = vld [vmem:[#allocation5 + $0x198] sm:$0xff]
    %v178 = vld [vmem:[#allocation5 + $0x1a0] sm:$0xff]
    %v179 = vld [vmem:[#allocation5 + $0x1a8] sm:$0xff]
    %v180 = vld [vmem:[#allocation5 + $0x1b0] sm:$0xff]
    %v181 = vld [vmem:[#allocation5 + $0x1b8] sm:$0xff]
    %v182 = vld [vmem:[#allocation5 + $0x1c0] sm:$0xff]
    %v183 = vld [vmem:[#allocation5 + $0x1c8] sm:$0xff]
    %v184 = vld [vmem:[#allocation5 + $0x1d0] sm:$0xff]
    %v185 = vld [vmem:[#allocation5 + $0x1d8] sm:$0xff]
    %v186 = vld [vmem:[#allocation5 + $0x1e0] sm:$0xff]
    %v187 = vld [vmem:[#allocation5 + $0x1e8] sm:$0xff]
    %v188 = vld [vmem:[#allocation5 + $0x1f0] sm:$0xff]
    %v189 = vld [vmem:[#allocation5 + $0x1f8] sm:$0xff]
    %v190 = vld [vmem:[#allocation5 + $0x200] sm:$0xff]
    %v191 = vld [vmem:[#allocation5 + $0x208] sm:$0xff]
    %v192 = vld [vmem:[#allocation5 + $0x210] sm:$0xff]
    %v193 = vld [vmem:[#allocation5 + $0x218] sm:$0xff]
    %v194 = vld [vmem:[#allocation5 + $0x220] sm:$0xff]
    %v195 = vld [vmem:[#allocation5 + $0x228] sm:$0xff]
    %v196 = vld [vmem:[#allocation5 + $0x230] sm:$0xff]
    %v197 = vld [vmem:[#allocation5 + $0x238] sm:$0xff]
    %v198 = vld [vmem:[#allocation5 + $0x240] sm:$0xff]
    %v199 = vld [vmem:[#allocation5 + $0x248] sm:$0xff]
    %v200 = vld [vmem:[#allocation5 + $0x250] sm:$0xff]
    %v201 = vld [vmem:[#allocation5 + $0x258] sm:$0xff]
    %v202 = vld [vmem:[#allocation5 + $0x260] sm:$0xff]
    %v203 = vld [vmem:[#allocation5 + $0x268] sm:$0xff]
    %v204 = vld [vmem:[#allocation5 + $0x270] sm:$0xff]
    %v205 = vld [vmem:[#allocation5 + $0x278] sm:$0xff]
    %v206 = vld [vmem:[#allocation5 + $0x280] sm:$0xff]
    %v207 = vld [vmem:[#allocation5 + $0x288] sm:$0xff]
    %v208 = vld [vmem:[#allocation5 + $0x290] sm:$0xff]
    %v209 = vld [vmem:[#allocation5 + $0x298] sm:$0xff]
    %v210 = vld [vmem:[#allocation5 + $0x2a0] sm:$0xff]
    %v211 = vld [vmem:[#allocation5 + $0x2a8] sm:$0xff]
    %v212 = vld [vmem:[#allocation5 + $0x2b0] sm:$0xff]
    %v213 = vld [vmem:[#allocation5 + $0x2b8] sm:$0xff]
    %v214 = vld [vmem:[#allocation5 + $0x2c0] sm:$0xff]
    %v215 = vld [vmem:[#allocation5 + $0x2c8] sm:$0xff]
    %v216 = vld [vmem:[#allocation5 + $0x2d0] sm:$0xff]
    %v217 = vld [vmem:[#allocation5 + $0x2d8] sm:$0xff]
    %v218 = vld [vmem:[#allocation5 + $0x2e0] sm:$0xff]
    %v219 = vld [vmem:[#allocation5 + $0x2e8] sm:$0xff]
    %v220 = vld [vmem:[#allocation5 + $0x2f0] sm:$0xff]
    %v221 = vld [vmem:[#allocation5 + $0x2f8] sm:$0xff]
    %v222 = vld [vmem:[#allocation5 + $0x300] sm:$0xff]
    %v223 = vld [vmem:[#allocation5 + $0x308] sm:$0xff]
    %v224 = vld [vmem:[#allocation5 + $0x310] sm:$0xff]
    %v225 = vld [vmem:[#allocation5 + $0x318] sm:$0xff]
    %v226 = vld [vmem:[#allocation5 + $0x320] sm:$0xff]
    %v227 = vld [vmem:[#allocation5 + $0x328] sm:$0xff]
    %v228 = vld [vmem:[#allocation5 + $0x330] sm:$0xff]
    %v229 = vld [vmem:[#allocation5 + $0x338] sm:$0xff]
    %v230 = vld [vmem:[#allocation5 + $0x340] sm:$0xff]
    %v231 = vld [vmem:[#allocation5 + $0x348] sm:$0xff]
    %v232 = vld [vmem:[#allocation5 + $0x350] sm:$0xff]
    %v233 = vld [vmem:[#allocation5 + $0x358] sm:$0xff]
    %v234 = vld [vmem:[#allocation5 + $0x360] sm:$0xff]
    %v235 = vld [vmem:[#allocation5 + $0x368] sm:$0xff]
    %v236 = vld [vmem:[#allocation5 + $0x370] sm:$0xff]
    %v237 = vld [vmem:[#allocation5 + $0x378] sm:$0xff]
    %v238 = vld [vmem:[#allocation5 + $0x380] sm:$0xff]
    %v239 = vld [vmem:[#allocation5 + $0x388] sm:$0xff]
    %v240 = vld [vmem:[#allocation5 + $0x390] sm:$0xff]
    %v241 = vld [vmem:[#allocation5 + $0x398] sm:$0xff]
    %v242 = vld [vmem:[#allocation5 + $0x3a0] sm:$0xff]
    %v243 = vld [vmem:[#allocation5 + $0x3a8] sm:$0xff]
    %v244 = vld [vmem:[#allocation5 + $0x3b0] sm:$0xff]
    %v245 = vld [vmem:[#allocation5 + $0x3b8] sm:$0xff]
    %v246 = vld [vmem:[#allocation5 + $0x3c0] sm:$0xff]
    %v247 = vld [vmem:[#allocation5 + $0x3c8] sm:$0xff]
    %v248 = vld [vmem:[#allocation5 + $0x3d0] sm:$0xff]
    %v249 = vld [vmem:[#allocation5 + $0x3d8] sm:$0xff]
    %v250 = vld [vmem:[#allocation5 + $0x3e0] sm:$0xff]
    %v251 = vld [vmem:[#allocation5 + $0x3e8] sm:$0xff]
    %v252 = vld [vmem:[#allocation5 + $0x3f0] sm:$0xff]
    %v253 = vld [vmem:[#allocation5 + $0x3f8] sm:$0xff]
    %v254 = vld [vmem:[#allocation5 + $0x400] sm:$0xff]
    %v255 = vld [vmem:[#allocation5 + $0x408] sm:$0xff]
    %v256 = vld [vmem:[#allocation5 + $0x410] sm:$0xff]
    %v257 = vld [vmem:[#allocation5 + $0x418] sm:$0xff]
    %v258 = vld [vmem:[#allocation5 + $0x420] sm:$0xff]
    %v259 = vld [vmem:[#allocation5 + $0x428] sm:$0xff]
    %v260 = vld [vmem:[#allocation5 + $0x430] sm:$0xff]
    %v261 = vld [vmem:[#allocation5 + $0x438] sm:$0xff]
    %v262 = vld [vmem:[#allocation5 + $0x440] sm:$0xff]
    %v263 = vld [vmem:[#allocation5 + $0x448] sm:$0xff]
    %v264 = vld [vmem:[#allocation5 + $0x450] sm:$0xff]
    %v265 = vld [vmem:[#allocation5 + $0x458] sm:$0xff]
    %v266 = vld [vmem:[#allocation5 + $0x460] sm:$0xff]
    %v267 = vld [vmem:[#allocation5 + $0x468] sm:$0xff]
    %v268 = vld [vmem:[#allocation5 + $0x470] sm:$0xff]
    %v269 = vld [vmem:[#allocation5 + $0x478] sm:$0xff]
    %v270 = vld [vmem:[#allocation5 + $0x480] sm:$0xff]
    %v271 = vld [vmem:[#allocation5 + $0x488] sm:$0xff]
    %v272 = vld [vmem:[#allocation5 + $0x490] sm:$0xff]
    %v273 = vld [vmem:[#allocation5 + $0x498] sm:$0xff]
    %v274 = vld [vmem:[#allocation5 + $0x4a0] sm:$0xff]
    %v275 = vld [vmem:[#allocation5 + $0x4a8] sm:$0xff]
    %v276 = vld [vmem:[#allocation5 + $0x4b0] sm:$0xff]
    %v277 = vld [vmem:[#allocation5 + $0x4b8] sm:$0xff]
    %v278 = vld [vmem:[#allocation5 + $0x4c0] sm:$0xff]
    %v279 = vld [vmem:[#allocation5 + $0x4c8] sm:$0xff]
    %v280 = vld [vmem:[#allocation5 + $0x4d0] sm:$0xff]
    %v281 = vld [vmem:[#allocation5 + $0x4d8] sm:$0xff]
    %v282 = vld [vmem:[#allocation5 + $0x4e0] sm:$0xff]
    %v283 = vld [vmem:[#allocation5 + $0x4e8] sm:$0xff]
    %v284 = vld [vmem:[#allocation5 + $0x4f0] sm:$0xff]
    %v285 = vld [vmem:[#allocation5 + $0x4f8] sm:$0xff]
    %v286 = vld [vmem:[#allocation5 + $0x500] sm:$0xff]
    %v287 = vld [vmem:[#allocation5 + $0x508] sm:$0xff]
    %v288 = vld [vmem:[#allocation5 + $0x510] sm:$0xff]
    %v289 = vld [vmem:[#allocation5 + $0x518] sm:$0xff]
    %v290 = vld [vmem:[#allocation5 + $0x520] sm:$0xff]
    %v291 = vld [vmem:[#allocation5 + $0x528] sm:$0xff]
    %v292 = vld [vmem:[#allocation5 + $0x530] sm:$0xff]
    %v293 = vld [vmem:[#allocation5 + $0x538] sm:$0xff]
    %v294 = vld [vmem:[#allocation5 + $0x540] sm:$0xff]
    %v295 = vld [vmem:[#allocation5 + $0x548] sm:$0xff]
    %v296 = vld [vmem:[#allocation5 + $0x550] sm:$0xff]
    %v297 = vld [vmem:[#allocation5 + $0x558] sm:$0xff]
    %v298 = vld [vmem:[#allocation5 + $0x560] sm:$0xff]
    %v299 = vld [vmem:[#allocation5 + $0x568] sm:$0xff]
    %v300 = vld [vmem:[#allocation5 + $0x570] sm:$0xff]
    %v301 = vld [vmem:[#allocation5 + $0x578] sm:$0xff]
    %v302 = vld [vmem:[#allocation5 + $0x580] sm:$0xff]
    %v303 = vld [vmem:[#allocation5 + $0x588] sm:$0xff]
    %v304 = vld [vmem:[#allocation5 + $0x590] sm:$0xff]
    %v305 = vld [vmem:[#allocation5 + $0x598] sm:$0xff]
    %v306 = vld [vmem:[#allocation5 + $0x5a0] sm:$0xff]
    %v307 = vld [vmem:[#allocation5 + $0x5a8] sm:$0xff]
    %v308 = vld [vmem:[#allocation5 + $0x5b0] sm:$0xff]
    %v309 = vld [vmem:[#allocation5 + $0x5b8] sm:$0xff]
    %v310 = vld [vmem:[#allocation5 + $0x5c0] sm:$0xff]
    %v311 = vld [vmem:[#allocation5 + $0x5c8] sm:$0xff]
    %v312 = vld [vmem:[#allocation5 + $0x5d0] sm:$0xff]
    %v313 = vld [vmem:[#allocation5 + $0x5d8] sm:$0xff]
    %v314 = vld [vmem:[#allocation5 + $0x5e0] sm:$0xff]
    %v315 = vld [vmem:[#allocation5 + $0x5e8] sm:$0xff]
    %v316 = vld [vmem:[#allocation5 + $0x5f0] sm:$0xff]
    %v317 = vld [vmem:[#allocation5 + $0x5f8] sm:$0xff]
    %v318 = vld [vmem:[#allocation5 + $0x600] sm:$0xff]
    %v319 = vld [vmem:[#allocation5 + $0x608] sm:$0xff]
    %v320 = vld [vmem:[#allocation5 + $0x610] sm:$0xff]
    %v321 = vld [vmem:[#allocation5 + $0x618] sm:$0xff]
    %v322 = vld [vmem:[#allocation5 + $0x620] sm:$0xff]
    %v323 = vld [vmem:[#allocation5 + $0x628] sm:$0xff]
    %v324 = vld [vmem:[#allocation5 + $0x630] sm:$0xff]
    %v325 = vld [vmem:[#allocation5 + $0x638] sm:$0xff]
    %v326 = vld [vmem:[#allocation5 + $0x640] sm:$0xff]
    %v327 = vld [vmem:[#allocation5 + $0x648] sm:$0xff]
    %v328 = vld [vmem:[#allocation5 + $0x650] sm:$0xff]
    %v329 = vld [vmem:[#allocation5 + $0x658] sm:$0xff]
    %v330 = vld [vmem:[#allocation5 + $0x660] sm:$0xff]
    %v331 = vld [vmem:[#allocation5 + $0x668] sm:$0xff]
    %v332 = vld [vmem:[#allocation5 + $0x670] sm:$0xff]
    %v333 = vld [vmem:[#allocation5 + $0x678] sm:$0xff]
    %v334 = vld [vmem:[#allocation5 + $0x680] sm:$0xff]
    %v335 = vld [vmem:[#allocation5 + $0x688] sm:$0xff]
    %v336 = vld [vmem:[#allocation5 + $0x690] sm:$0xff]
    %v337 = vld [vmem:[#allocation5 + $0x698] sm:$0xff]
    %v338 = vld [vmem:[#allocation5 + $0x6a0] sm:$0xff]
    %v339 = vld [vmem:[#allocation5 + $0x6a8] sm:$0xff]
    %v340 = vld [vmem:[#allocation5 + $0x6b0] sm:$0xff]
    %v341 = vld [vmem:[#allocation5 + $0x6b8] sm:$0xff]
    %v342 = vld [vmem:[#allocation5 + $0x6c0] sm:$0xff]
    %v343 = vld [vmem:[#allocation5 + $0x6c8] sm:$0xff]
    %v344 = vld [vmem:[#allocation5 + $0x6d0] sm:$0xff]
    %v345 = vld [vmem:[#allocation5 + $0x6d8] sm:$0xff]
    %v346 = vld [vmem:[#allocation5 + $0x6e0] sm:$0xff]
    %v347 = vld [vmem:[#allocation5 + $0x6e8] sm:$0xff]
    %v348 = vld [vmem:[#allocation5 + $0x6f0] sm:$0xff]
    %v349 = vld [vmem:[#allocation5 + $0x6f8] sm:$0xff]
    %v350 = vld [vmem:[#allocation5 + $0x700] sm:$0xff]
    %v351 = vld [vmem:[#allocation5 + $0x708] sm:$0xff]
    %v352 = vld [vmem:[#allocation5 + $0x710] sm:$0xff]
    %v353 = vld [vmem:[#allocation5 + $0x718] sm:$0xff]
    %v354 = vld [vmem:[#allocation5 + $0x720] sm:$0xff]
    %v355 = vld [vmem:[#allocation5 + $0x728] sm:$0xff]
    %v356 = vld [vmem:[#allocation5 + $0x730] sm:$0xff]
    %v357 = vld [vmem:[#allocation5 + $0x738] sm:$0xff]
    %v358 = vld [vmem:[#allocation5 + $0x740] sm:$0xff]
    %v359 = vld [vmem:[#allocation5 + $0x748] sm:$0xff]
    %v360 = vld [vmem:[#allocation5 + $0x750] sm:$0xff]
    %v361 = vld [vmem:[#allocation5 + $0x758] sm:$0xff]
    %v362 = vld [vmem:[#allocation5 + $0x760] sm:$0xff]
    %v363 = vld [vmem:[#allocation5 + $0x768] sm:$0xff]
    %v364 = vld [vmem:[#allocation5 + $0x770] sm:$0xff]
    %v365 = vld [vmem:[#allocation5 + $0x778] sm:$0xff]
    %v366 = vld [vmem:[#allocation5 + $0x780] sm:$0xff]
    %v367 = vld [vmem:[#allocation5 + $0x788] sm:$0xff]
    %v368 = vld [vmem:[#allocation5 + $0x790] sm:$0xff]
    %v369 = vld [vmem:[#allocation5 + $0x798] sm:$0xff]
    %v370 = vld [vmem:[#allocation5 + $0x7a0] sm:$0xff]
    %v371 = vld [vmem:[#allocation5 + $0x7a8] sm:$0xff]
    %v372 = vld [vmem:[#allocation5 + $0x7b0] sm:$0xff]
    %v373 = vld [vmem:[#allocation5 + $0x7b8] sm:$0xff]
    %v374 = vld [vmem:[#allocation5 + $0x7c0] sm:$0xff]
    %v375 = vld [vmem:[#allocation5 + $0x7c8] sm:$0xff]
    %v376 = vld [vmem:[#allocation5 + $0x7d0] sm:$0xff]
    %v377 = vld [vmem:[#allocation5 + $0x7d8] sm:$0xff]
    %v378 = vld [vmem:[#allocation5 + $0x7e0] sm:$0xff]
    %v379 = vld [vmem:[#allocation5 + $0x7e8] sm:$0xff]
    %v380 = vld [vmem:[#allocation5 + $0x7f0] sm:$0xff]
    %v381 = vld [vmem:[#allocation5 + $0x7f8] sm:$0xff]
    %v382 = vld [vmem:[#allocation5 + $0x800] sm:$0xff]
    %v383 = vld [vmem:[#allocation5 + $0x808] sm:$0xff]
    %v384 = vld [vmem:[#allocation5 + $0x810] sm:$0xff]
    %v385 = vld [vmem:[#allocation5 + $0x818] sm:$0xff]
    %v386 = vld [vmem:[#allocation5 + $0x820] sm:$0xff]
    %v387 = vld [vmem:[#allocation5 + $0x828] sm:$0xff]
    %v388 = vld [vmem:[#allocation5 + $0x830] sm:$0xff]
    %v389 = vld [vmem:[#allocation5 + $0x838] sm:$0xff]
    %v390 = vld [vmem:[#allocation5 + $0x840] sm:$0xff]
    %v391 = vld [vmem:[#allocation5 + $0x848] sm:$0xff]
    %v392 = vld [vmem:[#allocation5 + $0x850] sm:$0xff]
    %v393 = vld [vmem:[#allocation5 + $0x858] sm:$0xff]
    %v394 = vld [vmem:[#allocation5 + $0x860] sm:$0xff]
    %v395 = vld [vmem:[#allocation5 + $0x868] sm:$0xff]
    %v396 = vld [vmem:[#allocation5 + $0x870] sm:$0xff]
    %v397 = vld [vmem:[#allocation5 + $0x878] sm:$0xff]
    %v398 = vld [vmem:[#allocation5 + $0x880] sm:$0xff]
    %v399 = vld [vmem:[#allocation5 + $0x888] sm:$0xff]
    %v400 = vld [vmem:[#allocation5 + $0x890] sm:$0xff]
    %v401 = vld [vmem:[#allocation5 + $0x898] sm:$0xff]
    %v402 = vld [vmem:[#allocation5 + $0x8a0] sm:$0xff]
    %v403 = vld [vmem:[#allocation5 + $0x8a8] sm:$0xff]
    %v404 = vld [vmem:[#allocation5 + $0x8b0] sm:$0xff]
    %v405 = vld [vmem:[#allocation5 + $0x8b8] sm:$0xff]
    %v406 = vld [vmem:[#allocation5 + $0x8c0] sm:$0xff]
    %v407 = vld [vmem:[#allocation5 + $0x8c8] sm:$0xff]
    %v408 = vld [vmem:[#allocation5 + $0x8d0] sm:$0xff]
    %v409 = vld [vmem:[#allocation5 + $0x8d8] sm:$0xff]
    %v410 = vld [vmem:[#allocation5 + $0x8e0] sm:$0xff]
    %v411 = vld [vmem:[#allocation5 + $0x8e8] sm:$0xff]
    %v412 = vld [vmem:[#allocation5 + $0x8f0] sm:$0xff]
    %v413 = vld [vmem:[#allocation5 + $0x8f8] sm:$0xff]
    %v414 = vld [vmem:[#allocation5 + $0x900] sm:$0xff]
    %v415 = vld [vmem:[#allocation5 + $0x908] sm:$0xff]
    %v416 = vld [vmem:[#allocation5 + $0x910] sm:$0xff]
    %v417 = vld [vmem:[#allocation5 + $0x918] sm:$0xff]
    %v418 = vld [vmem:[#allocation5 + $0x920] sm:$0xff]
    %v419 = vld [vmem:[#allocation5 + $0x928] sm:$0xff]
    %v420 = vld [vmem:[#allocation5 + $0x930] sm:$0xff]
    %v421 = vld [vmem:[#allocation5 + $0x938] sm:$0xff]
    %v422 = vld [vmem:[#allocation5 + $0x940] sm:$0xff]
    %v423 = vld [vmem:[#allocation5 + $0x948] sm:$0xff]
    %v424 = vld [vmem:[#allocation5 + $0x950] sm:$0xff]
    %v425 = vld [vmem:[#allocation5 + $0x958] sm:$0xff]
    %v426 = vld [vmem:[#allocation5 + $0x960] sm:$0xff]
    %v427 = vld [vmem:[#allocation5 + $0x968] sm:$0xff]
    %v428 = vld [vmem:[#allocation5 + $0x970] sm:$0xff]
    %v429 = vld [vmem:[#allocation5 + $0x978] sm:$0xff]
    %v430 = vld [vmem:[#allocation5 + $0x980] sm:$0xff]
    %v431 = vld [vmem:[#allocation5 + $0x988] sm:$0xff]
    %v432 = vld [vmem:[#allocation5 + $0x990] sm:$0xff]
    %v433 = vld [vmem:[#allocation5 + $0x998] sm:$0xff]
    %v434 = vld [vmem:[#allocation5 + $0x9a0] sm:$0xff]
    %v435 = vld [vmem:[#allocation5 + $0x9a8] sm:$0xff]
    %v436 = vld [vmem:[#allocation5 + $0x9b0] sm:$0xff]
    %v437 = vld [vmem:[#allocation5 + $0x9b8] sm:$0xff]
    %v438 = vld [vmem:[#allocation5 + $0x9c0] sm:$0xff]
    %v439 = vld [vmem:[#allocation5 + $0x9c8] sm:$0xff]
    %v440 = vld [vmem:[#allocation5 + $0x9d0] sm:$0xff]
    %v441 = vld [vmem:[#allocation5 + $0x9d8] sm:$0xff]
    %v442 = vld [vmem:[#allocation5 + $0x9e0] sm:$0xff]
    %v443 = vld [vmem:[#allocation5 + $0x9e8] sm:$0xff]
    %v444 = vld [vmem:[#allocation5 + $0x9f0] sm:$0xff]
    %v445 = vld [vmem:[#allocation5 + $0x9f8] sm:$0xff]
    %v446 = vld [vmem:[#allocation5 + $0xa00] sm:$0xff]
    %v447 = vld [vmem:[#allocation5 + $0xa08] sm:$0xff]
    %v448 = vld [vmem:[#allocation5 + $0xa10] sm:$0xff]
    %v449 = vld [vmem:[#allocation5 + $0xa18] sm:$0xff]
    %v450 = vld [vmem:[#allocation5 + $0xa20] sm:$0xff]
    %v451 = vld [vmem:[#allocation5 + $0xa28] sm:$0xff]
    %v452 = vld [vmem:[#allocation5 + $0xa30] sm:$0xff]
    %v453 = vld [vmem:[#allocation5 + $0xa38] sm:$0xff]
    %v454 = vld [vmem:[#allocation5 + $0xa40] sm:$0xff]
    %v455 = vld [vmem:[#allocation5 + $0xa48] sm:$0xff]
    %v456 = vld [vmem:[#allocation5 + $0xa50] sm:$0xff]
    %v457 = vld [vmem:[#allocation5 + $0xa58] sm:$0xff]
    %v458 = vld [vmem:[#allocation5 + $0xa60] sm:$0xff]
    %v459 = vld [vmem:[#allocation5 + $0xa68] sm:$0xff]
    %v460 = vld [vmem:[#allocation5 + $0xa70] sm:$0xff]
    %v461 = vld [vmem:[#allocation5 + $0xa78] sm:$0xff]
    %v462 = vld [vmem:[#allocation5 + $0xa80] sm:$0xff]
    %v463 = vld [vmem:[#allocation5 + $0xa88] sm:$0xff]
    %v464 = vld [vmem:[#allocation5 + $0xa90] sm:$0xff]
    %v465 = vld [vmem:[#allocation5 + $0xa98] sm:$0xff]
    %v466 = vld [vmem:[#allocation5 + $0xaa0] sm:$0xff]
    %v467 = vld [vmem:[#allocation5 + $0xaa8] sm:$0xff]
    %v468 = vld [vmem:[#allocation5 + $0xab0] sm:$0xff]
    %v469 = vld [vmem:[#allocation5 + $0xab8] sm:$0xff]
    %v470 = vld [vmem:[#allocation5 + $0xac0] sm:$0xff]
    %v471 = vld [vmem:[#allocation5 + $0xac8] sm:$0xff]
    %v472 = vld [vmem:[#allocation5 + $0xad0] sm:$0xff]
    %v473 = vld [vmem:[#allocation5 + $0xad8] sm:$0xff]
    %v474 = vld [vmem:[#allocation5 + $0xae0] sm:$0xff]
    %v475 = vld [vmem:[#allocation5 + $0xae8] sm:$0xff]
    %v476 = vld [vmem:[#allocation5 + $0xaf0] sm:$0xff]
    %v477 = vld [vmem:[#allocation5 + $0xaf8] sm:$0xff]
    %v478 = vld [vmem:[#allocation5 + $0xb00] sm:$0xff]
    %v479 = vld [vmem:[#allocation5 + $0xb08] sm:$0xff]
    %v480 = vld [vmem:[#allocation5 + $0xb10] sm:$0xff]
    %v481 = vld [vmem:[#allocation5 + $0xb18] sm:$0xff]
    %v482 = vld [vmem:[#allocation5 + $0xb20] sm:$0xff]
    %v483 = vld [vmem:[#allocation5 + $0xb28] sm:$0xff]
    %v484 = vld [vmem:[#allocation5 + $0xb30] sm:$0xff]
    %v485 = vld [vmem:[#allocation5 + $0xb38] sm:$0xff]
    %v486 = vld [vmem:[#allocation5 + $0xb40] sm:$0xff]
    %v487 = vld [vmem:[#allocation5 + $0xb48] sm:$0xff]
    %v488 = vld [vmem:[#allocation5 + $0xb50] sm:$0xff]
    %v489 = vld [vmem:[#allocation5 + $0xb58] sm:$0xff]
    %v490 = vld [vmem:[#allocation5 + $0xb60] sm:$0xff]
    %v491 = vld [vmem:[#allocation5 + $0xb68] sm:$0xff]
    %v492 = vld [vmem:[#allocation5 + $0xb70] sm:$0xff]
    %v493 = vld [vmem:[#allocation5 + $0xb78] sm:$0xff]
    %v494 = vld [vmem:[#allocation5 + $0xb80] sm:$0xff]
    %v495 = vld [vmem:[#allocation5 + $0xb88] sm:$0xff]
    %v496 = vld [vmem:[#allocation5 + $0xb90] sm:$0xff]
    %v497 = vld [vmem:[#allocation5 + $0xb98] sm:$0xff]
    %v498 = vld [vmem:[#allocation5 + $0xba0] sm:$0xff]
    %v499 = vld [vmem:[#allocation5 + $0xba8] sm:$0xff]
    %v500 = vld [vmem:[#allocation5 + $0xbb0] sm:$0xff]
    %v501 = vld [vmem:[#allocation5 + $0xbb8] sm:$0xff]
    %v502 = vld [vmem:[#allocation5 + $0xbc0] sm:$0xff]
    %v503 = vld [vmem:[#allocation5 + $0xbc8] sm:$0xff]
    %v504 = vld [vmem:[#allocation5 + $0xbd0] sm:$0xff]
    %v505 = vld [vmem:[#allocation5 + $0xbd8] sm:$0xff]
    %v506 = vld [vmem:[#allocation5 + $0xbe0] sm:$0xff]
    %v507 = vld [vmem:[#allocation5 + $0xbe8] sm:$0xff]
    %v508 = vld [vmem:[#allocation5 + $0xbf0] sm:$0xff]
    %v509 = vld [vmem:[#allocation5 + $0xbf8] sm:$0xff]
    %v510 = vld [vmem:[#allocation5 + $0xc00] sm:$0xff]
    %v511 = vld [vmem:[#allocation5 + $0xc08] sm:$0xff]
    %v512 = vld [vmem:[#allocation5 + $0xc10] sm:$0xff]
    %v513 = vld [vmem:[#allocation5 + $0xc18] sm:$0xff]
    %v514 = vld [vmem:[#allocation5 + $0xc20] sm:$0xff]
    %v515 = vld [vmem:[#allocation5 + $0xc28] sm:$0xff]
    %v516 = vld [vmem:[#allocation5 + $0xc30] sm:$0xff]
    %v517 = vld [vmem:[#allocation5 + $0xc38] sm:$0xff]
    %v518 = vld [vmem:[#allocation5 + $0xc40] sm:$0xff]
    %v519 = vld [vmem:[#allocation5 + $0xc48] sm:$0xff]
    %v520 = vld [vmem:[#allocation5 + $0xc50] sm:$0xff]
    %v521 = vld [vmem:[#allocation5 + $0xc58] sm:$0xff]
    %v522 = vld [vmem:[#allocation5 + $0xc60] sm:$0xff]
    %v523 = vld [vmem:[#allocation5 + $0xc68] sm:$0xff]
    %v524 = vld [vmem:[#allocation5 + $0xc70] sm:$0xff]
    %v525 = vld [vmem:[#allocation5 + $0xc78] sm:$0xff]
    %v526 = vld [vmem:[#allocation5 + $0xc80] sm:$0xff]
    %v527 = vld [vmem:[#allocation5 + $0xc88] sm:$0xff]
    %v528 = vld [vmem:[#allocation5 + $0xc90] sm:$0xff]
    %v529 = vld [vmem:[#allocation5 + $0xc98] sm:$0xff]
    %v530 = vld [vmem:[#allocation5 + $0xca0] sm:$0xff]
    %v531 = vld [vmem:[#allocation5 + $0xca8] sm:$0xff]
    %v532 = vld [vmem:[#allocation5 + $0xcb0] sm:$0xff]
    %v533 = vld [vmem:[#allocation5 + $0xcb8] sm:$0xff]
    %v534 = vld [vmem:[#allocation5 + $0xcc0] sm:$0xff]
    %v535 = vld [vmem:[#allocation5 + $0xcc8] sm:$0xff]
    %v536 = vld [vmem:[#allocation5 + $0xcd0] sm:$0xff]
    %v537 = vld [vmem:[#allocation5 + $0xcd8] sm:$0xff]
    %v538 = vld [vmem:[#allocation5 + $0xce0] sm:$0xff]
    %v539 = vld [vmem:[#allocation5 + $0xce8] sm:$0xff]
    %v540 = vld [vmem:[#allocation5 + $0xcf0] sm:$0xff]
    %v541 = vld [vmem:[#allocation5 + $0xcf8] sm:$0xff]
    %v542 = vld [vmem:[#allocation5 + $0xd00] sm:$0xff]
    %v543 = vld [vmem:[#allocation5 + $0xd08] sm:$0xff]
    %v544 = vld [vmem:[#allocation5 + $0xd10] sm:$0xff]
    %v545 = vld [vmem:[#allocation5 + $0xd18] sm:$0xff]
    %v546 = vld [vmem:[#allocation5 + $0xd20] sm:$0xff]
    %v547 = vld [vmem:[#allocation5 + $0xd28] sm:$0xff]
    %v548 = vld [vmem:[#allocation5 + $0xd30] sm:$0xff]
    %v549 = vld [vmem:[#allocation5 + $0xd38] sm:$0xff]
    %v550 = vld [vmem:[#allocation5 + $0xd40] sm:$0xff]
    %v551 = vld [vmem:[#allocation5 + $0xd48] sm:$0xff]
    %v552 = vld [vmem:[#allocation5 + $0xd50] sm:$0xff]
    %v553 = vld [vmem:[#allocation5 + $0xd58] sm:$0xff]
    %v554 = vld [vmem:[#allocation5 + $0xd60] sm:$0xff]
    %v555 = vld [vmem:[#allocation5 + $0xd68] sm:$0xff]
    %v556 = vld [vmem:[#allocation5 + $0xd70] sm:$0xff]
    %v557 = vld [vmem:[#allocation5 + $0xd78] sm:$0xff]
    %v558 = vld [vmem:[#allocation5 + $0xd80] sm:$0xff]
    %v559 = vld [vmem:[#allocation5 + $0xd88] sm:$0xff]
    %v560 = vld [vmem:[#allocation5 + $0xd90] sm:$0xff]
    %v561 = vld [vmem:[#allocation5 + $0xd98] sm:$0xff]
    %v562 = vld [vmem:[#allocation5 + $0xda0] sm:$0xff]
    %v563 = vld [vmem:[#allocation5 + $0xda8] sm:$0xff]
    %v564 = vld [vmem:[#allocation5 + $0xdb0] sm:$0xff]
    %v565 = vld [vmem:[#allocation5 + $0xdb8] sm:$0xff]
    %v566 = vld [vmem:[#allocation5 + $0xdc0] sm:$0xff]
    %v567 = vld [vmem:[#allocation5 + $0xdc8] sm:$0xff]
    %v568 = vld [vmem:[#allocation5 + $0xdd0] sm:$0xff]
    %v569 = vld [vmem:[#allocation5 + $0xdd8] sm:$0xff]
    %v570 = vld [vmem:[#allocation5 + $0xde0] sm:$0xff]
    %v571 = vld [vmem:[#allocation5 + $0xde8] sm:$0xff]
    %v572 = vld [vmem:[#allocation5 + $0xdf0] sm:$0xff]
    %v573 = vld [vmem:[#allocation5 + $0xdf8] sm:$0xff]
    %v574 = vld [vmem:[#allocation5 + $0xe00] sm:$0xff]
    %v575 = vld [vmem:[#allocation5 + $0xe08] sm:$0xff]
    %v576 = vld [vmem:[#allocation5 + $0xe10] sm:$0xff]
    %v577 = vld [vmem:[#allocation5 + $0xe18] sm:$0xff]
    %v578 = vld [vmem:[#allocation5 + $0xe20] sm:$0xff]
    %v579 = vld [vmem:[#allocation5 + $0xe28] sm:$0xff]
    %v580 = vld [vmem:[#allocation5 + $0xe30] sm:$0xff]
    %v581 = vld [vmem:[#allocation5 + $0xe38] sm:$0xff]
    %v582 = vld [vmem:[#allocation5 + $0xe40] sm:$0xff]
    %v583 = vld [vmem:[#allocation5 + $0xe48] sm:$0xff]
    %v584 = vld [vmem:[#allocation5 + $0xe50] sm:$0xff]
    %v585 = vld [vmem:[#allocation5 + $0xe58] sm:$0xff]
    %v586 = vld [vmem:[#allocation5 + $0xe60] sm:$0xff]
    %v587 = vld [vmem:[#allocation5 + $0xe68] sm:$0xff]
    %v588 = vld [vmem:[#allocation5 + $0xe70] sm:$0xff]
    %v589 = vld [vmem:[#allocation5 + $0xe78] sm:$0xff]
    %v590 = vld [vmem:[#allocation5 + $0xe80] sm:$0xff]
    %v591 = vld [vmem:[#allocation5 + $0xe88] sm:$0xff]
    %v592 = vld [vmem:[#allocation5 + $0xe90] sm:$0xff]
    %v593 = vld [vmem:[#allocation5 + $0xe98] sm:$0xff]
    %v594 = vld [vmem:[#allocation5 + $0xea0] sm:$0xff]
    %v595 = vld [vmem:[#allocation5 + $0xea8] sm:$0xff]
    %v596 = vld [vmem:[#allocation5 + $0xeb0] sm:$0xff]
    %v597 = vld [vmem:[#allocation5 + $0xeb8] sm:$0xff]
    %v598 = vld [vmem:[#allocation5 + $0xec0] sm:$0xff]
    %v599 = vld [vmem:[#allocation5 + $0xec8] sm:$0xff]
    %v600 = vld [vmem:[#allocation5 + $0xed0] sm:$0xff]
    %v601 = vld [vmem:[#allocation5 + $0xed8] sm:$0xff]
    %v602 = vld [vmem:[#allocation5 + $0xee0] sm:$0xff]
    %v603 = vld [vmem:[#allocation5 + $0xee8] sm:$0xff]
    %v604 = vld [vmem:[#allocation5 + $0xef0] sm:$0xff]
    %v605 = vld [vmem:[#allocation5 + $0xef8] sm:$0xff]
    %v606 = vld [vmem:[#allocation5 + $0xf00] sm:$0xff]
    %v607 = vld [vmem:[#allocation5 + $0xf08] sm:$0xff]
    %v608 = vld [vmem:[#allocation5 + $0xf10] sm:$0xff]
    %v609 = vld [vmem:[#allocation5 + $0xf18] sm:$0xff]
    %v610 = vld [vmem:[#allocation5 + $0xf20] sm:$0xff]
    %v611 = vld [vmem:[#allocation5 + $0xf28] sm:$0xff]
    %v612 = vld [vmem:[#allocation5 + $0xf30] sm:$0xff]
    %v613 = vld [vmem:[#allocation5 + $0xf38] sm:$0xff]
    %v614 = vld [vmem:[#allocation5 + $0xf40] sm:$0xff]
    %v615 = vld [vmem:[#allocation5 + $0xf48] sm:$0xff]
    %v616 = vld [vmem:[#allocation5 + $0xf50] sm:$0xff]
    %v617 = vld [vmem:[#allocation5 + $0xf58] sm:$0xff]
    %v618 = vld [vmem:[#allocation5 + $0xf60] sm:$0xff]
    %v619 = vld [vmem:[#allocation5 + $0xf68] sm:$0xff]
    %v620 = vld [vmem:[#allocation5 + $0xf70] sm:$0xff]
    %v621 = vld [vmem:[#allocation5 + $0xf78] sm:$0xff]
    %v622 = vld [vmem:[#allocation5 + $0xf80] sm:$0xff]
    %v623 = vld [vmem:[#allocation5 + $0xf88] sm:$0xff]
    %v624 = vld [vmem:[#allocation5 + $0xf90] sm:$0xff]
    %v625 = vld [vmem:[#allocation5 + $0xf98] sm:$0xff]
    %v626 = vld [vmem:[#allocation5 + $0xfa0] sm:$0xff]
    %v627 = vld [vmem:[#allocation5 + $0xfa8] sm:$0xff]
    %v628 = vld [vmem:[#allocation5 + $0xfb0] sm:$0xff]
    %v629 = vld [vmem:[#allocation5 + $0xfb8] sm:$0xff]
    %v630 = vld [vmem:[#allocation5 + $0xfc0] sm:$0xff]
    %v631 = vld [vmem:[#allocation5 + $0xfc8] sm:$0xff]
    %v632 = vld [vmem:[#allocation5 + $0xfd0] sm:$0xff]
    %v633 = vld [vmem:[#allocation5 + $0xfd8] sm:$0xff]
    %v634 = vld [vmem:[#allocation5 + $0xfe0] sm:$0xff]
    %v635 = vld [vmem:[#allocation5 + $0xfe8] sm:$0xff]
    %v636 = vld [vmem:[#allocation5 + $0xff0] sm:$0xff]
    %v637 = vld [vmem:[#allocation5 + $0xff8] sm:$0xff]
    %v638 = vld [vmem:[#allocation7] sm:$0xff]
    %v640 = vlaneseq
    %v641 = vshrl.u32 %v640, 7
    %v642 = vsub.s32 0, %v641
    %v643 = vrot.slane %v638, %v642
    %v644 = vlaneseq
    %v645 = vshrl.u32 %v644, 7
    %v646 = vsub.s32 1, %v645
    %v647 = vrot.slane %v638, %v646
    %v648 = vlaneseq
    %v649 = vshrl.u32 %v648, 7
    %v650 = vsub.s32 2, %v649
    %v651 = vrot.slane %v638, %v650
    %v652 = vlaneseq
    %v653 = vshrl.u32 %v652, 7
    %v654 = vsub.s32 3, %v653
    %v655 = vrot.slane %v638, %v654
    %v656 = vlaneseq
    %v657 = vshrl.u32 %v656, 7
    %v658 = vsub.s32 4, %v657
    %v659 = vrot.slane %v638, %v658
    %v660 = vlaneseq
    %v661 = vshrl.u32 %v660, 7
    %v662 = vsub.s32 5, %v661
    %v663 = vrot.slane %v638, %v662
    %v664 = vlaneseq
    %v665 = vshrl.u32 %v664, 7
    %v666 = vsub.s32 6, %v665
    %v667 = vrot.slane %v638, %v666
    %v668 = vlaneseq
    %v669 = vshrl.u32 %v668, 7
    %v670 = vsub.s32 7, %v669
    %v671 = vrot.slane %v638, %v670
    %v1192 = vunpack.c.l.b16 %v126
    %v1193 = vunpack.c.h.b16 %v126
    %v1194 = vunpack.c.l.b16 %v127
    %v1195 = vunpack.c.h.b16 %v127
    %v1196 = vunpack.c.l.b16 %v128
    %v1197 = vunpack.c.h.b16 %v128
    %v1198 = vunpack.c.l.b16 %v129
    %v1199 = vunpack.c.h.b16 %v129
    %v1200 = vunpack.c.l.b16 %v130
    %v1201 = vunpack.c.h.b16 %v130
    %v1202 = vunpack.c.l.b16 %v131
    %v1203 = vunpack.c.h.b16 %v131
    %v1204 = vunpack.c.l.b16 %v132
    %v1205 = vunpack.c.h.b16 %v132
    %v1206 = vunpack.c.l.b16 %v133
    %v1207 = vunpack.c.h.b16 %v133
    %v1208 = vunpack.c.l.b16 %v134
    %v1209 = vunpack.c.h.b16 %v134
    %v1210 = vunpack.c.l.b16 %v135
    %v1211 = vunpack.c.h.b16 %v135
    %v1212 = vunpack.c.l.b16 %v136
    %v1213 = vunpack.c.h.b16 %v136
    %v1214 = vunpack.c.l.b16 %v137
    %v1215 = vunpack.c.h.b16 %v137
    %v1216 = vunpack.c.l.b16 %v138
    %v1217 = vunpack.c.h.b16 %v138
    %v1218 = vunpack.c.l.b16 %v139
    %v1219 = vunpack.c.h.b16 %v139
    %v1220 = vunpack.c.l.b16 %v140
    %v1221 = vunpack.c.h.b16 %v140
    %v1222 = vunpack.c.l.b16 %v141
    %v1223 = vunpack.c.h.b16 %v141
    %v1224 = vunpack.c.l.b16 %v142
    %v1225 = vunpack.c.h.b16 %v142
    %v1226 = vunpack.c.l.b16 %v143
    %v1227 = vunpack.c.h.b16 %v143
    %v1228 = vunpack.c.l.b16 %v144
    %v1229 = vunpack.c.h.b16 %v144
    %v1230 = vunpack.c.l.b16 %v145
    %v1231 = vunpack.c.h.b16 %v145
    %v1232 = vunpack.c.l.b16 %v146
    %v1233 = vunpack.c.h.b16 %v146
    %v1234 = vunpack.c.l.b16 %v147
    %v1235 = vunpack.c.h.b16 %v147
    %v1236 = vunpack.c.l.b16 %v148
    %v1237 = vunpack.c.h.b16 %v148
    %v1238 = vunpack.c.l.b16 %v149
    %v1239 = vunpack.c.h.b16 %v149
    %v1240 = vunpack.c.l.b16 %v150
    %v1241 = vunpack.c.h.b16 %v150
    %v1242 = vunpack.c.l.b16 %v151
    %v1243 = vunpack.c.h.b16 %v151
    %v1244 = vunpack.c.l.b16 %v152
    %v1245 = vunpack.c.h.b16 %v152
    %v1246 = vunpack.c.l.b16 %v153
    %v1247 = vunpack.c.h.b16 %v153
    %v1248 = vunpack.c.l.b16 %v154
    %v1249 = vunpack.c.h.b16 %v154
    %v1250 = vunpack.c.l.b16 %v155
    %v1251 = vunpack.c.h.b16 %v155
    %v1252 = vunpack.c.l.b16 %v156
    %v1253 = vunpack.c.h.b16 %v156
    %v1254 = vunpack.c.l.b16 %v157
    %v1255 = vunpack.c.h.b16 %v157
    %v1256 = vunpack.c.l.b16 %v158
    %v1257 = vunpack.c.h.b16 %v158
    %v1258 = vunpack.c.l.b16 %v159
    %v1259 = vunpack.c.h.b16 %v159
    %v1260 = vunpack.c.l.b16 %v160
    %v1261 = vunpack.c.h.b16 %v160
    %v1262 = vunpack.c.l.b16 %v161
    %v1263 = vunpack.c.h.b16 %v161
    %v1264 = vunpack.c.l.b16 %v162
    %v1265 = vunpack.c.h.b16 %v162
    %v1266 = vunpack.c.l.b16 %v163
    %v1267 = vunpack.c.h.b16 %v163
    %v1268 = vunpack.c.l.b16 %v164
    %v1269 = vunpack.c.h.b16 %v164
    %v1270 = vunpack.c.l.b16 %v165
    %v1271 = vunpack.c.h.b16 %v165
    %v1272 = vunpack.c.l.b16 %v166
    %v1273 = vunpack.c.h.b16 %v166
    %v1274 = vunpack.c.l.b16 %v167
    %v1275 = vunpack.c.h.b16 %v167
    %v1276 = vunpack.c.l.b16 %v168
    %v1277 = vunpack.c.h.b16 %v168
    %v1278 = vunpack.c.l.b16 %v169
    %v1279 = vunpack.c.h.b16 %v169
    %v1280 = vunpack.c.l.b16 %v170
    %v1281 = vunpack.c.h.b16 %v170
    %v1282 = vunpack.c.l.b16 %v171
    %v1283 = vunpack.c.h.b16 %v171
    %v1284 = vunpack.c.l.b16 %v172
    %v1285 = vunpack.c.h.b16 %v172
    %v1286 = vunpack.c.l.b16 %v173
    %v1287 = vunpack.c.h.b16 %v173
    %v1288 = vunpack.c.l.b16 %v174
    %v1289 = vunpack.c.h.b16 %v174
    %v1290 = vunpack.c.l.b16 %v175
    %v1291 = vunpack.c.h.b16 %v175
    %v1292 = vunpack.c.l.b16 %v176
    %v1293 = vunpack.c.h.b16 %v176
    %v1294 = vunpack.c.l.b16 %v177
    %v1295 = vunpack.c.h.b16 %v177
    %v1296 = vunpack.c.l.b16 %v178
    %v1297 = vunpack.c.h.b16 %v178
    %v1298 = vunpack.c.l.b16 %v179
    %v1299 = vunpack.c.h.b16 %v179
    %v1300 = vunpack.c.l.b16 %v180
    %v1301 = vunpack.c.h.b16 %v180
    %v1302 = vunpack.c.l.b16 %v181
    %v1303 = vunpack.c.h.b16 %v181
    %v1304 = vunpack.c.l.b16 %v182
    %v1305 = vunpack.c.h.b16 %v182
    %v1306 = vunpack.c.l.b16 %v183
    %v1307 = vunpack.c.h.b16 %v183
    %v1308 = vunpack.c.l.b16 %v184
    %v1309 = vunpack.c.h.b16 %v184
    %v1310 = vunpack.c.l.b16 %v185
    %v1311 = vunpack.c.h.b16 %v185
    %v1312 = vunpack.c.l.b16 %v186
    %v1313 = vunpack.c.h.b16 %v186
    %v1314 = vunpack.c.l.b16 %v187
    %v1315 = vunpack.c.h.b16 %v187
    %v1316 = vunpack.c.l.b16 %v188
    %v1317 = vunpack.c.h.b16 %v188
    %v1318 = vunpack.c.l.b16 %v189
    %v1319 = vunpack.c.h.b16 %v189
    %v1320 = vunpack.c.l.b16 %v190
    %v1321 = vunpack.c.h.b16 %v190
    %v1322 = vunpack.c.l.b16 %v191
    %v1323 = vunpack.c.h.b16 %v191
    %v1324 = vunpack.c.l.b16 %v192
    %v1325 = vunpack.c.h.b16 %v192
    %v1326 = vunpack.c.l.b16 %v193
    %v1327 = vunpack.c.h.b16 %v193
    %v1328 = vunpack.c.l.b16 %v194
    %v1329 = vunpack.c.h.b16 %v194
    %v1330 = vunpack.c.l.b16 %v195
    %v1331 = vunpack.c.h.b16 %v195
    %v1332 = vunpack.c.l.b16 %v196
    %v1333 = vunpack.c.h.b16 %v196
    %v1334 = vunpack.c.l.b16 %v197
    %v1335 = vunpack.c.h.b16 %v197
    %v1336 = vunpack.c.l.b16 %v198
    %v1337 = vunpack.c.h.b16 %v198
    %v1338 = vunpack.c.l.b16 %v199
    %v1339 = vunpack.c.h.b16 %v199
    %v1340 = vunpack.c.l.b16 %v200
    %v1341 = vunpack.c.h.b16 %v200
    %v1342 = vunpack.c.l.b16 %v201
    %v1343 = vunpack.c.h.b16 %v201
    %v1344 = vunpack.c.l.b16 %v202
    %v1345 = vunpack.c.h.b16 %v202
    %v1346 = vunpack.c.l.b16 %v203
    %v1347 = vunpack.c.h.b16 %v203
    %v1348 = vunpack.c.l.b16 %v204
    %v1349 = vunpack.c.h.b16 %v204
    %v1350 = vunpack.c.l.b16 %v205
    %v1351 = vunpack.c.h.b16 %v205
    %v1352 = vunpack.c.l.b16 %v206
    %v1353 = vunpack.c.h.b16 %v206
    %v1354 = vunpack.c.l.b16 %v207
    %v1355 = vunpack.c.h.b16 %v207
    %v1356 = vunpack.c.l.b16 %v208
    %v1357 = vunpack.c.h.b16 %v208
    %v1358 = vunpack.c.l.b16 %v209
    %v1359 = vunpack.c.h.b16 %v209
    %v1360 = vunpack.c.l.b16 %v210
    %v1361 = vunpack.c.h.b16 %v210
    %v1362 = vunpack.c.l.b16 %v211
    %v1363 = vunpack.c.h.b16 %v211
    %v1364 = vunpack.c.l.b16 %v212
    %v1365 = vunpack.c.h.b16 %v212
    %v1366 = vunpack.c.l.b16 %v213
    %v1367 = vunpack.c.h.b16 %v213
    %v1368 = vunpack.c.l.b16 %v214
    %v1369 = vunpack.c.h.b16 %v214
    %v1370 = vunpack.c.l.b16 %v215
    %v1371 = vunpack.c.h.b16 %v215
    %v1372 = vunpack.c.l.b16 %v216
    %v1373 = vunpack.c.h.b16 %v216
    %v1374 = vunpack.c.l.b16 %v217
    %v1375 = vunpack.c.h.b16 %v217
    %v1376 = vunpack.c.l.b16 %v218
    %v1377 = vunpack.c.h.b16 %v218
    %v1378 = vunpack.c.l.b16 %v219
    %v1379 = vunpack.c.h.b16 %v219
    %v1380 = vunpack.c.l.b16 %v220
    %v1381 = vunpack.c.h.b16 %v220
    %v1382 = vunpack.c.l.b16 %v221
    %v1383 = vunpack.c.h.b16 %v221
    %v1384 = vunpack.c.l.b16 %v222
    %v1385 = vunpack.c.h.b16 %v222
    %v1386 = vunpack.c.l.b16 %v223
    %v1387 = vunpack.c.h.b16 %v223
    %v1388 = vunpack.c.l.b16 %v224
    %v1389 = vunpack.c.h.b16 %v224
    %v1390 = vunpack.c.l.b16 %v225
    %v1391 = vunpack.c.h.b16 %v225
    %v1392 = vunpack.c.l.b16 %v226
    %v1393 = vunpack.c.h.b16 %v226
    %v1394 = vunpack.c.l.b16 %v227
    %v1395 = vunpack.c.h.b16 %v227
    %v1396 = vunpack.c.l.b16 %v228
    %v1397 = vunpack.c.h.b16 %v228
    %v1398 = vunpack.c.l.b16 %v229
    %v1399 = vunpack.c.h.b16 %v229
    %v1400 = vunpack.c.l.b16 %v230
    %v1401 = vunpack.c.h.b16 %v230
    %v1402 = vunpack.c.l.b16 %v231
    %v1403 = vunpack.c.h.b16 %v231
    %v1404 = vunpack.c.l.b16 %v232
    %v1405 = vunpack.c.h.b16 %v232
    %v1406 = vunpack.c.l.b16 %v233
    %v1407 = vunpack.c.h.b16 %v233
    %v1408 = vunpack.c.l.b16 %v234
    %v1409 = vunpack.c.h.b16 %v234
    %v1410 = vunpack.c.l.b16 %v235
    %v1411 = vunpack.c.h.b16 %v235
    %v1412 = vunpack.c.l.b16 %v236
    %v1413 = vunpack.c.h.b16 %v236
    %v1414 = vunpack.c.l.b16 %v237
    %v1415 = vunpack.c.h.b16 %v237
    %v1416 = vunpack.c.l.b16 %v238
    %v1417 = vunpack.c.h.b16 %v238
    %v1418 = vunpack.c.l.b16 %v239
    %v1419 = vunpack.c.h.b16 %v239
    %v1420 = vunpack.c.l.b16 %v240
    %v1421 = vunpack.c.h.b16 %v240
    %v1422 = vunpack.c.l.b16 %v241
    %v1423 = vunpack.c.h.b16 %v241
    %v1424 = vunpack.c.l.b16 %v242
    %v1425 = vunpack.c.h.b16 %v242
    %v1426 = vunpack.c.l.b16 %v243
    %v1427 = vunpack.c.h.b16 %v243
    %v1428 = vunpack.c.l.b16 %v244
    %v1429 = vunpack.c.h.b16 %v244
    %v1430 = vunpack.c.l.b16 %v245
    %v1431 = vunpack.c.h.b16 %v245
    %v1432 = vunpack.c.l.b16 %v246
    %v1433 = vunpack.c.h.b16 %v246
    %v1434 = vunpack.c.l.b16 %v247
    %v1435 = vunpack.c.h.b16 %v247
    %v1436 = vunpack.c.l.b16 %v248
    %v1437 = vunpack.c.h.b16 %v248
    %v1438 = vunpack.c.l.b16 %v249
    %v1439 = vunpack.c.h.b16 %v249
    %v1440 = vunpack.c.l.b16 %v250
    %v1441 = vunpack.c.h.b16 %v250
    %v1442 = vunpack.c.l.b16 %v251
    %v1443 = vunpack.c.h.b16 %v251
    %v1444 = vunpack.c.l.b16 %v252
    %v1445 = vunpack.c.h.b16 %v252
    %v1446 = vunpack.c.l.b16 %v253
    %v1447 = vunpack.c.h.b16 %v253
    %v1448 = vunpack.c.l.b16 %v254
    %v1449 = vunpack.c.h.b16 %v254
    %v1450 = vunpack.c.l.b16 %v255
    %v1451 = vunpack.c.h.b16 %v255
    %v1452 = vunpack.c.l.b16 %v256
    %v1453 = vunpack.c.h.b16 %v256
    %v1454 = vunpack.c.l.b16 %v257
    %v1455 = vunpack.c.h.b16 %v257
    %v1456 = vunpack.c.l.b16 %v258
    %v1457 = vunpack.c.h.b16 %v258
    %v1458 = vunpack.c.l.b16 %v259
    %v1459 = vunpack.c.h.b16 %v259
    %v1460 = vunpack.c.l.b16 %v260
    %v1461 = vunpack.c.h.b16 %v260
    %v1462 = vunpack.c.l.b16 %v261
    %v1463 = vunpack.c.h.b16 %v261
    %v1464 = vunpack.c.l.b16 %v262
    %v1465 = vunpack.c.h.b16 %v262
    %v1466 = vunpack.c.l.b16 %v263
    %v1467 = vunpack.c.h.b16 %v263
    %v1468 = vunpack.c.l.b16 %v264
    %v1469 = vunpack.c.h.b16 %v264
    %v1470 = vunpack.c.l.b16 %v265
    %v1471 = vunpack.c.h.b16 %v265
    %v1472 = vunpack.c.l.b16 %v266
    %v1473 = vunpack.c.h.b16 %v266
    %v1474 = vunpack.c.l.b16 %v267
    %v1475 = vunpack.c.h.b16 %v267
    %v1476 = vunpack.c.l.b16 %v268
    %v1477 = vunpack.c.h.b16 %v268
    %v1478 = vunpack.c.l.b16 %v269
    %v1479 = vunpack.c.h.b16 %v269
    %v1480 = vunpack.c.l.b16 %v270
    %v1481 = vunpack.c.h.b16 %v270
    %v1482 = vunpack.c.l.b16 %v271
    %v1483 = vunpack.c.h.b16 %v271
    %v1484 = vunpack.c.l.b16 %v272
    %v1485 = vunpack.c.h.b16 %v272
    %v1486 = vunpack.c.l.b16 %v273
    %v1487 = vunpack.c.h.b16 %v273
    %v1488 = vunpack.c.l.b16 %v274
    %v1489 = vunpack.c.h.b16 %v274
    %v1490 = vunpack.c.l.b16 %v275
    %v1491 = vunpack.c.h.b16 %v275
    %v1492 = vunpack.c.l.b16 %v276
    %v1493 = vunpack.c.h.b16 %v276
    %v1494 = vunpack.c.l.b16 %v277
    %v1495 = vunpack.c.h.b16 %v277
    %v1496 = vunpack.c.l.b16 %v278
    %v1497 = vunpack.c.h.b16 %v278
    %v1498 = vunpack.c.l.b16 %v279
    %v1499 = vunpack.c.h.b16 %v279
    %v1500 = vunpack.c.l.b16 %v280
    %v1501 = vunpack.c.h.b16 %v280
    %v1502 = vunpack.c.l.b16 %v281
    %v1503 = vunpack.c.h.b16 %v281
    %v1504 = vunpack.c.l.b16 %v282
    %v1505 = vunpack.c.h.b16 %v282
    %v1506 = vunpack.c.l.b16 %v283
    %v1507 = vunpack.c.h.b16 %v283
    %v1508 = vunpack.c.l.b16 %v284
    %v1509 = vunpack.c.h.b16 %v284
    %v1510 = vunpack.c.l.b16 %v285
    %v1511 = vunpack.c.h.b16 %v285
    %v1512 = vunpack.c.l.b16 %v286
    %v1513 = vunpack.c.h.b16 %v286
    %v1514 = vunpack.c.l.b16 %v287
    %v1515 = vunpack.c.h.b16 %v287
    %v1516 = vunpack.c.l.b16 %v288
    %v1517 = vunpack.c.h.b16 %v288
    %v1518 = vunpack.c.l.b16 %v289
    %v1519 = vunpack.c.h.b16 %v289
    %v1520 = vunpack.c.l.b16 %v290
    %v1521 = vunpack.c.h.b16 %v290
    %v1522 = vunpack.c.l.b16 %v291
    %v1523 = vunpack.c.h.b16 %v291
    %v1524 = vunpack.c.l.b16 %v292
    %v1525 = vunpack.c.h.b16 %v292
    %v1526 = vunpack.c.l.b16 %v293
    %v1527 = vunpack.c.h.b16 %v293
    %v1528 = vunpack.c.l.b16 %v294
    %v1529 = vunpack.c.h.b16 %v294
    %v1530 = vunpack.c.l.b16 %v295
    %v1531 = vunpack.c.h.b16 %v295
    %v1532 = vunpack.c.l.b16 %v296
    %v1533 = vunpack.c.h.b16 %v296
    %v1534 = vunpack.c.l.b16 %v297
    %v1535 = vunpack.c.h.b16 %v297
    %v1536 = vunpack.c.l.b16 %v298
    %v1537 = vunpack.c.h.b16 %v298
    %v1538 = vunpack.c.l.b16 %v299
    %v1539 = vunpack.c.h.b16 %v299
    %v1540 = vunpack.c.l.b16 %v300
    %v1541 = vunpack.c.h.b16 %v300
    %v1542 = vunpack.c.l.b16 %v301
    %v1543 = vunpack.c.h.b16 %v301
    %v1544 = vunpack.c.l.b16 %v302
    %v1545 = vunpack.c.h.b16 %v302
    %v1546 = vunpack.c.l.b16 %v303
    %v1547 = vunpack.c.h.b16 %v303
    %v1548 = vunpack.c.l.b16 %v304
    %v1549 = vunpack.c.h.b16 %v304
    %v1550 = vunpack.c.l.b16 %v305
    %v1551 = vunpack.c.h.b16 %v305
    %v1552 = vunpack.c.l.b16 %v306
    %v1553 = vunpack.c.h.b16 %v306
    %v1554 = vunpack.c.l.b16 %v307
    %v1555 = vunpack.c.h.b16 %v307
    %v1556 = vunpack.c.l.b16 %v308
    %v1557 = vunpack.c.h.b16 %v308
    %v1558 = vunpack.c.l.b16 %v309
    %v1559 = vunpack.c.h.b16 %v309
    %v1560 = vunpack.c.l.b16 %v310
    %v1561 = vunpack.c.h.b16 %v310
    %v1562 = vunpack.c.l.b16 %v311
    %v1563 = vunpack.c.h.b16 %v311
    %v1564 = vunpack.c.l.b16 %v312
    %v1565 = vunpack.c.h.b16 %v312
    %v1566 = vunpack.c.l.b16 %v313
    %v1567 = vunpack.c.h.b16 %v313
    %v1568 = vunpack.c.l.b16 %v314
    %v1569 = vunpack.c.h.b16 %v314
    %v1570 = vunpack.c.l.b16 %v315
    %v1571 = vunpack.c.h.b16 %v315
    %v1572 = vunpack.c.l.b16 %v316
    %v1573 = vunpack.c.h.b16 %v316
    %v1574 = vunpack.c.l.b16 %v317
    %v1575 = vunpack.c.h.b16 %v317
    %v1576 = vunpack.c.l.b16 %v318
    %v1577 = vunpack.c.h.b16 %v318
    %v1578 = vunpack.c.l.b16 %v319
    %v1579 = vunpack.c.h.b16 %v319
    %v1580 = vunpack.c.l.b16 %v320
    %v1581 = vunpack.c.h.b16 %v320
    %v1582 = vunpack.c.l.b16 %v321
    %v1583 = vunpack.c.h.b16 %v321
    %v1584 = vunpack.c.l.b16 %v322
    %v1585 = vunpack.c.h.b16 %v322
    %v1586 = vunpack.c.l.b16 %v323
    %v1587 = vunpack.c.h.b16 %v323
    %v1588 = vunpack.c.l.b16 %v324
    %v1589 = vunpack.c.h.b16 %v324
    %v1590 = vunpack.c.l.b16 %v325
    %v1591 = vunpack.c.h.b16 %v325
    %v1592 = vunpack.c.l.b16 %v326
    %v1593 = vunpack.c.h.b16 %v326
    %v1594 = vunpack.c.l.b16 %v327
    %v1595 = vunpack.c.h.b16 %v327
    %v1596 = vunpack.c.l.b16 %v328
    %v1597 = vunpack.c.h.b16 %v328
    %v1598 = vunpack.c.l.b16 %v329
    %v1599 = vunpack.c.h.b16 %v329
    %v1600 = vunpack.c.l.b16 %v330
    %v1601 = vunpack.c.h.b16 %v330
    %v1602 = vunpack.c.l.b16 %v331
    %v1603 = vunpack.c.h.b16 %v331
    %v1604 = vunpack.c.l.b16 %v332
    %v1605 = vunpack.c.h.b16 %v332
    %v1606 = vunpack.c.l.b16 %v333
    %v1607 = vunpack.c.h.b16 %v333
    %v1608 = vunpack.c.l.b16 %v334
    %v1609 = vunpack.c.h.b16 %v334
    %v1610 = vunpack.c.l.b16 %v335
    %v1611 = vunpack.c.h.b16 %v335
    %v1612 = vunpack.c.l.b16 %v336
    %v1613 = vunpack.c.h.b16 %v336
    %v1614 = vunpack.c.l.b16 %v337
    %v1615 = vunpack.c.h.b16 %v337
    %v1616 = vunpack.c.l.b16 %v338
    %v1617 = vunpack.c.h.b16 %v338
    %v1618 = vunpack.c.l.b16 %v339
    %v1619 = vunpack.c.h.b16 %v339
    %v1620 = vunpack.c.l.b16 %v340
    %v1621 = vunpack.c.h.b16 %v340
    %v1622 = vunpack.c.l.b16 %v341
    %v1623 = vunpack.c.h.b16 %v341
    %v1624 = vunpack.c.l.b16 %v342
    %v1625 = vunpack.c.h.b16 %v342
    %v1626 = vunpack.c.l.b16 %v343
    %v1627 = vunpack.c.h.b16 %v343
    %v1628 = vunpack.c.l.b16 %v344
    %v1629 = vunpack.c.h.b16 %v344
    %v1630 = vunpack.c.l.b16 %v345
    %v1631 = vunpack.c.h.b16 %v345
    %v1632 = vunpack.c.l.b16 %v346
    %v1633 = vunpack.c.h.b16 %v346
    %v1634 = vunpack.c.l.b16 %v347
    %v1635 = vunpack.c.h.b16 %v347
    %v1636 = vunpack.c.l.b16 %v348
    %v1637 = vunpack.c.h.b16 %v348
    %v1638 = vunpack.c.l.b16 %v349
    %v1639 = vunpack.c.h.b16 %v349
    %v1640 = vunpack.c.l.b16 %v350
    %v1641 = vunpack.c.h.b16 %v350
    %v1642 = vunpack.c.l.b16 %v351
    %v1643 = vunpack.c.h.b16 %v351
    %v1644 = vunpack.c.l.b16 %v352
    %v1645 = vunpack.c.h.b16 %v352
    %v1646 = vunpack.c.l.b16 %v353
    %v1647 = vunpack.c.h.b16 %v353
    %v1648 = vunpack.c.l.b16 %v354
    %v1649 = vunpack.c.h.b16 %v354
    %v1650 = vunpack.c.l.b16 %v355
    %v1651 = vunpack.c.h.b16 %v355
    %v1652 = vunpack.c.l.b16 %v356
    %v1653 = vunpack.c.h.b16 %v356
    %v1654 = vunpack.c.l.b16 %v357
    %v1655 = vunpack.c.h.b16 %v357
    %v1656 = vunpack.c.l.b16 %v358
    %v1657 = vunpack.c.h.b16 %v358
    %v1658 = vunpack.c.l.b16 %v359
    %v1659 = vunpack.c.h.b16 %v359
    %v1660 = vunpack.c.l.b16 %v360
    %v1661 = vunpack.c.h.b16 %v360
    %v1662 = vunpack.c.l.b16 %v361
    %v1663 = vunpack.c.h.b16 %v361
    %v1664 = vunpack.c.l.b16 %v362
    %v1665 = vunpack.c.h.b16 %v362
    %v1666 = vunpack.c.l.b16 %v363
    %v1667 = vunpack.c.h.b16 %v363
    %v1668 = vunpack.c.l.b16 %v364
    %v1669 = vunpack.c.h.b16 %v364
    %v1670 = vunpack.c.l.b16 %v365
    %v1671 = vunpack.c.h.b16 %v365
    %v1672 = vunpack.c.l.b16 %v366
    %v1673 = vunpack.c.h.b16 %v366
    %v1674 = vunpack.c.l.b16 %v367
    %v1675 = vunpack.c.h.b16 %v367
    %v1676 = vunpack.c.l.b16 %v368
    %v1677 = vunpack.c.h.b16 %v368
    %v1678 = vunpack.c.l.b16 %v369
    %v1679 = vunpack.c.h.b16 %v369
    %v1680 = vunpack.c.l.b16 %v370
    %v1681 = vunpack.c.h.b16 %v370
    %v1682 = vunpack.c.l.b16 %v371
    %v1683 = vunpack.c.h.b16 %v371
    %v1684 = vunpack.c.l.b16 %v372
    %v1685 = vunpack.c.h.b16 %v372
    %v1686 = vunpack.c.l.b16 %v373
    %v1687 = vunpack.c.h.b16 %v373
    %v1688 = vunpack.c.l.b16 %v374
    %v1689 = vunpack.c.h.b16 %v374
    %v1690 = vunpack.c.l.b16 %v375
    %v1691 = vunpack.c.h.b16 %v375
    %v1692 = vunpack.c.l.b16 %v376
    %v1693 = vunpack.c.h.b16 %v376
    %v1694 = vunpack.c.l.b16 %v377
    %v1695 = vunpack.c.h.b16 %v377
    %v1696 = vunpack.c.l.b16 %v378
    %v1697 = vunpack.c.h.b16 %v378
    %v1698 = vunpack.c.l.b16 %v379
    %v1699 = vunpack.c.h.b16 %v379
    %v1700 = vunpack.c.l.b16 %v380
    %v1701 = vunpack.c.h.b16 %v380
    %v1702 = vunpack.c.l.b16 %v381
    %v1703 = vunpack.c.h.b16 %v381
    %v1704 = vunpack.c.l.b16 %v382
    %v1705 = vunpack.c.h.b16 %v382
    %v1706 = vunpack.c.l.b16 %v383
    %v1707 = vunpack.c.h.b16 %v383
    %v1708 = vunpack.c.l.b16 %v384
    %v1709 = vunpack.c.h.b16 %v384
    %v1710 = vunpack.c.l.b16 %v385
    %v1711 = vunpack.c.h.b16 %v385
    %v1712 = vunpack.c.l.b16 %v386
    %v1713 = vunpack.c.h.b16 %v386
    %v1714 = vunpack.c.l.b16 %v387
    %v1715 = vunpack.c.h.b16 %v387
    %v1716 = vunpack.c.l.b16 %v388
    %v1717 = vunpack.c.h.b16 %v388
    %v1718 = vunpack.c.l.b16 %v389
    %v1719 = vunpack.c.h.b16 %v389
    %v1720 = vunpack.c.l.b16 %v390
    %v1721 = vunpack.c.h.b16 %v390
    %v1722 = vunpack.c.l.b16 %v391
    %v1723 = vunpack.c.h.b16 %v391
    %v1724 = vunpack.c.l.b16 %v392
    %v1725 = vunpack.c.h.b16 %v392
    %v1726 = vunpack.c.l.b16 %v393
    %v1727 = vunpack.c.h.b16 %v393
    %v1728 = vunpack.c.l.b16 %v394
    %v1729 = vunpack.c.h.b16 %v394
    %v1730 = vunpack.c.l.b16 %v395
    %v1731 = vunpack.c.h.b16 %v395
    %v1732 = vunpack.c.l.b16 %v396
    %v1733 = vunpack.c.h.b16 %v396
    %v1734 = vunpack.c.l.b16 %v397
    %v1735 = vunpack.c.h.b16 %v397
    %v1736 = vunpack.c.l.b16 %v398
    %v1737 = vunpack.c.h.b16 %v398
    %v1738 = vunpack.c.l.b16 %v399
    %v1739 = vunpack.c.h.b16 %v399
    %v1740 = vunpack.c.l.b16 %v400
    %v1741 = vunpack.c.h.b16 %v400
    %v1742 = vunpack.c.l.b16 %v401
    %v1743 = vunpack.c.h.b16 %v401
    %v1744 = vunpack.c.l.b16 %v402
    %v1745 = vunpack.c.h.b16 %v402
    %v1746 = vunpack.c.l.b16 %v403
    %v1747 = vunpack.c.h.b16 %v403
    %v1748 = vunpack.c.l.b16 %v404
    %v1749 = vunpack.c.h.b16 %v404
    %v1750 = vunpack.c.l.b16 %v405
    %v1751 = vunpack.c.h.b16 %v405
    %v1752 = vunpack.c.l.b16 %v406
    %v1753 = vunpack.c.h.b16 %v406
    %v1754 = vunpack.c.l.b16 %v407
    %v1755 = vunpack.c.h.b16 %v407
    %v1756 = vunpack.c.l.b16 %v408
    %v1757 = vunpack.c.h.b16 %v408
    %v1758 = vunpack.c.l.b16 %v409
    %v1759 = vunpack.c.h.b16 %v409
    %v1760 = vunpack.c.l.b16 %v410
    %v1761 = vunpack.c.h.b16 %v410
    %v1762 = vunpack.c.l.b16 %v411
    %v1763 = vunpack.c.h.b16 %v411
    %v1764 = vunpack.c.l.b16 %v412
    %v1765 = vunpack.c.h.b16 %v412
    %v1766 = vunpack.c.l.b16 %v413
    %v1767 = vunpack.c.h.b16 %v413
    %v1768 = vunpack.c.l.b16 %v414
    %v1769 = vunpack.c.h.b16 %v414
    %v1770 = vunpack.c.l.b16 %v415
    %v1771 = vunpack.c.h.b16 %v415
    %v1772 = vunpack.c.l.b16 %v416
    %v1773 = vunpack.c.h.b16 %v416
    %v1774 = vunpack.c.l.b16 %v417
    %v1775 = vunpack.c.h.b16 %v417
    %v1776 = vunpack.c.l.b16 %v418
    %v1777 = vunpack.c.h.b16 %v418
    %v1778 = vunpack.c.l.b16 %v419
    %v1779 = vunpack.c.h.b16 %v419
    %v1780 = vunpack.c.l.b16 %v420
    %v1781 = vunpack.c.h.b16 %v420
    %v1782 = vunpack.c.l.b16 %v421
    %v1783 = vunpack.c.h.b16 %v421
    %v1784 = vunpack.c.l.b16 %v422
    %v1785 = vunpack.c.h.b16 %v422
    %v1786 = vunpack.c.l.b16 %v423
    %v1787 = vunpack.c.h.b16 %v423
    %v1788 = vunpack.c.l.b16 %v424
    %v1789 = vunpack.c.h.b16 %v424
    %v1790 = vunpack.c.l.b16 %v425
    %v1791 = vunpack.c.h.b16 %v425
    %v1792 = vunpack.c.l.b16 %v426
    %v1793 = vunpack.c.h.b16 %v426
    %v1794 = vunpack.c.l.b16 %v427
    %v1795 = vunpack.c.h.b16 %v427
    %v1796 = vunpack.c.l.b16 %v428
    %v1797 = vunpack.c.h.b16 %v428
    %v1798 = vunpack.c.l.b16 %v429
    %v1799 = vunpack.c.h.b16 %v429
    %v1800 = vunpack.c.l.b16 %v430
    %v1801 = vunpack.c.h.b16 %v430
    %v1802 = vunpack.c.l.b16 %v431
    %v1803 = vunpack.c.h.b16 %v431
    %v1804 = vunpack.c.l.b16 %v432
    %v1805 = vunpack.c.h.b16 %v432
    %v1806 = vunpack.c.l.b16 %v433
    %v1807 = vunpack.c.h.b16 %v433
    %v1808 = vunpack.c.l.b16 %v434
    %v1809 = vunpack.c.h.b16 %v434
    %v1810 = vunpack.c.l.b16 %v435
    %v1811 = vunpack.c.h.b16 %v435
    %v1812 = vunpack.c.l.b16 %v436
    %v1813 = vunpack.c.h.b16 %v436
    %v1814 = vunpack.c.l.b16 %v437
    %v1815 = vunpack.c.h.b16 %v437
    %v1816 = vunpack.c.l.b16 %v438
    %v1817 = vunpack.c.h.b16 %v438
    %v1818 = vunpack.c.l.b16 %v439
    %v1819 = vunpack.c.h.b16 %v439
    %v1820 = vunpack.c.l.b16 %v440
    %v1821 = vunpack.c.h.b16 %v440
    %v1822 = vunpack.c.l.b16 %v441
    %v1823 = vunpack.c.h.b16 %v441
    %v1824 = vunpack.c.l.b16 %v442
    %v1825 = vunpack.c.h.b16 %v442
    %v1826 = vunpack.c.l.b16 %v443
    %v1827 = vunpack.c.h.b16 %v443
    %v1828 = vunpack.c.l.b16 %v444
    %v1829 = vunpack.c.h.b16 %v444
    %v1830 = vunpack.c.l.b16 %v445
    %v1831 = vunpack.c.h.b16 %v445
    %v1832 = vunpack.c.l.b16 %v446
    %v1833 = vunpack.c.h.b16 %v446
    %v1834 = vunpack.c.l.b16 %v447
    %v1835 = vunpack.c.h.b16 %v447
    %v1836 = vunpack.c.l.b16 %v448
    %v1837 = vunpack.c.h.b16 %v448
    %v1838 = vunpack.c.l.b16 %v449
    %v1839 = vunpack.c.h.b16 %v449
    %v1840 = vunpack.c.l.b16 %v450
    %v1841 = vunpack.c.h.b16 %v450
    %v1842 = vunpack.c.l.b16 %v451
    %v1843 = vunpack.c.h.b16 %v451
    %v1844 = vunpack.c.l.b16 %v452
    %v1845 = vunpack.c.h.b16 %v452
    %v1846 = vunpack.c.l.b16 %v453
    %v1847 = vunpack.c.h.b16 %v453
    %v1848 = vunpack.c.l.b16 %v454
    %v1849 = vunpack.c.h.b16 %v454
    %v1850 = vunpack.c.l.b16 %v455
    %v1851 = vunpack.c.h.b16 %v455
    %v1852 = vunpack.c.l.b16 %v456
    %v1853 = vunpack.c.h.b16 %v456
    %v1854 = vunpack.c.l.b16 %v457
    %v1855 = vunpack.c.h.b16 %v457
    %v1856 = vunpack.c.l.b16 %v458
    %v1857 = vunpack.c.h.b16 %v458
    %v1858 = vunpack.c.l.b16 %v459
    %v1859 = vunpack.c.h.b16 %v459
    %v1860 = vunpack.c.l.b16 %v460
    %v1861 = vunpack.c.h.b16 %v460
    %v1862 = vunpack.c.l.b16 %v461
    %v1863 = vunpack.c.h.b16 %v461
    %v1864 = vunpack.c.l.b16 %v462
    %v1865 = vunpack.c.h.b16 %v462
    %v1866 = vunpack.c.l.b16 %v463
    %v1867 = vunpack.c.h.b16 %v463
    %v1868 = vunpack.c.l.b16 %v464
    %v1869 = vunpack.c.h.b16 %v464
    %v1870 = vunpack.c.l.b16 %v465
    %v1871 = vunpack.c.h.b16 %v465
    %v1872 = vunpack.c.l.b16 %v466
    %v1873 = vunpack.c.h.b16 %v466
    %v1874 = vunpack.c.l.b16 %v467
    %v1875 = vunpack.c.h.b16 %v467
    %v1876 = vunpack.c.l.b16 %v468
    %v1877 = vunpack.c.h.b16 %v468
    %v1878 = vunpack.c.l.b16 %v469
    %v1879 = vunpack.c.h.b16 %v469
    %v1880 = vunpack.c.l.b16 %v470
    %v1881 = vunpack.c.h.b16 %v470
    %v1882 = vunpack.c.l.b16 %v471
    %v1883 = vunpack.c.h.b16 %v471
    %v1884 = vunpack.c.l.b16 %v472
    %v1885 = vunpack.c.h.b16 %v472
    %v1886 = vunpack.c.l.b16 %v473
    %v1887 = vunpack.c.h.b16 %v473
    %v1888 = vunpack.c.l.b16 %v474
    %v1889 = vunpack.c.h.b16 %v474
    %v1890 = vunpack.c.l.b16 %v475
    %v1891 = vunpack.c.h.b16 %v475
    %v1892 = vunpack.c.l.b16 %v476
    %v1893 = vunpack.c.h.b16 %v476
    %v1894 = vunpack.c.l.b16 %v477
    %v1895 = vunpack.c.h.b16 %v477
    %v1896 = vunpack.c.l.b16 %v478
    %v1897 = vunpack.c.h.b16 %v478
    %v1898 = vunpack.c.l.b16 %v479
    %v1899 = vunpack.c.h.b16 %v479
    %v1900 = vunpack.c.l.b16 %v480
    %v1901 = vunpack.c.h.b16 %v480
    %v1902 = vunpack.c.l.b16 %v481
    %v1903 = vunpack.c.h.b16 %v481
    %v1904 = vunpack.c.l.b16 %v482
    %v1905 = vunpack.c.h.b16 %v482
    %v1906 = vunpack.c.l.b16 %v483
    %v1907 = vunpack.c.h.b16 %v483
    %v1908 = vunpack.c.l.b16 %v484
    %v1909 = vunpack.c.h.b16 %v484
    %v1910 = vunpack.c.l.b16 %v485
    %v1911 = vunpack.c.h.b16 %v485
    %v1912 = vunpack.c.l.b16 %v486
    %v1913 = vunpack.c.h.b16 %v486
    %v1914 = vunpack.c.l.b16 %v487
    %v1915 = vunpack.c.h.b16 %v487
    %v1916 = vunpack.c.l.b16 %v488
    %v1917 = vunpack.c.h.b16 %v488
    %v1918 = vunpack.c.l.b16 %v489
    %v1919 = vunpack.c.h.b16 %v489
    %v1920 = vunpack.c.l.b16 %v490
    %v1921 = vunpack.c.h.b16 %v490
    %v1922 = vunpack.c.l.b16 %v491
    %v1923 = vunpack.c.h.b16 %v491
    %v1924 = vunpack.c.l.b16 %v492
    %v1925 = vunpack.c.h.b16 %v492
    %v1926 = vunpack.c.l.b16 %v493
    %v1927 = vunpack.c.h.b16 %v493
    %v1928 = vunpack.c.l.b16 %v494
    %v1929 = vunpack.c.h.b16 %v494
    %v1930 = vunpack.c.l.b16 %v495
    %v1931 = vunpack.c.h.b16 %v495
    %v1932 = vunpack.c.l.b16 %v496
    %v1933 = vunpack.c.h.b16 %v496
    %v1934 = vunpack.c.l.b16 %v497
    %v1935 = vunpack.c.h.b16 %v497
    %v1936 = vunpack.c.l.b16 %v498
    %v1937 = vunpack.c.h.b16 %v498
    %v1938 = vunpack.c.l.b16 %v499
    %v1939 = vunpack.c.h.b16 %v499
    %v1940 = vunpack.c.l.b16 %v500
    %v1941 = vunpack.c.h.b16 %v500
    %v1942 = vunpack.c.l.b16 %v501
    %v1943 = vunpack.c.h.b16 %v501
    %v1944 = vunpack.c.l.b16 %v502
    %v1945 = vunpack.c.h.b16 %v502
    %v1946 = vunpack.c.l.b16 %v503
    %v1947 = vunpack.c.h.b16 %v503
    %v1948 = vunpack.c.l.b16 %v504
    %v1949 = vunpack.c.h.b16 %v504
    %v1950 = vunpack.c.l.b16 %v505
    %v1951 = vunpack.c.h.b16 %v505
    %v1952 = vunpack.c.l.b16 %v506
    %v1953 = vunpack.c.h.b16 %v506
    %v1954 = vunpack.c.l.b16 %v507
    %v1955 = vunpack.c.h.b16 %v507
    %v1956 = vunpack.c.l.b16 %v508
    %v1957 = vunpack.c.h.b16 %v508
    %v1958 = vunpack.c.l.b16 %v509
    %v1959 = vunpack.c.h.b16 %v509
    %v1960 = vunpack.c.l.b16 %v510
    %v1961 = vunpack.c.h.b16 %v510
    %v1962 = vunpack.c.l.b16 %v511
    %v1963 = vunpack.c.h.b16 %v511
    %v1964 = vunpack.c.l.b16 %v512
    %v1965 = vunpack.c.h.b16 %v512
    %v1966 = vunpack.c.l.b16 %v513
    %v1967 = vunpack.c.h.b16 %v513
    %v1968 = vunpack.c.l.b16 %v514
    %v1969 = vunpack.c.h.b16 %v514
    %v1970 = vunpack.c.l.b16 %v515
    %v1971 = vunpack.c.h.b16 %v515
    %v1972 = vunpack.c.l.b16 %v516
    %v1973 = vunpack.c.h.b16 %v516
    %v1974 = vunpack.c.l.b16 %v517
    %v1975 = vunpack.c.h.b16 %v517
    %v1976 = vunpack.c.l.b16 %v518
    %v1977 = vunpack.c.h.b16 %v518
    %v1978 = vunpack.c.l.b16 %v519
    %v1979 = vunpack.c.h.b16 %v519
    %v1980 = vunpack.c.l.b16 %v520
    %v1981 = vunpack.c.h.b16 %v520
    %v1982 = vunpack.c.l.b16 %v521
    %v1983 = vunpack.c.h.b16 %v521
    %v1984 = vunpack.c.l.b16 %v522
    %v1985 = vunpack.c.h.b16 %v522
    %v1986 = vunpack.c.l.b16 %v523
    %v1987 = vunpack.c.h.b16 %v523
    %v1988 = vunpack.c.l.b16 %v524
    %v1989 = vunpack.c.h.b16 %v524
    %v1990 = vunpack.c.l.b16 %v525
    %v1991 = vunpack.c.h.b16 %v525
    %v1992 = vunpack.c.l.b16 %v526
    %v1993 = vunpack.c.h.b16 %v526
    %v1994 = vunpack.c.l.b16 %v527
    %v1995 = vunpack.c.h.b16 %v527
    %v1996 = vunpack.c.l.b16 %v528
    %v1997 = vunpack.c.h.b16 %v528
    %v1998 = vunpack.c.l.b16 %v529
    %v1999 = vunpack.c.h.b16 %v529
    %v2000 = vunpack.c.l.b16 %v530
    %v2001 = vunpack.c.h.b16 %v530
    %v2002 = vunpack.c.l.b16 %v531
    %v2003 = vunpack.c.h.b16 %v531
    %v2004 = vunpack.c.l.b16 %v532
    %v2005 = vunpack.c.h.b16 %v532
    %v2006 = vunpack.c.l.b16 %v533
    %v2007 = vunpack.c.h.b16 %v533
    %v2008 = vunpack.c.l.b16 %v534
    %v2009 = vunpack.c.h.b16 %v534
    %v2010 = vunpack.c.l.b16 %v535
    %v2011 = vunpack.c.h.b16 %v535
    %v2012 = vunpack.c.l.b16 %v536
    %v2013 = vunpack.c.h.b16 %v536
    %v2014 = vunpack.c.l.b16 %v537
    %v2015 = vunpack.c.h.b16 %v537
    %v2016 = vunpack.c.l.b16 %v538
    %v2017 = vunpack.c.h.b16 %v538
    %v2018 = vunpack.c.l.b16 %v539
    %v2019 = vunpack.c.h.b16 %v539
    %v2020 = vunpack.c.l.b16 %v540
    %v2021 = vunpack.c.h.b16 %v540
    %v2022 = vunpack.c.l.b16 %v541
    %v2023 = vunpack.c.h.b16 %v541
    %v2024 = vunpack.c.l.b16 %v542
    %v2025 = vunpack.c.h.b16 %v542
    %v2026 = vunpack.c.l.b16 %v543
    %v2027 = vunpack.c.h.b16 %v543
    %v2028 = vunpack.c.l.b16 %v544
    %v2029 = vunpack.c.h.b16 %v544
    %v2030 = vunpack.c.l.b16 %v545
    %v2031 = vunpack.c.h.b16 %v545
    %v2032 = vunpack.c.l.b16 %v546
    %v2033 = vunpack.c.h.b16 %v546
    %v2034 = vunpack.c.l.b16 %v547
    %v2035 = vunpack.c.h.b16 %v547
    %v2036 = vunpack.c.l.b16 %v548
    %v2037 = vunpack.c.h.b16 %v548
    %v2038 = vunpack.c.l.b16 %v549
    %v2039 = vunpack.c.h.b16 %v549
    %v2040 = vunpack.c.l.b16 %v550
    %v2041 = vunpack.c.h.b16 %v550
    %v2042 = vunpack.c.l.b16 %v551
    %v2043 = vunpack.c.h.b16 %v551
    %v2044 = vunpack.c.l.b16 %v552
    %v2045 = vunpack.c.h.b16 %v552
    %v2046 = vunpack.c.l.b16 %v553
    %v2047 = vunpack.c.h.b16 %v553
    %v2048 = vunpack.c.l.b16 %v554
    %v2049 = vunpack.c.h.b16 %v554
    %v2050 = vunpack.c.l.b16 %v555
    %v2051 = vunpack.c.h.b16 %v555
    %v2052 = vunpack.c.l.b16 %v556
    %v2053 = vunpack.c.h.b16 %v556
    %v2054 = vunpack.c.l.b16 %v557
    %v2055 = vunpack.c.h.b16 %v557
    %v2056 = vunpack.c.l.b16 %v558
    %v2057 = vunpack.c.h.b16 %v558
    %v2058 = vunpack.c.l.b16 %v559
    %v2059 = vunpack.c.h.b16 %v559
    %v2060 = vunpack.c.l.b16 %v560
    %v2061 = vunpack.c.h.b16 %v560
    %v2062 = vunpack.c.l.b16 %v561
    %v2063 = vunpack.c.h.b16 %v561
    %v2064 = vunpack.c.l.b16 %v562
    %v2065 = vunpack.c.h.b16 %v562
    %v2066 = vunpack.c.l.b16 %v563
    %v2067 = vunpack.c.h.b16 %v563
    %v2068 = vunpack.c.l.b16 %v564
    %v2069 = vunpack.c.h.b16 %v564
    %v2070 = vunpack.c.l.b16 %v565
    %v2071 = vunpack.c.h.b16 %v565
    %v2072 = vunpack.c.l.b16 %v566
    %v2073 = vunpack.c.h.b16 %v566
    %v2074 = vunpack.c.l.b16 %v567
    %v2075 = vunpack.c.h.b16 %v567
    %v2076 = vunpack.c.l.b16 %v568
    %v2077 = vunpack.c.h.b16 %v568
    %v2078 = vunpack.c.l.b16 %v569
    %v2079 = vunpack.c.h.b16 %v569
    %v2080 = vunpack.c.l.b16 %v570
    %v2081 = vunpack.c.h.b16 %v570
    %v2082 = vunpack.c.l.b16 %v571
    %v2083 = vunpack.c.h.b16 %v571
    %v2084 = vunpack.c.l.b16 %v572
    %v2085 = vunpack.c.h.b16 %v572
    %v2086 = vunpack.c.l.b16 %v573
    %v2087 = vunpack.c.h.b16 %v573
    %v2088 = vunpack.c.l.b16 %v574
    %v2089 = vunpack.c.h.b16 %v574
    %v2090 = vunpack.c.l.b16 %v575
    %v2091 = vunpack.c.h.b16 %v575
    %v2092 = vunpack.c.l.b16 %v576
    %v2093 = vunpack.c.h.b16 %v576
    %v2094 = vunpack.c.l.b16 %v577
    %v2095 = vunpack.c.h.b16 %v577
    %v2096 = vunpack.c.l.b16 %v578
    %v2097 = vunpack.c.h.b16 %v578
    %v2098 = vunpack.c.l.b16 %v579
    %v2099 = vunpack.c.h.b16 %v579
    %v2100 = vunpack.c.l.b16 %v580
    %v2101 = vunpack.c.h.b16 %v580
    %v2102 = vunpack.c.l.b16 %v581
    %v2103 = vunpack.c.h.b16 %v581
    %v2104 = vunpack.c.l.b16 %v582
    %v2105 = vunpack.c.h.b16 %v582
    %v2106 = vunpack.c.l.b16 %v583
    %v2107 = vunpack.c.h.b16 %v583
    %v2108 = vunpack.c.l.b16 %v584
    %v2109 = vunpack.c.h.b16 %v584
    %v2110 = vunpack.c.l.b16 %v585
    %v2111 = vunpack.c.h.b16 %v585
    %v2112 = vunpack.c.l.b16 %v586
    %v2113 = vunpack.c.h.b16 %v586
    %v2114 = vunpack.c.l.b16 %v587
    %v2115 = vunpack.c.h.b16 %v587
    %v2116 = vunpack.c.l.b16 %v588
    %v2117 = vunpack.c.h.b16 %v588
    %v2118 = vunpack.c.l.b16 %v589
    %v2119 = vunpack.c.h.b16 %v589
    %v2120 = vunpack.c.l.b16 %v590
    %v2121 = vunpack.c.h.b16 %v590
    %v2122 = vunpack.c.l.b16 %v591
    %v2123 = vunpack.c.h.b16 %v591
    %v2124 = vunpack.c.l.b16 %v592
    %v2125 = vunpack.c.h.b16 %v592
    %v2126 = vunpack.c.l.b16 %v593
    %v2127 = vunpack.c.h.b16 %v593
    %v2128 = vunpack.c.l.b16 %v594
    %v2129 = vunpack.c.h.b16 %v594
    %v2130 = vunpack.c.l.b16 %v595
    %v2131 = vunpack.c.h.b16 %v595
    %v2132 = vunpack.c.l.b16 %v596
    %v2133 = vunpack.c.h.b16 %v596
    %v2134 = vunpack.c.l.b16 %v597
    %v2135 = vunpack.c.h.b16 %v597
    %v2136 = vunpack.c.l.b16 %v598
    %v2137 = vunpack.c.h.b16 %v598
    %v2138 = vunpack.c.l.b16 %v599
    %v2139 = vunpack.c.h.b16 %v599
    %v2140 = vunpack.c.l.b16 %v600
    %v2141 = vunpack.c.h.b16 %v600
    %v2142 = vunpack.c.l.b16 %v601
    %v2143 = vunpack.c.h.b16 %v601
    %v2144 = vunpack.c.l.b16 %v602
    %v2145 = vunpack.c.h.b16 %v602
    %v2146 = vunpack.c.l.b16 %v603
    %v2147 = vunpack.c.h.b16 %v603
    %v2148 = vunpack.c.l.b16 %v604
    %v2149 = vunpack.c.h.b16 %v604
    %v2150 = vunpack.c.l.b16 %v605
    %v2151 = vunpack.c.h.b16 %v605
    %v2152 = vunpack.c.l.b16 %v606
    %v2153 = vunpack.c.h.b16 %v606
    %v2154 = vunpack.c.l.b16 %v607
    %v2155 = vunpack.c.h.b16 %v607
    %v2156 = vunpack.c.l.b16 %v608
    %v2157 = vunpack.c.h.b16 %v608
    %v2158 = vunpack.c.l.b16 %v609
    %v2159 = vunpack.c.h.b16 %v609
    %v2160 = vunpack.c.l.b16 %v610
    %v2161 = vunpack.c.h.b16 %v610
    %v2162 = vunpack.c.l.b16 %v611
    %v2163 = vunpack.c.h.b16 %v611
    %v2164 = vunpack.c.l.b16 %v612
    %v2165 = vunpack.c.h.b16 %v612
    %v2166 = vunpack.c.l.b16 %v613
    %v2167 = vunpack.c.h.b16 %v613
    %v2168 = vunpack.c.l.b16 %v614
    %v2169 = vunpack.c.h.b16 %v614
    %v2170 = vunpack.c.l.b16 %v615
    %v2171 = vunpack.c.h.b16 %v615
    %v2172 = vunpack.c.l.b16 %v616
    %v2173 = vunpack.c.h.b16 %v616
    %v2174 = vunpack.c.l.b16 %v617
    %v2175 = vunpack.c.h.b16 %v617
    %v2176 = vunpack.c.l.b16 %v618
    %v2177 = vunpack.c.h.b16 %v618
    %v2178 = vunpack.c.l.b16 %v619
    %v2179 = vunpack.c.h.b16 %v619
    %v2180 = vunpack.c.l.b16 %v620
    %v2181 = vunpack.c.h.b16 %v620
    %v2182 = vunpack.c.l.b16 %v621
    %v2183 = vunpack.c.h.b16 %v621
    %v2184 = vunpack.c.l.b16 %v622
    %v2185 = vunpack.c.h.b16 %v622
    %v2186 = vunpack.c.l.b16 %v623
    %v2187 = vunpack.c.h.b16 %v623
    %v2188 = vunpack.c.l.b16 %v624
    %v2189 = vunpack.c.h.b16 %v624
    %v2190 = vunpack.c.l.b16 %v625
    %v2191 = vunpack.c.h.b16 %v625
    %v2192 = vunpack.c.l.b16 %v626
    %v2193 = vunpack.c.h.b16 %v626
    %v2194 = vunpack.c.l.b16 %v627
    %v2195 = vunpack.c.h.b16 %v627
    %v2196 = vunpack.c.l.b16 %v628
    %v2197 = vunpack.c.h.b16 %v628
    %v2198 = vunpack.c.l.b16 %v629
    %v2199 = vunpack.c.h.b16 %v629
    %v2200 = vunpack.c.l.b16 %v630
    %v2201 = vunpack.c.h.b16 %v630
    %v2202 = vunpack.c.l.b16 %v631
    %v2203 = vunpack.c.h.b16 %v631
    %v2204 = vunpack.c.l.b16 %v632
    %v2205 = vunpack.c.h.b16 %v632
    %v2206 = vunpack.c.l.b16 %v633
    %v2207 = vunpack.c.h.b16 %v633
    %v2208 = vunpack.c.l.b16 %v634
    %v2209 = vunpack.c.h.b16 %v634
    %v2210 = vunpack.c.l.b16 %v635
    %v2211 = vunpack.c.h.b16 %v635
    %v2212 = vunpack.c.l.b16 %v636
    %v2213 = vunpack.c.h.b16 %v636
    %v2214 = vunpack.c.l.b16 %v637
    %v2215 = vunpack.c.h.b16 %v637
    %v2216 = vpack.c.b16 %v1200, %v1192
    %v2217 = vpack.c.b16 %v1201, %v1193
    %v2218 = vpack.c.b16 %v1202, %v1194
    %v2219 = vpack.c.b16 %v1203, %v1195
    %v2220 = vpack.c.b16 %v1204, %v1196
    %v2221 = vpack.c.b16 %v1205, %v1197
    %v2222 = vpack.c.b16 %v1206, %v1198
    %v2223 = vpack.c.b16 %v1207, %v1199
    %v2224 = vpack.c.b16 %v1216, %v1208
    %v2225 = vpack.c.b16 %v1217, %v1209
    %v2226 = vpack.c.b16 %v1218, %v1210
    %v2227 = vpack.c.b16 %v1219, %v1211
    %v2228 = vpack.c.b16 %v1220, %v1212
    %v2229 = vpack.c.b16 %v1221, %v1213
    %v2230 = vpack.c.b16 %v1222, %v1214
    %v2231 = vpack.c.b16 %v1223, %v1215
    %v2232 = vpack.c.b16 %v1232, %v1224
    %v2233 = vpack.c.b16 %v1233, %v1225
    %v2234 = vpack.c.b16 %v1234, %v1226
    %v2235 = vpack.c.b16 %v1235, %v1227
    %v2236 = vpack.c.b16 %v1236, %v1228
    %v2237 = vpack.c.b16 %v1237, %v1229
    %v2238 = vpack.c.b16 %v1238, %v1230
    %v2239 = vpack.c.b16 %v1239, %v1231
    %v2240 = vpack.c.b16 %v1248, %v1240
    %v2241 = vpack.c.b16 %v1249, %v1241
    %v2242 = vpack.c.b16 %v1250, %v1242
    %v2243 = vpack.c.b16 %v1251, %v1243
    %v2244 = vpack.c.b16 %v1252, %v1244
    %v2245 = vpack.c.b16 %v1253, %v1245
    %v2246 = vpack.c.b16 %v1254, %v1246
    %v2247 = vpack.c.b16 %v1255, %v1247
    %v2248 = vpack.c.b16 %v1264, %v1256
    %v2249 = vpack.c.b16 %v1265, %v1257
    %v2250 = vpack.c.b16 %v1266, %v1258
    %v2251 = vpack.c.b16 %v1267, %v1259
    %v2252 = vpack.c.b16 %v1268, %v1260
    %v2253 = vpack.c.b16 %v1269, %v1261
    %v2254 = vpack.c.b16 %v1270, %v1262
    %v2255 = vpack.c.b16 %v1271, %v1263
    %v2256 = vpack.c.b16 %v1280, %v1272
    %v2257 = vpack.c.b16 %v1281, %v1273
    %v2258 = vpack.c.b16 %v1282, %v1274
    %v2259 = vpack.c.b16 %v1283, %v1275
    %v2260 = vpack.c.b16 %v1284, %v1276
    %v2261 = vpack.c.b16 %v1285, %v1277
    %v2262 = vpack.c.b16 %v1286, %v1278
    %v2263 = vpack.c.b16 %v1287, %v1279
    %v2264 = vpack.c.b16 %v1296, %v1288
    %v2265 = vpack.c.b16 %v1297, %v1289
    %v2266 = vpack.c.b16 %v1298, %v1290
    %v2267 = vpack.c.b16 %v1299, %v1291
    %v2268 = vpack.c.b16 %v1300, %v1292
    %v2269 = vpack.c.b16 %v1301, %v1293
    %v2270 = vpack.c.b16 %v1302, %v1294
    %v2271 = vpack.c.b16 %v1303, %v1295
    %v2272 = vpack.c.b16 %v1312, %v1304
    %v2273 = vpack.c.b16 %v1313, %v1305
    %v2274 = vpack.c.b16 %v1314, %v1306
    %v2275 = vpack.c.b16 %v1315, %v1307
    %v2276 = vpack.c.b16 %v1316, %v1308
    %v2277 = vpack.c.b16 %v1317, %v1309
    %v2278 = vpack.c.b16 %v1318, %v1310
    %v2279 = vpack.c.b16 %v1319, %v1311
    %v2280 = vpack.c.b16 %v1328, %v1320
    %v2281 = vpack.c.b16 %v1329, %v1321
    %v2282 = vpack.c.b16 %v1330, %v1322
    %v2283 = vpack.c.b16 %v1331, %v1323
    %v2284 = vpack.c.b16 %v1332, %v1324
    %v2285 = vpack.c.b16 %v1333, %v1325
    %v2286 = vpack.c.b16 %v1334, %v1326
    %v2287 = vpack.c.b16 %v1335, %v1327
    %v2288 = vpack.c.b16 %v1344, %v1336
    %v2289 = vpack.c.b16 %v1345, %v1337
    %v2290 = vpack.c.b16 %v1346, %v1338
    %v2291 = vpack.c.b16 %v1347, %v1339
    %v2292 = vpack.c.b16 %v1348, %v1340
    %v2293 = vpack.c.b16 %v1349, %v1341
    %v2294 = vpack.c.b16 %v1350, %v1342
    %v2295 = vpack.c.b16 %v1351, %v1343
    %v2296 = vpack.c.b16 %v1360, %v1352
    %v2297 = vpack.c.b16 %v1361, %v1353
    %v2298 = vpack.c.b16 %v1362, %v1354
    %v2299 = vpack.c.b16 %v1363, %v1355
    %v2300 = vpack.c.b16 %v1364, %v1356
    %v2301 = vpack.c.b16 %v1365, %v1357
    %v2302 = vpack.c.b16 %v1366, %v1358
    %v2303 = vpack.c.b16 %v1367, %v1359
    %v2304 = vpack.c.b16 %v1376, %v1368
    %v2305 = vpack.c.b16 %v1377, %v1369
    %v2306 = vpack.c.b16 %v1378, %v1370
    %v2307 = vpack.c.b16 %v1379, %v1371
    %v2308 = vpack.c.b16 %v1380, %v1372
    %v2309 = vpack.c.b16 %v1381, %v1373
    %v2310 = vpack.c.b16 %v1382, %v1374
    %v2311 = vpack.c.b16 %v1383, %v1375
    %v2312 = vpack.c.b16 %v1392, %v1384
    %v2313 = vpack.c.b16 %v1393, %v1385
    %v2314 = vpack.c.b16 %v1394, %v1386
    %v2315 = vpack.c.b16 %v1395, %v1387
    %v2316 = vpack.c.b16 %v1396, %v1388
    %v2317 = vpack.c.b16 %v1397, %v1389
    %v2318 = vpack.c.b16 %v1398, %v1390
    %v2319 = vpack.c.b16 %v1399, %v1391
    %v2320 = vpack.c.b16 %v1408, %v1400
    %v2321 = vpack.c.b16 %v1409, %v1401
    %v2322 = vpack.c.b16 %v1410, %v1402
    %v2323 = vpack.c.b16 %v1411, %v1403
    %v2324 = vpack.c.b16 %v1412, %v1404
    %v2325 = vpack.c.b16 %v1413, %v1405
    %v2326 = vpack.c.b16 %v1414, %v1406
    %v2327 = vpack.c.b16 %v1415, %v1407
    %v2328 = vpack.c.b16 %v1424, %v1416
    %v2329 = vpack.c.b16 %v1425, %v1417
    %v2330 = vpack.c.b16 %v1426, %v1418
    %v2331 = vpack.c.b16 %v1427, %v1419
    %v2332 = vpack.c.b16 %v1428, %v1420
    %v2333 = vpack.c.b16 %v1429, %v1421
    %v2334 = vpack.c.b16 %v1430, %v1422
    %v2335 = vpack.c.b16 %v1431, %v1423
    %v2336 = vpack.c.b16 %v1440, %v1432
    %v2337 = vpack.c.b16 %v1441, %v1433
    %v2338 = vpack.c.b16 %v1442, %v1434
    %v2339 = vpack.c.b16 %v1443, %v1435
    %v2340 = vpack.c.b16 %v1444, %v1436
    %v2341 = vpack.c.b16 %v1445, %v1437
    %v2342 = vpack.c.b16 %v1446, %v1438
    %v2343 = vpack.c.b16 %v1447, %v1439
    %v2344 = vpack.c.b16 %v1456, %v1448
    %v2345 = vpack.c.b16 %v1457, %v1449
    %v2346 = vpack.c.b16 %v1458, %v1450
    %v2347 = vpack.c.b16 %v1459, %v1451
    %v2348 = vpack.c.b16 %v1460, %v1452
    %v2349 = vpack.c.b16 %v1461, %v1453
    %v2350 = vpack.c.b16 %v1462, %v1454
    %v2351 = vpack.c.b16 %v1463, %v1455
    %v2352 = vpack.c.b16 %v1472, %v1464
    %v2353 = vpack.c.b16 %v1473, %v1465
    %v2354 = vpack.c.b16 %v1474, %v1466
    %v2355 = vpack.c.b16 %v1475, %v1467
    %v2356 = vpack.c.b16 %v1476, %v1468
    %v2357 = vpack.c.b16 %v1477, %v1469
    %v2358 = vpack.c.b16 %v1478, %v1470
    %v2359 = vpack.c.b16 %v1479, %v1471
    %v2360 = vpack.c.b16 %v1488, %v1480
    %v2361 = vpack.c.b16 %v1489, %v1481
    %v2362 = vpack.c.b16 %v1490, %v1482
    %v2363 = vpack.c.b16 %v1491, %v1483
    %v2364 = vpack.c.b16 %v1492, %v1484
    %v2365 = vpack.c.b16 %v1493, %v1485
    %v2366 = vpack.c.b16 %v1494, %v1486
    %v2367 = vpack.c.b16 %v1495, %v1487
    %v2368 = vpack.c.b16 %v1504, %v1496
    %v2369 = vpack.c.b16 %v1505, %v1497
    %v2370 = vpack.c.b16 %v1506, %v1498
    %v2371 = vpack.c.b16 %v1507, %v1499
    %v2372 = vpack.c.b16 %v1508, %v1500
    %v2373 = vpack.c.b16 %v1509, %v1501
    %v2374 = vpack.c.b16 %v1510, %v1502
    %v2375 = vpack.c.b16 %v1511, %v1503
    %v2376 = vpack.c.b16 %v1520, %v1512
    %v2377 = vpack.c.b16 %v1521, %v1513
    %v2378 = vpack.c.b16 %v1522, %v1514
    %v2379 = vpack.c.b16 %v1523, %v1515
    %v2380 = vpack.c.b16 %v1524, %v1516
    %v2381 = vpack.c.b16 %v1525, %v1517
    %v2382 = vpack.c.b16 %v1526, %v1518
    %v2383 = vpack.c.b16 %v1527, %v1519
    %v2384 = vpack.c.b16 %v1536, %v1528
    %v2385 = vpack.c.b16 %v1537, %v1529
    %v2386 = vpack.c.b16 %v1538, %v1530
    %v2387 = vpack.c.b16 %v1539, %v1531
    %v2388 = vpack.c.b16 %v1540, %v1532
    %v2389 = vpack.c.b16 %v1541, %v1533
    %v2390 = vpack.c.b16 %v1542, %v1534
    %v2391 = vpack.c.b16 %v1543, %v1535
    %v2392 = vpack.c.b16 %v1552, %v1544
    %v2393 = vpack.c.b16 %v1553, %v1545
    %v2394 = vpack.c.b16 %v1554, %v1546
    %v2395 = vpack.c.b16 %v1555, %v1547
    %v2396 = vpack.c.b16 %v1556, %v1548
    %v2397 = vpack.c.b16 %v1557, %v1549
    %v2398 = vpack.c.b16 %v1558, %v1550
    %v2399 = vpack.c.b16 %v1559, %v1551
    %v2400 = vpack.c.b16 %v1568, %v1560
    %v2401 = vpack.c.b16 %v1569, %v1561
    %v2402 = vpack.c.b16 %v1570, %v1562
    %v2403 = vpack.c.b16 %v1571, %v1563
    %v2404 = vpack.c.b16 %v1572, %v1564
    %v2405 = vpack.c.b16 %v1573, %v1565
    %v2406 = vpack.c.b16 %v1574, %v1566
    %v2407 = vpack.c.b16 %v1575, %v1567
    %v2408 = vpack.c.b16 %v1584, %v1576
    %v2409 = vpack.c.b16 %v1585, %v1577
    %v2410 = vpack.c.b16 %v1586, %v1578
    %v2411 = vpack.c.b16 %v1587, %v1579
    %v2412 = vpack.c.b16 %v1588, %v1580
    %v2413 = vpack.c.b16 %v1589, %v1581
    %v2414 = vpack.c.b16 %v1590, %v1582
    %v2415 = vpack.c.b16 %v1591, %v1583
    %v2416 = vpack.c.b16 %v1600, %v1592
    %v2417 = vpack.c.b16 %v1601, %v1593
    %v2418 = vpack.c.b16 %v1602, %v1594
    %v2419 = vpack.c.b16 %v1603, %v1595
    %v2420 = vpack.c.b16 %v1604, %v1596
    %v2421 = vpack.c.b16 %v1605, %v1597
    %v2422 = vpack.c.b16 %v1606, %v1598
    %v2423 = vpack.c.b16 %v1607, %v1599
    %v2424 = vpack.c.b16 %v1616, %v1608
    %v2425 = vpack.c.b16 %v1617, %v1609
    %v2426 = vpack.c.b16 %v1618, %v1610
    %v2427 = vpack.c.b16 %v1619, %v1611
    %v2428 = vpack.c.b16 %v1620, %v1612
    %v2429 = vpack.c.b16 %v1621, %v1613
    %v2430 = vpack.c.b16 %v1622, %v1614
    %v2431 = vpack.c.b16 %v1623, %v1615
    %v2432 = vpack.c.b16 %v1632, %v1624
    %v2433 = vpack.c.b16 %v1633, %v1625
    %v2434 = vpack.c.b16 %v1634, %v1626
    %v2435 = vpack.c.b16 %v1635, %v1627
    %v2436 = vpack.c.b16 %v1636, %v1628
    %v2437 = vpack.c.b16 %v1637, %v1629
    %v2438 = vpack.c.b16 %v1638, %v1630
    %v2439 = vpack.c.b16 %v1639, %v1631
    %v2440 = vpack.c.b16 %v1648, %v1640
    %v2441 = vpack.c.b16 %v1649, %v1641
    %v2442 = vpack.c.b16 %v1650, %v1642
    %v2443 = vpack.c.b16 %v1651, %v1643
    %v2444 = vpack.c.b16 %v1652, %v1644
    %v2445 = vpack.c.b16 %v1653, %v1645
    %v2446 = vpack.c.b16 %v1654, %v1646
    %v2447 = vpack.c.b16 %v1655, %v1647
    %v2448 = vpack.c.b16 %v1664, %v1656
    %v2449 = vpack.c.b16 %v1665, %v1657
    %v2450 = vpack.c.b16 %v1666, %v1658
    %v2451 = vpack.c.b16 %v1667, %v1659
    %v2452 = vpack.c.b16 %v1668, %v1660
    %v2453 = vpack.c.b16 %v1669, %v1661
    %v2454 = vpack.c.b16 %v1670, %v1662
    %v2455 = vpack.c.b16 %v1671, %v1663
    %v2456 = vpack.c.b16 %v1680, %v1672
    %v2457 = vpack.c.b16 %v1681, %v1673
    %v2458 = vpack.c.b16 %v1682, %v1674
    %v2459 = vpack.c.b16 %v1683, %v1675
    %v2460 = vpack.c.b16 %v1684, %v1676
    %v2461 = vpack.c.b16 %v1685, %v1677
    %v2462 = vpack.c.b16 %v1686, %v1678
    %v2463 = vpack.c.b16 %v1687, %v1679
    %v2464 = vpack.c.b16 %v1696, %v1688
    %v2465 = vpack.c.b16 %v1697, %v1689
    %v2466 = vpack.c.b16 %v1698, %v1690
    %v2467 = vpack.c.b16 %v1699, %v1691
    %v2468 = vpack.c.b16 %v1700, %v1692
    %v2469 = vpack.c.b16 %v1701, %v1693
    %v2470 = vpack.c.b16 %v1702, %v1694
    %v2471 = vpack.c.b16 %v1703, %v1695
    %v2472 = vpack.c.b16 %v1712, %v1704
    %v2473 = vpack.c.b16 %v1713, %v1705
    %v2474 = vpack.c.b16 %v1714, %v1706
    %v2475 = vpack.c.b16 %v1715, %v1707
    %v2476 = vpack.c.b16 %v1716, %v1708
    %v2477 = vpack.c.b16 %v1717, %v1709
    %v2478 = vpack.c.b16 %v1718, %v1710
    %v2479 = vpack.c.b16 %v1719, %v1711
    %v2480 = vpack.c.b16 %v1728, %v1720
    %v2481 = vpack.c.b16 %v1729, %v1721
    %v2482 = vpack.c.b16 %v1730, %v1722
    %v2483 = vpack.c.b16 %v1731, %v1723
    %v2484 = vpack.c.b16 %v1732, %v1724
    %v2485 = vpack.c.b16 %v1733, %v1725
    %v2486 = vpack.c.b16 %v1734, %v1726
    %v2487 = vpack.c.b16 %v1735, %v1727
    %v2488 = vpack.c.b16 %v1744, %v1736
    %v2489 = vpack.c.b16 %v1745, %v1737
    %v2490 = vpack.c.b16 %v1746, %v1738
    %v2491 = vpack.c.b16 %v1747, %v1739
    %v2492 = vpack.c.b16 %v1748, %v1740
    %v2493 = vpack.c.b16 %v1749, %v1741
    %v2494 = vpack.c.b16 %v1750, %v1742
    %v2495 = vpack.c.b16 %v1751, %v1743
    %v2496 = vpack.c.b16 %v1760, %v1752
    %v2497 = vpack.c.b16 %v1761, %v1753
    %v2498 = vpack.c.b16 %v1762, %v1754
    %v2499 = vpack.c.b16 %v1763, %v1755
    %v2500 = vpack.c.b16 %v1764, %v1756
    %v2501 = vpack.c.b16 %v1765, %v1757
    %v2502 = vpack.c.b16 %v1766, %v1758
    %v2503 = vpack.c.b16 %v1767, %v1759
    %v2504 = vpack.c.b16 %v1776, %v1768
    %v2505 = vpack.c.b16 %v1777, %v1769
    %v2506 = vpack.c.b16 %v1778, %v1770
    %v2507 = vpack.c.b16 %v1779, %v1771
    %v2508 = vpack.c.b16 %v1780, %v1772
    %v2509 = vpack.c.b16 %v1781, %v1773
    %v2510 = vpack.c.b16 %v1782, %v1774
    %v2511 = vpack.c.b16 %v1783, %v1775
    %v2512 = vpack.c.b16 %v1792, %v1784
    %v2513 = vpack.c.b16 %v1793, %v1785
    %v2514 = vpack.c.b16 %v1794, %v1786
    %v2515 = vpack.c.b16 %v1795, %v1787
    %v2516 = vpack.c.b16 %v1796, %v1788
    %v2517 = vpack.c.b16 %v1797, %v1789
    %v2518 = vpack.c.b16 %v1798, %v1790
    %v2519 = vpack.c.b16 %v1799, %v1791
    %v2520 = vpack.c.b16 %v1808, %v1800
    %v2521 = vpack.c.b16 %v1809, %v1801
    %v2522 = vpack.c.b16 %v1810, %v1802
    %v2523 = vpack.c.b16 %v1811, %v1803
    %v2524 = vpack.c.b16 %v1812, %v1804
    %v2525 = vpack.c.b16 %v1813, %v1805
    %v2526 = vpack.c.b16 %v1814, %v1806
    %v2527 = vpack.c.b16 %v1815, %v1807
    %v2528 = vpack.c.b16 %v1824, %v1816
    %v2529 = vpack.c.b16 %v1825, %v1817
    %v2530 = vpack.c.b16 %v1826, %v1818
    %v2531 = vpack.c.b16 %v1827, %v1819
    %v2532 = vpack.c.b16 %v1828, %v1820
    %v2533 = vpack.c.b16 %v1829, %v1821
    %v2534 = vpack.c.b16 %v1830, %v1822
    %v2535 = vpack.c.b16 %v1831, %v1823
    %v2536 = vpack.c.b16 %v1840, %v1832
    %v2537 = vpack.c.b16 %v1841, %v1833
    %v2538 = vpack.c.b16 %v1842, %v1834
    %v2539 = vpack.c.b16 %v1843, %v1835
    %v2540 = vpack.c.b16 %v1844, %v1836
    %v2541 = vpack.c.b16 %v1845, %v1837
    %v2542 = vpack.c.b16 %v1846, %v1838
    %v2543 = vpack.c.b16 %v1847, %v1839
    %v2544 = vpack.c.b16 %v1856, %v1848
    %v2545 = vpack.c.b16 %v1857, %v1849
    %v2546 = vpack.c.b16 %v1858, %v1850
    %v2547 = vpack.c.b16 %v1859, %v1851
    %v2548 = vpack.c.b16 %v1860, %v1852
    %v2549 = vpack.c.b16 %v1861, %v1853
    %v2550 = vpack.c.b16 %v1862, %v1854
    %v2551 = vpack.c.b16 %v1863, %v1855
    %v2552 = vpack.c.b16 %v1872, %v1864
    %v2553 = vpack.c.b16 %v1873, %v1865
    %v2554 = vpack.c.b16 %v1874, %v1866
    %v2555 = vpack.c.b16 %v1875, %v1867
    %v2556 = vpack.c.b16 %v1876, %v1868
    %v2557 = vpack.c.b16 %v1877, %v1869
    %v2558 = vpack.c.b16 %v1878, %v1870
    %v2559 = vpack.c.b16 %v1879, %v1871
    %v2560 = vpack.c.b16 %v1888, %v1880
    %v2561 = vpack.c.b16 %v1889, %v1881
    %v2562 = vpack.c.b16 %v1890, %v1882
    %v2563 = vpack.c.b16 %v1891, %v1883
    %v2564 = vpack.c.b16 %v1892, %v1884
    %v2565 = vpack.c.b16 %v1893, %v1885
    %v2566 = vpack.c.b16 %v1894, %v1886
    %v2567 = vpack.c.b16 %v1895, %v1887
    %v2568 = vpack.c.b16 %v1904, %v1896
    %v2569 = vpack.c.b16 %v1905, %v1897
    %v2570 = vpack.c.b16 %v1906, %v1898
    %v2571 = vpack.c.b16 %v1907, %v1899
    %v2572 = vpack.c.b16 %v1908, %v1900
    %v2573 = vpack.c.b16 %v1909, %v1901
    %v2574 = vpack.c.b16 %v1910, %v1902
    %v2575 = vpack.c.b16 %v1911, %v1903
    %v2576 = vpack.c.b16 %v1920, %v1912
    %v2577 = vpack.c.b16 %v1921, %v1913
    %v2578 = vpack.c.b16 %v1922, %v1914
    %v2579 = vpack.c.b16 %v1923, %v1915
    %v2580 = vpack.c.b16 %v1924, %v1916
    %v2581 = vpack.c.b16 %v1925, %v1917
    %v2582 = vpack.c.b16 %v1926, %v1918
    %v2583 = vpack.c.b16 %v1927, %v1919
    %v2584 = vpack.c.b16 %v1936, %v1928
    %v2585 = vpack.c.b16 %v1937, %v1929
    %v2586 = vpack.c.b16 %v1938, %v1930
    %v2587 = vpack.c.b16 %v1939, %v1931
    %v2588 = vpack.c.b16 %v1940, %v1932
    %v2589 = vpack.c.b16 %v1941, %v1933
    %v2590 = vpack.c.b16 %v1942, %v1934
    %v2591 = vpack.c.b16 %v1943, %v1935
    %v2592 = vpack.c.b16 %v1952, %v1944
    %v2593 = vpack.c.b16 %v1953, %v1945
    %v2594 = vpack.c.b16 %v1954, %v1946
    %v2595 = vpack.c.b16 %v1955, %v1947
    %v2596 = vpack.c.b16 %v1956, %v1948
    %v2597 = vpack.c.b16 %v1957, %v1949
    %v2598 = vpack.c.b16 %v1958, %v1950
    %v2599 = vpack.c.b16 %v1959, %v1951
    %v2600 = vpack.c.b16 %v1968, %v1960
    %v2601 = vpack.c.b16 %v1969, %v1961
    %v2602 = vpack.c.b16 %v1970, %v1962
    %v2603 = vpack.c.b16 %v1971, %v1963
    %v2604 = vpack.c.b16 %v1972, %v1964
    %v2605 = vpack.c.b16 %v1973, %v1965
    %v2606 = vpack.c.b16 %v1974, %v1966
    %v2607 = vpack.c.b16 %v1975, %v1967
    %v2608 = vpack.c.b16 %v1984, %v1976
    %v2609 = vpack.c.b16 %v1985, %v1977
    %v2610 = vpack.c.b16 %v1986, %v1978
    %v2611 = vpack.c.b16 %v1987, %v1979
    %v2612 = vpack.c.b16 %v1988, %v1980
    %v2613 = vpack.c.b16 %v1989, %v1981
    %v2614 = vpack.c.b16 %v1990, %v1982
    %v2615 = vpack.c.b16 %v1991, %v1983
    %v2616 = vpack.c.b16 %v2000, %v1992
    %v2617 = vpack.c.b16 %v2001, %v1993
    %v2618 = vpack.c.b16 %v2002, %v1994
    %v2619 = vpack.c.b16 %v2003, %v1995
    %v2620 = vpack.c.b16 %v2004, %v1996
    %v2621 = vpack.c.b16 %v2005, %v1997
    %v2622 = vpack.c.b16 %v2006, %v1998
    %v2623 = vpack.c.b16 %v2007, %v1999
    %v2624 = vpack.c.b16 %v2016, %v2008
    %v2625 = vpack.c.b16 %v2017, %v2009
    %v2626 = vpack.c.b16 %v2018, %v2010
    %v2627 = vpack.c.b16 %v2019, %v2011
    %v2628 = vpack.c.b16 %v2020, %v2012
    %v2629 = vpack.c.b16 %v2021, %v2013
    %v2630 = vpack.c.b16 %v2022, %v2014
    %v2631 = vpack.c.b16 %v2023, %v2015
    %v2632 = vpack.c.b16 %v2032, %v2024
    %v2633 = vpack.c.b16 %v2033, %v2025
    %v2634 = vpack.c.b16 %v2034, %v2026
    %v2635 = vpack.c.b16 %v2035, %v2027
    %v2636 = vpack.c.b16 %v2036, %v2028
    %v2637 = vpack.c.b16 %v2037, %v2029
    %v2638 = vpack.c.b16 %v2038, %v2030
    %v2639 = vpack.c.b16 %v2039, %v2031
    %v2640 = vpack.c.b16 %v2048, %v2040
    %v2641 = vpack.c.b16 %v2049, %v2041
    %v2642 = vpack.c.b16 %v2050, %v2042
    %v2643 = vpack.c.b16 %v2051, %v2043
    %v2644 = vpack.c.b16 %v2052, %v2044
    %v2645 = vpack.c.b16 %v2053, %v2045
    %v2646 = vpack.c.b16 %v2054, %v2046
    %v2647 = vpack.c.b16 %v2055, %v2047
    %v2648 = vpack.c.b16 %v2064, %v2056
    %v2649 = vpack.c.b16 %v2065, %v2057
    %v2650 = vpack.c.b16 %v2066, %v2058
    %v2651 = vpack.c.b16 %v2067, %v2059
    %v2652 = vpack.c.b16 %v2068, %v2060
    %v2653 = vpack.c.b16 %v2069, %v2061
    %v2654 = vpack.c.b16 %v2070, %v2062
    %v2655 = vpack.c.b16 %v2071, %v2063
    %v2656 = vpack.c.b16 %v2080, %v2072
    %v2657 = vpack.c.b16 %v2081, %v2073
    %v2658 = vpack.c.b16 %v2082, %v2074
    %v2659 = vpack.c.b16 %v2083, %v2075
    %v2660 = vpack.c.b16 %v2084, %v2076
    %v2661 = vpack.c.b16 %v2085, %v2077
    %v2662 = vpack.c.b16 %v2086, %v2078
    %v2663 = vpack.c.b16 %v2087, %v2079
    %v2664 = vpack.c.b16 %v2096, %v2088
    %v2665 = vpack.c.b16 %v2097, %v2089
    %v2666 = vpack.c.b16 %v2098, %v2090
    %v2667 = vpack.c.b16 %v2099, %v2091
    %v2668 = vpack.c.b16 %v2100, %v2092
    %v2669 = vpack.c.b16 %v2101, %v2093
    %v2670 = vpack.c.b16 %v2102, %v2094
    %v2671 = vpack.c.b16 %v2103, %v2095
    %v2672 = vpack.c.b16 %v2112, %v2104
    %v2673 = vpack.c.b16 %v2113, %v2105
    %v2674 = vpack.c.b16 %v2114, %v2106
    %v2675 = vpack.c.b16 %v2115, %v2107
    %v2676 = vpack.c.b16 %v2116, %v2108
    %v2677 = vpack.c.b16 %v2117, %v2109
    %v2678 = vpack.c.b16 %v2118, %v2110
    %v2679 = vpack.c.b16 %v2119, %v2111
    %v2680 = vpack.c.b16 %v2128, %v2120
    %v2681 = vpack.c.b16 %v2129, %v2121
    %v2682 = vpack.c.b16 %v2130, %v2122
    %v2683 = vpack.c.b16 %v2131, %v2123
    %v2684 = vpack.c.b16 %v2132, %v2124
    %v2685 = vpack.c.b16 %v2133, %v2125
    %v2686 = vpack.c.b16 %v2134, %v2126
    %v2687 = vpack.c.b16 %v2135, %v2127
    %v2688 = vpack.c.b16 %v2144, %v2136
    %v2689 = vpack.c.b16 %v2145, %v2137
    %v2690 = vpack.c.b16 %v2146, %v2138
    %v2691 = vpack.c.b16 %v2147, %v2139
    %v2692 = vpack.c.b16 %v2148, %v2140
    %v2693 = vpack.c.b16 %v2149, %v2141
    %v2694 = vpack.c.b16 %v2150, %v2142
    %v2695 = vpack.c.b16 %v2151, %v2143
    %v2696 = vpack.c.b16 %v2160, %v2152
    %v2697 = vpack.c.b16 %v2161, %v2153
    %v2698 = vpack.c.b16 %v2162, %v2154
    %v2699 = vpack.c.b16 %v2163, %v2155
    %v2700 = vpack.c.b16 %v2164, %v2156
    %v2701 = vpack.c.b16 %v2165, %v2157
    %v2702 = vpack.c.b16 %v2166, %v2158
    %v2703 = vpack.c.b16 %v2167, %v2159
    %v2704 = vpack.c.b16 %v2176, %v2168
    %v2705 = vpack.c.b16 %v2177, %v2169
    %v2706 = vpack.c.b16 %v2178, %v2170
    %v2707 = vpack.c.b16 %v2179, %v2171
    %v2708 = vpack.c.b16 %v2180, %v2172
    %v2709 = vpack.c.b16 %v2181, %v2173
    %v2710 = vpack.c.b16 %v2182, %v2174
    %v2711 = vpack.c.b16 %v2183, %v2175
    %v2712 = vpack.c.b16 %v2192, %v2184
    %v2713 = vpack.c.b16 %v2193, %v2185
    %v2714 = vpack.c.b16 %v2194, %v2186
    %v2715 = vpack.c.b16 %v2195, %v2187
    %v2716 = vpack.c.b16 %v2196, %v2188
    %v2717 = vpack.c.b16 %v2197, %v2189
    %v2718 = vpack.c.b16 %v2198, %v2190
    %v2719 = vpack.c.b16 %v2199, %v2191
    %v2720 = vpack.c.b16 %v2208, %v2200
    %v2721 = vpack.c.b16 %v2209, %v2201
    %v2722 = vpack.c.b16 %v2210, %v2202
    %v2723 = vpack.c.b16 %v2211, %v2203
    %v2724 = vpack.c.b16 %v2212, %v2204
    %v2725 = vpack.c.b16 %v2213, %v2205
    %v2726 = vpack.c.b16 %v2214, %v2206
    %v2727 = vpack.c.b16 %v2215, %v2207
    %3240 = vmatprep.subr.bf16.mxu0 %v2217
    %3241 = vmatpush1.bf16.msra.mxu0 %v2216
    %3242 = vmatprep.subr.bf16.mxu0 %v2225
    %3243 = vmatpush1.bf16.msra.mxu0 %v2224
    %3244 = vmatprep.subr.bf16.mxu0 %v2233
    %3245 = vmatpush1.bf16.msra.mxu0 %v2232
    %3246 = vmatprep.subr.bf16.mxu0 %v2241
    %3247 = vmatpush1.bf16.msra.mxu0 %v2240
    %3248 = vmatprep.subr.bf16.mxu0 %v2249
    %3249 = vmatpush1.bf16.msra.mxu0 %v2248
    %3250 = vmatprep.subr.bf16.mxu0 %v2257
    %3251 = vmatpush1.bf16.msra.mxu0 %v2256
    %3252 = vmatprep.subr.bf16.mxu0 %v2265
    %3253 = vmatpush1.bf16.msra.mxu0 %v2264
    %3254 = vmatprep.subr.bf16.mxu0 %v2273
    %3255 = vmatpush1.bf16.msra.mxu0 %v2272
    %3256 = vmatprep.subr.bf16.mxu0 %v2281
    %3257 = vmatpush1.bf16.msra.mxu0 %v2280
    %3258 = vmatprep.subr.bf16.mxu0 %v2289
    %3259 = vmatpush1.bf16.msra.mxu0 %v2288
    %3260 = vmatprep.subr.bf16.mxu0 %v2297
    %3261 = vmatpush1.bf16.msra.mxu0 %v2296
    %3262 = vmatprep.subr.bf16.mxu0 %v2305
    %3263 = vmatpush1.bf16.msra.mxu0 %v2304
    %3264 = vmatprep.subr.bf16.mxu0 %v2313
    %3265 = vmatpush1.bf16.msra.mxu0 %v2312
    %3266 = vmatprep.subr.bf16.mxu0 %v2321
    %3267 = vmatpush1.bf16.msra.mxu0 %v2320
    %3268 = vmatprep.subr.bf16.mxu0 %v2329
    %3269 = vmatpush1.bf16.msra.mxu0 %v2328
    %3270 = vmatprep.subr.bf16.mxu0 %v2337
    %3271 = vmatpush1.bf16.msra.mxu0 %v2336
    %3272 = vmatprep.mubr.bf16.mxu0 %v111
    %3273 = vmatmul.mubr.bf16.gmra.mrb[0].mxu0 %v110
    %v3274 = vpop.f32.mrb[0].mxu0
    %v3275 = vadd.f32 %v643, %v3274
    %v3276 = vpop.f32.mrb[0].mxu0
    %v3277 = vadd.f32 %v647, %v3276
    %v3278 = vpop.f32.mrb[0].mxu0
    %v3279 = vadd.f32 %v643, %v3278
    %v3280 = vpop.f32.mrb[0].mxu0
    %v3281 = vadd.f32 %v647, %v3280
    %3282 = vmatprep.mubr.bf16.mxu0 %v119
    %3283 = vmatmul.mubr.bf16.gmra.mrb[0].mxu0 %v118
    %v3284 = vpop.f32.mrb[0].mxu0
    %v3285 = vadd.f32 %v643, %v3284
    %v3286 = vpop.f32.mrb[0].mxu0
    %v3287 = vadd.f32 %v647, %v3286
    %v3288 = vpop.f32.mrb[0].mxu0
    %v3289 = vpop.f32.mrb[0].mxu0
    %3290 = vdwg.mxu0
    %3291 = vmatprep.subr.bf16.mxu0 %v2345
    %3292 = vmatpush1.bf16.msra.mxu0 %v2344
    %3293 = vmatprep.subr.bf16.mxu0 %v2353
    %3294 = vmatpush1.bf16.msra.mxu0 %v2352
    %3295 = vmatprep.subr.bf16.mxu0 %v2361
    %3296 = vmatpush1.bf16.msra.mxu0 %v2360
    %3297 = vmatprep.subr.bf16.mxu0 %v2369
    %3298 = vmatpush1.bf16.msra.mxu0 %v2368
    %3299 = vmatprep.subr.bf16.mxu0 %v2377
    %3300 = vmatpush1.bf16.msra.mxu0 %v2376
    %3301 = vmatprep.subr.bf16.mxu0 %v2385
    %3302 = vmatpush1.bf16.msra.mxu0 %v2384
    %3303 = vmatprep.subr.bf16.mxu0 %v2393
    %3304 = vmatpush1.bf16.msra.mxu0 %v2392
    %3305 = vmatprep.subr.bf16.mxu0 %v2401
    %3306 = vmatpush1.bf16.msra.mxu0 %v2400
    %3307 = vmatprep.subr.bf16.mxu0 %v2409
    %3308 = vmatpush1.bf16.msra.mxu0 %v2408
    %3309 = vmatprep.subr.bf16.mxu0 %v2417
    %3310 = vmatpush1.bf16.msra.mxu0 %v2416
    %3311 = vmatprep.subr.bf16.mxu0 %v2425
    %3312 = vmatpush1.bf16.msra.mxu0 %v2424
    %3313 = vmatprep.subr.bf16.mxu0 %v2433
    %3314 = vmatpush1.bf16.msra.mxu0 %v2432
    %3315 = vmatprep.subr.bf16.mxu0 %v2441
    %3316 = vmatpush1.bf16.msra.mxu0 %v2440
    %3317 = vmatprep.subr.bf16.mxu0 %v2449
    %3318 = vmatpush1.bf16.msra.mxu0 %v2448
    %3319 = vmatprep.subr.bf16.mxu0 %v2457
    %3320 = vmatpush1.bf16.msra.mxu0 %v2456
    %3321 = vmatprep.subr.bf16.mxu0 %v2465
    %3322 = vmatpush1.bf16.msra.mxu0 %v2464
    %3323 = vmatprep.mubr.bf16.mxu0 %v113
    %3324 = vmatmul.mubr.bf16.gmra.mrb[0].mxu0 %v112
    %v3325 = vpop.f32.mrb[0].mxu0
    %v3326 = vadd.f32 %v3275, %v3325
    %v3327 = vpop.f32.mrb[0].mxu0
    %v3328 = vadd.f32 %v3277, %v3327
    %v3329 = vpop.f32.mrb[0].mxu0
    %v3330 = vadd.f32 %v3279, %v3329
    %v3331 = vpop.f32.mrb[0].mxu0
    %v3332 = vadd.f32 %v3281, %v3331
    %3333 = vmatprep.mubr.bf16.mxu0 %v121
    %3334 = vmatmul.mubr.bf16.gmra.mrb[0].mxu0 %v120
    %v3335 = vpop.f32.mrb[0].mxu0
    %v3336 = vadd.f32 %v3285, %v3335
    %v3337 = vpop.f32.mrb[0].mxu0
    %v3338 = vadd.f32 %v3287, %v3337
    %v3339 = vpop.f32.mrb[0].mxu0
    %v3340 = vpop.f32.mrb[0].mxu0
    %3341 = vdwg.mxu0
    %3342 = vmatprep.subr.bf16.mxu0 %v2473
    %3343 = vmatpush1.bf16.msra.mxu0 %v2472
    %3344 = vmatprep.subr.bf16.mxu0 %v2481
    %3345 = vmatpush1.bf16.msra.mxu0 %v2480
    %3346 = vmatprep.subr.bf16.mxu0 %v2489
    %3347 = vmatpush1.bf16.msra.mxu0 %v2488
    %3348 = vmatprep.subr.bf16.mxu0 %v2497
    %3349 = vmatpush1.bf16.msra.mxu0 %v2496
    %3350 = vmatprep.subr.bf16.mxu0 %v2505
    %3351 = vmatpush1.bf16.msra.mxu0 %v2504
    %3352 = vmatprep.subr.bf16.mxu0 %v2513
    %3353 = vmatpush1.bf16.msra.mxu0 %v2512
    %3354 = vmatprep.subr.bf16.mxu0 %v2521
    %3355 = vmatpush1.bf16.msra.mxu0 %v2520
    %3356 = vmatprep.subr.bf16.mxu0 %v2529
    %3357 = vmatpush1.bf16.msra.mxu0 %v2528
    %3358 = vmatprep.subr.bf16.mxu0 %v2537
    %3359 = vmatpush1.bf16.msra.mxu0 %v2536
    %3360 = vmatprep.subr.bf16.mxu0 %v2545
    %3361 = vmatpush1.bf16.msra.mxu0 %v2544
    %3362 = vmatprep.subr.bf16.mxu0 %v2553
    %3363 = vmatpush1.bf16.msra.mxu0 %v2552
    %3364 = vmatprep.subr.bf16.mxu0 %v2561
    %3365 = vmatpush1.bf16.msra.mxu0 %v2560
    %3366 = vmatprep.subr.bf16.mxu0 %v2569
    %3367 = vmatpush1.bf16.msra.mxu0 %v2568
    %3368 = vmatprep.subr.bf16.mxu0 %v2577
    %3369 = vmatpush1.bf16.msra.mxu0 %v2576
    %3370 = vmatprep.subr.bf16.mxu0 %v2585
    %3371 = vmatpush1.bf16.msra.mxu0 %v2584
    %3372 = vmatprep.subr.bf16.mxu0 %v2593
    %3373 = vmatpush1.bf16.msra.mxu0 %v2592
    %3374 = vmatprep.mubr.bf16.mxu0 %v115
    %3375 = vmatmul.mubr.bf16.gmra.mrb[0].mxu0 %v114
    %v3376 = vpop.f32.mrb[0].mxu0
    %v3377 = vadd.f32 %v3326, %v3376
    %v3378 = vpop.f32.mrb[0].mxu0
    %v3379 = vadd.f32 %v3328, %v3378
    %v3380 = vpop.f32.mrb[0].mxu0
    %v3381 = vadd.f32 %v3330, %v3380
    %v3382 = vpop.f32.mrb[0].mxu0
    %v3383 = vadd.f32 %v3332, %v3382
    %3384 = vmatprep.mubr.bf16.mxu0 %v123
    %3385 = vmatmul.mubr.bf16.gmra.mrb[0].mxu0 %v122
    %v3386 = vpop.f32.mrb[0].mxu0
    %v3387 = vadd.f32 %v3336, %v3386
    %v3388 = vpop.f32.mrb[0].mxu0
    %v3389 = vadd.f32 %v3338, %v3388
    %v3390 = vpop.f32.mrb[0].mxu0
    %v3391 = vpop.f32.mrb[0].mxu0
    %3392 = vdwg.mxu0
    %3393 = vmatprep.subr.bf16.mxu0 %v2601
    %3394 = vmatpush1.bf16.msra.mxu0 %v2600
    %3395 = vmatprep.subr.bf16.mxu0 %v2609
    %3396 = vmatpush1.bf16.msra.mxu0 %v2608
    %3397 = vmatprep.subr.bf16.mxu0 %v2617
    %3398 = vmatpush1.bf16.msra.mxu0 %v2616
    %3399 = vmatprep.subr.bf16.mxu0 %v2625
    %3400 = vmatpush1.bf16.msra.mxu0 %v2624
    %3401 = vmatprep.subr.bf16.mxu0 %v2633
    %3402 = vmatpush1.bf16.msra.mxu0 %v2632
    %3403 = vmatprep.subr.bf16.mxu0 %v2641
    %3404 = vmatpush1.bf16.msra.mxu0 %v2640
    %3405 = vmatprep.subr.bf16.mxu0 %v2649
    %3406 = vmatpush1.bf16.msra.mxu0 %v2648
    %3407 = vmatprep.subr.bf16.mxu0 %v2657
    %3408 = vmatpush1.bf16.msra.mxu0 %v2656
    %3409 = vmatprep.subr.bf16.mxu0 %v2665
    %3410 = vmatpush1.bf16.msra.mxu0 %v2664
    %3411 = vmatprep.subr.bf16.mxu0 %v2673
    %3412 = vmatpush1.bf16.msra.mxu0 %v2672
    %3413 = vmatprep.subr.bf16.mxu0 %v2681
    %3414 = vmatpush1.bf16.msra.mxu0 %v2680
    %3415 = vmatprep.subr.bf16.mxu0 %v2689
    %3416 = vmatpush1.bf16.msra.mxu0 %v2688
    %3417 = vmatprep.subr.bf16.mxu0 %v2697
    %3418 = vmatpush1.bf16.msra.mxu0 %v2696
    %3419 = vmatprep.subr.bf16.mxu0 %v2705
    %3420 = vmatpush1.bf16.msra.mxu0 %v2704
    %3421 = vmatprep.subr.bf16.mxu0 %v2713
    %3422 = vmatpush1.bf16.msra.mxu0 %v2712
    %3423 = vmatprep.subr.bf16.mxu0 %v2721
    %3424 = vmatpush1.bf16.msra.mxu0 %v2720
    %3425 = vmatprep.mubr.bf16.mxu0 %v117
    %3426 = vmatmul.mubr.bf16.gmra.mrb[0].mxu0 %v116
    %v3427 = vpop.f32.mrb[0].mxu0
    %v3428 = vadd.f32 %v3377, %v3427
    %v3429 = vpop.f32.mrb[0].mxu0
    %v3430 = vadd.f32 %v3379, %v3429
    %v3431 = vpop.f32.mrb[0].mxu0
    %v3432 = vadd.f32 %v3381, %v3431
    %v3433 = vpop.f32.mrb[0].mxu0
    %v3434 = vadd.f32 %v3383, %v3433
    %3435 = vmatprep.mubr.bf16.mxu0 %v125
    %3436 = vmatmul.mubr.bf16.gmra.mrb[0].mxu0 %v124
    %v3437 = vpop.f32.mrb[0].mxu0
    %v3438 = vadd.f32 %v3387, %v3437
    %v3439 = vpop.f32.mrb[0].mxu0
    %v3440 = vadd.f32 %v3389, %v3439
    %v3441 = vpop.f32.mrb[0].mxu0
    %v3442 = vpop.f32.mrb[0].mxu0
    %3443 = vdwg.mxu0
    %3444 = vmatprep.subr.bf16.mxu0 %v2219
    %3445 = vmatpush1.bf16.msra.mxu0 %v2218
    %3446 = vmatprep.subr.bf16.mxu0 %v2227
    %3447 = vmatpush1.bf16.msra.mxu0 %v2226
    %3448 = vmatprep.subr.bf16.mxu0 %v2235
    %3449 = vmatpush1.bf16.msra.mxu0 %v2234
    %3450 = vmatprep.subr.bf16.mxu0 %v2243
    %3451 = vmatpush1.bf16.msra.mxu0 %v2242
    %3452 = vmatprep.subr.bf16.mxu0 %v2251
    %3453 = vmatpush1.bf16.msra.mxu0 %v2250
    %3454 = vmatprep.subr.bf16.mxu0 %v2259
    %3455 = vmatpush1.bf16.msra.mxu0 %v2258
    %3456 = vmatprep.subr.bf16.mxu0 %v2267
    %3457 = vmatpush1.bf16.msra.mxu0 %v2266
    %3458 = vmatprep.subr.bf16.mxu0 %v2275
    %3459 = vmatpush1.bf16.msra.mxu0 %v2274
    %3460 = vmatprep.subr.bf16.mxu0 %v2283
    %3461 = vmatpush1.bf16.msra.mxu0 %v2282
    %3462 = vmatprep.subr.bf16.mxu0 %v2291
    %3463 = vmatpush1.bf16.msra.mxu0 %v2290
    %3464 = vmatprep.subr.bf16.mxu0 %v2299
    %3465 = vmatpush1.bf16.msra.mxu0 %v2298
    %3466 = vmatprep.subr.bf16.mxu0 %v2307
    %3467 = vmatpush1.bf16.msra.mxu0 %v2306
    %3468 = vmatprep.subr.bf16.mxu0 %v2315
    %3469 = vmatpush1.bf16.msra.mxu0 %v2314
    %3470 = vmatprep.subr.bf16.mxu0 %v2323
    %3471 = vmatpush1.bf16.msra.mxu0 %v2322
    %3472 = vmatprep.subr.bf16.mxu0 %v2331
    %3473 = vmatpush1.bf16.msra.mxu0 %v2330
    %3474 = vmatprep.subr.bf16.mxu0 %v2339
    %3475 = vmatpush1.bf16.msra.mxu0 %v2338
    %3476 = vmatprep.mubr.bf16.mxu0 %v111
    %3477 = vmatmul.mubr.bf16.gmra.mrb[0].mxu0 %v110
    %v3478 = vpop.f32.mrb[0].mxu0
    %v3479 = vadd.f32 %v651, %v3478
    %v3480 = vpop.f32.mrb[0].mxu0
    %v3481 = vadd.f32 %v655, %v3480
    %v3482 = vpop.f32.mrb[0].mxu0
    %v3483 = vadd.f32 %v651, %v3482
    %v3484 = vpop.f32.mrb[0].mxu0
    %v3485 = vadd.f32 %v655, %v3484
    %3486 = vmatprep.mubr.bf16.mxu0 %v119
    %3487 = vmatmul.mubr.bf16.gmra.mrb[0].mxu0 %v118
    %v3488 = vpop.f32.mrb[0].mxu0
    %v3489 = vadd.f32 %v651, %v3488
    %v3490 = vpop.f32.mrb[0].mxu0
    %v3491 = vadd.f32 %v655, %v3490
    %v3492 = vpop.f32.mrb[0].mxu0
    %v3493 = vpop.f32.mrb[0].mxu0
    %3494 = vdwg.mxu0
    %3495 = vmatprep.subr.bf16.mxu0 %v2347
    %3496 = vmatpush1.bf16.msra.mxu0 %v2346
    %3497 = vmatprep.subr.bf16.mxu0 %v2355
    %3498 = vmatpush1.bf16.msra.mxu0 %v2354
    %3499 = vmatprep.subr.bf16.mxu0 %v2363
    %3500 = vmatpush1.bf16.msra.mxu0 %v2362
    %3501 = vmatprep.subr.bf16.mxu0 %v2371
    %3502 = vmatpush1.bf16.msra.mxu0 %v2370
    %3503 = vmatprep.subr.bf16.mxu0 %v2379
    %3504 = vmatpush1.bf16.msra.mxu0 %v2378
    %3505 = vmatprep.subr.bf16.mxu0 %v2387
    %3506 = vmatpush1.bf16.msra.mxu0 %v2386
    %3507 = vmatprep.subr.bf16.mxu0 %v2395
    %3508 = vmatpush1.bf16.msra.mxu0 %v2394
    %3509 = vmatprep.subr.bf16.mxu0 %v2403
    %3510 = vmatpush1.bf16.msra.mxu0 %v2402
    %3511 = vmatprep.subr.bf16.mxu0 %v2411
    %3512 = vmatpush1.bf16.msra.mxu0 %v2410
    %3513 = vmatprep.subr.bf16.mxu0 %v2419
    %3514 = vmatpush1.bf16.msra.mxu0 %v2418
    %3515 = vmatprep.subr.bf16.mxu0 %v2427
    %3516 = vmatpush1.bf16.msra.mxu0 %v2426
    %3517 = vmatprep.subr.bf16.mxu0 %v2435
    %3518 = vmatpush1.bf16.msra.mxu0 %v2434
    %3519 = vmatprep.subr.bf16.mxu0 %v2443
    %3520 = vmatpush1.bf16.msra.mxu0 %v2442
    %3521 = vmatprep.subr.bf16.mxu0 %v2451
    %3522 = vmatpush1.bf16.msra.mxu0 %v2450
    %3523 = vmatprep.subr.bf16.mxu0 %v2459
    %3524 = vmatpush1.bf16.msra.mxu0 %v2458
    %3525 = vmatprep.subr.bf16.mxu0 %v2467
    %3526 = vmatpush1.bf16.msra.mxu0 %v2466
    %3527 = vmatprep.mubr.bf16.mxu0 %v113
    %3528 = vmatmul.mubr.bf16.gmra.mrb[0].mxu0 %v112
    %v3529 = vpop.f32.mrb[0].mxu0
    %v3530 = vadd.f32 %v3479, %v3529
    %v3531 = vpop.f32.mrb[0].mxu0
    %v3532 = vadd.f32 %v3481, %v3531
    %v3533 = vpop.f32.mrb[0].mxu0
    %v3534 = vadd.f32 %v3483, %v3533
    %v3535 = vpop.f32.mrb[0].mxu0
    %v3536 = vadd.f32 %v3485, %v3535
    %3537 = vmatprep.mubr.bf16.mxu0 %v121
    %3538 = vmatmul.mubr.bf16.gmra.mrb[0].mxu0 %v120
    %v3539 = vpop.f32.mrb[0].mxu0
    %v3540 = vadd.f32 %v3489, %v3539
    %v3541 = vpop.f32.mrb[0].mxu0
    %v3542 = vadd.f32 %v3491, %v3541
    %v3543 = vpop.f32.mrb[0].mxu0
    %v3544 = vpop.f32.mrb[0].mxu0
    %3545 = vdwg.mxu0
    %3546 = vmatprep.subr.bf16.mxu0 %v2475
    %3547 = vmatpush1.bf16.msra.mxu0 %v2474
    %3548 = vmatprep.subr.bf16.mxu0 %v2483
    %3549 = vmatpush1.bf16.msra.mxu0 %v2482
    %3550 = vmatprep.subr.bf16.mxu0 %v2491
    %3551 = vmatpush1.bf16.msra.mxu0 %v2490
    %3552 = vmatprep.subr.bf16.mxu0 %v2499
    %3553 = vmatpush1.bf16.msra.mxu0 %v2498
    %3554 = vmatprep.subr.bf16.mxu0 %v2507
    %3555 = vmatpush1.bf16.msra.mxu0 %v2506
    %3556 = vmatprep.subr.bf16.mxu0 %v2515
    %3557 = vmatpush1.bf16.msra.mxu0 %v2514
    %3558 = vmatprep.subr.bf16.mxu0 %v2523
    %3559 = vmatpush1.bf16.msra.mxu0 %v2522
    %3560 = vmatprep.subr.bf16.mxu0 %v2531
    %3561 = vmatpush1.bf16.msra.mxu0 %v2530
    %3562 = vmatprep.subr.bf16.mxu0 %v2539
    %3563 = vmatpush1.bf16.msra.mxu0 %v2538
    %3564 = vmatprep.subr.bf16.mxu0 %v2547
    %3565 = vmatpush1.bf16.msra.mxu0 %v2546
    %3566 = vmatprep.subr.bf16.mxu0 %v2555
    %3567 = vmatpush1.bf16.msra.mxu0 %v2554
    %3568 = vmatprep.subr.bf16.mxu0 %v2563
    %3569 = vmatpush1.bf16.msra.mxu0 %v2562
    %3570 = vmatprep.subr.bf16.mxu0 %v2571
    %3571 = vmatpush1.bf16.msra.mxu0 %v2570
    %3572 = vmatprep.subr.bf16.mxu0 %v2579
    %3573 = vmatpush1.bf16.msra.mxu0 %v2578
    %3574 = vmatprep.subr.bf16.mxu0 %v2587
    %3575 = vmatpush1.bf16.msra.mxu0 %v2586
    %3576 = vmatprep.subr.bf16.mxu0 %v2595
    %3577 = vmatpush1.bf16.msra.mxu0 %v2594
    %3578 = vmatprep.mubr.bf16.mxu0 %v115
    %3579 = vmatmul.mubr.bf16.gmra.mrb[0].mxu0 %v114
    %v3580 = vpop.f32.mrb[0].mxu0
    %v3581 = vadd.f32 %v3530, %v3580
    %v3582 = vpop.f32.mrb[0].mxu0
    %v3583 = vadd.f32 %v3532, %v3582
    %v3584 = vpop.f32.mrb[0].mxu0
    %v3585 = vadd.f32 %v3534, %v3584
    %v3586 = vpop.f32.mrb[0].mxu0
    %v3587 = vadd.f32 %v3536, %v3586
    %3588 = vmatprep.mubr.bf16.mxu0 %v123
    %3589 = vmatmul.mubr.bf16.gmra.mrb[0].mxu0 %v122
    %v3590 = vpop.f32.mrb[0].mxu0
    %v3591 = vadd.f32 %v3540, %v3590
    %v3592 = vpop.f32.mrb[0].mxu0
    %v3593 = vadd.f32 %v3542, %v3592
    %v3594 = vpop.f32.mrb[0].mxu0
    %v3595 = vpop.f32.mrb[0].mxu0
    %3596 = vdwg.mxu0
    %3597 = vmatprep.subr.bf16.mxu0 %v2603
    %3598 = vmatpush1.bf16.msra.mxu0 %v2602
    %3599 = vmatprep.subr.bf16.mxu0 %v2611
    %3600 = vmatpush1.bf16.msra.mxu0 %v2610
    %3601 = vmatprep.subr.bf16.mxu0 %v2619
    %3602 = vmatpush1.bf16.msra.mxu0 %v2618
    %3603 = vmatprep.subr.bf16.mxu0 %v2627
    %3604 = vmatpush1.bf16.msra.mxu0 %v2626
    %3605 = vmatprep.subr.bf16.mxu0 %v2635
    %3606 = vmatpush1.bf16.msra.mxu0 %v2634
    %3607 = vmatprep.subr.bf16.mxu0 %v2643
    %3608 = vmatpush1.bf16.msra.mxu0 %v2642
    %3609 = vmatprep.subr.bf16.mxu0 %v2651
    %3610 = vmatpush1.bf16.msra.mxu0 %v2650
    %3611 = vmatprep.subr.bf16.mxu0 %v2659
    %3612 = vmatpush1.bf16.msra.mxu0 %v2658
    %3613 = vmatprep.subr.bf16.mxu0 %v2667
    %3614 = vmatpush1.bf16.msra.mxu0 %v2666
    %3615 = vmatprep.subr.bf16.mxu0 %v2675
    %3616 = vmatpush1.bf16.msra.mxu0 %v2674
    %3617 = vmatprep.subr.bf16.mxu0 %v2683
    %3618 = vmatpush1.bf16.msra.mxu0 %v2682
    %3619 = vmatprep.subr.bf16.mxu0 %v2691
    %3620 = vmatpush1.bf16.msra.mxu0 %v2690
    %3621 = vmatprep.subr.bf16.mxu0 %v2699
    %3622 = vmatpush1.bf16.msra.mxu0 %v2698
    %3623 = vmatprep.subr.bf16.mxu0 %v2707
    %3624 = vmatpush1.bf16.msra.mxu0 %v2706
    %3625 = vmatprep.subr.bf16.mxu0 %v2715
    %3626 = vmatpush1.bf16.msra.mxu0 %v2714
    %3627 = vmatprep.subr.bf16.mxu0 %v2723
    %3628 = vmatpush1.bf16.msra.mxu0 %v2722
    %3629 = vmatprep.mubr.bf16.mxu0 %v117
    %3630 = vmatmul.mubr.bf16.gmra.mrb[0].mxu0 %v116
    %v3631 = vpop.f32.mrb[0].mxu0
    %v3632 = vadd.f32 %v3581, %v3631
    %v3633 = vpop.f32.mrb[0].mxu0
    %v3634 = vadd.f32 %v3583, %v3633
    %v3635 = vpop.f32.mrb[0].mxu0
    %v3636 = vadd.f32 %v3585, %v3635
    %v3637 = vpop.f32.mrb[0].mxu0
    %v3638 = vadd.f32 %v3587, %v3637
    %3639 = vmatprep.mubr.bf16.mxu0 %v125
    %3640 = vmatmul.mubr.bf16.gmra.mrb[0].mxu0 %v124
    %v3641 = vpop.f32.mrb[0].mxu0
    %v3642 = vadd.f32 %v3591, %v3641
    %v3643 = vpop.f32.mrb[0].mxu0
    %v3644 = vadd.f32 %v3593, %v3643
    %v3645 = vpop.f32.mrb[0].mxu0
    %v3646 = vpop.f32.mrb[0].mxu0
    %3647 = vdwg.mxu0
    %3648 = vmatprep.subr.bf16.mxu0 %v2221
    %3649 = vmatpush1.bf16.msra.mxu0 %v2220
    %3650 = vmatprep.subr.bf16.mxu0 %v2229
    %3651 = vmatpush1.bf16.msra.mxu0 %v2228
    %3652 = vmatprep.subr.bf16.mxu0 %v2237
    %3653 = vmatpush1.bf16.msra.mxu0 %v2236
    %3654 = vmatprep.subr.bf16.mxu0 %v2245
    %3655 = vmatpush1.bf16.msra.mxu0 %v2244
    %3656 = vmatprep.subr.bf16.mxu0 %v2253
    %3657 = vmatpush1.bf16.msra.mxu0 %v2252
    %3658 = vmatprep.subr.bf16.mxu0 %v2261
    %3659 = vmatpush1.bf16.msra.mxu0 %v2260
    %3660 = vmatprep.subr.bf16.mxu0 %v2269
    %3661 = vmatpush1.bf16.msra.mxu0 %v2268
    %3662 = vmatprep.subr.bf16.mxu0 %v2277
    %3663 = vmatpush1.bf16.msra.mxu0 %v2276
    %3664 = vmatprep.subr.bf16.mxu0 %v2285
    %3665 = vmatpush1.bf16.msra.mxu0 %v2284
    %3666 = vmatprep.subr.bf16.mxu0 %v2293
    %3667 = vmatpush1.bf16.msra.mxu0 %v2292
    %3668 = vmatprep.subr.bf16.mxu0 %v2301
    %3669 = vmatpush1.bf16.msra.mxu0 %v2300
    %3670 = vmatprep.subr.bf16.mxu0 %v2309
    %3671 = vmatpush1.bf16.msra.mxu0 %v2308
    %3672 = vmatprep.subr.bf16.mxu0 %v2317
    %3673 = vmatpush1.bf16.msra.mxu0 %v2316
    %3674 = vmatprep.subr.bf16.mxu0 %v2325
    %3675 = vmatpush1.bf16.msra.mxu0 %v2324
    %3676 = vmatprep.subr.bf16.mxu0 %v2333
    %3677 = vmatpush1.bf16.msra.mxu0 %v2332
    %3678 = vmatprep.subr.bf16.mxu0 %v2341
    %3679 = vmatpush1.bf16.msra.mxu0 %v2340
    %3680 = vmatprep.mubr.bf16.mxu0 %v111
    %3681 = vmatmul.mubr.bf16.gmra.mrb[0].mxu0 %v110
    %v3682 = vpop.f32.mrb[0].mxu0
    %v3683 = vadd.f32 %v659, %v3682
    %v3684 = vpop.f32.mrb[0].mxu0
    %v3685 = vadd.f32 %v663, %v3684
    %v3686 = vpop.f32.mrb[0].mxu0
    %v3687 = vadd.f32 %v659, %v3686
    %v3688 = vpop.f32.mrb[0].mxu0
    %v3689 = vadd.f32 %v663, %v3688
    %3690 = vmatprep.mubr.bf16.mxu0 %v119
    %3691 = vmatmul.mubr.bf16.gmra.mrb[0].mxu0 %v118
    %v3692 = vpop.f32.mrb[0].mxu0
    %v3693 = vadd.f32 %v659, %v3692
    %v3694 = vpop.f32.mrb[0].mxu0
    %v3695 = vadd.f32 %v663, %v3694
    %v3696 = vpop.f32.mrb[0].mxu0
    %v3697 = vpop.f32.mrb[0].mxu0
    %3698 = vdwg.mxu0
    %3699 = vmatprep.subr.bf16.mxu0 %v2349
    %3700 = vmatpush1.bf16.msra.mxu0 %v2348
    %3701 = vmatprep.subr.bf16.mxu0 %v2357
    %3702 = vmatpush1.bf16.msra.mxu0 %v2356
    %3703 = vmatprep.subr.bf16.mxu0 %v2365
    %3704 = vmatpush1.bf16.msra.mxu0 %v2364
    %3705 = vmatprep.subr.bf16.mxu0 %v2373
    %3706 = vmatpush1.bf16.msra.mxu0 %v2372
    %3707 = vmatprep.subr.bf16.mxu0 %v2381
    %3708 = vmatpush1.bf16.msra.mxu0 %v2380
    %3709 = vmatprep.subr.bf16.mxu0 %v2389
    %3710 = vmatpush1.bf16.msra.mxu0 %v2388
    %3711 = vmatprep.subr.bf16.mxu0 %v2397
    %3712 = vmatpush1.bf16.msra.mxu0 %v2396
    %3713 = vmatprep.subr.bf16.mxu0 %v2405
    %3714 = vmatpush1.bf16.msra.mxu0 %v2404
    %3715 = vmatprep.subr.bf16.mxu0 %v2413
    %3716 = vmatpush1.bf16.msra.mxu0 %v2412
    %3717 = vmatprep.subr.bf16.mxu0 %v2421
    %3718 = vmatpush1.bf16.msra.mxu0 %v2420
    %3719 = vmatprep.subr.bf16.mxu0 %v2429
    %3720 = vmatpush1.bf16.msra.mxu0 %v2428
    %3721 = vmatprep.subr.bf16.mxu0 %v2437
    %3722 = vmatpush1.bf16.msra.mxu0 %v2436
    %3723 = vmatprep.subr.bf16.mxu0 %v2445
    %3724 = vmatpush1.bf16.msra.mxu0 %v2444
    %3725 = vmatprep.subr.bf16.mxu0 %v2453
    %3726 = vmatpush1.bf16.msra.mxu0 %v2452
    %3727 = vmatprep.subr.bf16.mxu0 %v2461
    %3728 = vmatpush1.bf16.msra.mxu0 %v2460
    %3729 = vmatprep.subr.bf16.mxu0 %v2469
    %3730 = vmatpush1.bf16.msra.mxu0 %v2468
    %3731 = vmatprep.mubr.bf16.mxu0 %v113
    %3732 = vmatmul.mubr.bf16.gmra.mrb[0].mxu0 %v112
    %v3733 = vpop.f32.mrb[0].mxu0
    %v3734 = vadd.f32 %v3683, %v3733
    %v3735 = vpop.f32.mrb[0].mxu0
    %v3736 = vadd.f32 %v3685, %v3735
    %v3737 = vpop.f32.mrb[0].mxu0
    %v3738 = vadd.f32 %v3687, %v3737
    %v3739 = vpop.f32.mrb[0].mxu0
    %v3740 = vadd.f32 %v3689, %v3739
    %3741 = vmatprep.mubr.bf16.mxu0 %v121
    %3742 = vmatmul.mubr.bf16.gmra.mrb[0].mxu0 %v120
    %v3743 = vpop.f32.mrb[0].mxu0
    %v3744 = vadd.f32 %v3693, %v3743
    %v3745 = vpop.f32.mrb[0].mxu0
    %v3746 = vadd.f32 %v3695, %v3745
    %v3747 = vpop.f32.mrb[0].mxu0
    %v3748 = vpop.f32.mrb[0].mxu0
    %3749 = vdwg.mxu0
    %3750 = vmatprep.subr.bf16.mxu0 %v2477
    %3751 = vmatpush1.bf16.msra.mxu0 %v2476
    %3752 = vmatprep.subr.bf16.mxu0 %v2485
    %3753 = vmatpush1.bf16.msra.mxu0 %v2484
    %3754 = vmatprep.subr.bf16.mxu0 %v2493
    %3755 = vmatpush1.bf16.msra.mxu0 %v2492
    %3756 = vmatprep.subr.bf16.mxu0 %v2501
    %3757 = vmatpush1.bf16.msra.mxu0 %v2500
    %3758 = vmatprep.subr.bf16.mxu0 %v2509
    %3759 = vmatpush1.bf16.msra.mxu0 %v2508
    %3760 = vmatprep.subr.bf16.mxu0 %v2517
    %3761 = vmatpush1.bf16.msra.mxu0 %v2516
    %3762 = vmatprep.subr.bf16.mxu0 %v2525
    %3763 = vmatpush1.bf16.msra.mxu0 %v2524
    %3764 = vmatprep.subr.bf16.mxu0 %v2533
    %3765 = vmatpush1.bf16.msra.mxu0 %v2532
    %3766 = vmatprep.subr.bf16.mxu0 %v2541
    %3767 = vmatpush1.bf16.msra.mxu0 %v2540
    %3768 = vmatprep.subr.bf16.mxu0 %v2549
    %3769 = vmatpush1.bf16.msra.mxu0 %v2548
    %3770 = vmatprep.subr.bf16.mxu0 %v2557
    %3771 = vmatpush1.bf16.msra.mxu0 %v2556
    %3772 = vmatprep.subr.bf16.mxu0 %v2565
    %3773 = vmatpush1.bf16.msra.mxu0 %v2564
    %3774 = vmatprep.subr.bf16.mxu0 %v2573
    %3775 = vmatpush1.bf16.msra.mxu0 %v2572
    %3776 = vmatprep.subr.bf16.mxu0 %v2581
    %3777 = vmatpush1.bf16.msra.mxu0 %v2580
    %3778 = vmatprep.subr.bf16.mxu0 %v2589
    %3779 = vmatpush1.bf16.msra.mxu0 %v2588
    %3780 = vmatprep.subr.bf16.mxu0 %v2597
    %3781 = vmatpush1.bf16.msra.mxu0 %v2596
    %3782 = vmatprep.mubr.bf16.mxu0 %v115
    %3783 = vmatmul.mubr.bf16.gmra.mrb[0].mxu0 %v114
    %v3784 = vpop.f32.mrb[0].mxu0
    %v3785 = vadd.f32 %v3734, %v3784
    %v3786 = vpop.f32.mrb[0].mxu0
    %v3787 = vadd.f32 %v3736, %v3786
    %v3788 = vpop.f32.mrb[0].mxu0
    %v3789 = vadd.f32 %v3738, %v3788
    %v3790 = vpop.f32.mrb[0].mxu0
    %v3791 = vadd.f32 %v3740, %v3790
    %3792 = vmatprep.mubr.bf16.mxu0 %v123
    %3793 = vmatmul.mubr.bf16.gmra.mrb[0].mxu0 %v122
    %v3794 = vpop.f32.mrb[0].mxu0
    %v3795 = vadd.f32 %v3744, %v3794
    %v3796 = vpop.f32.mrb[0].mxu0
    %v3797 = vadd.f32 %v3746, %v3796
    %v3798 = vpop.f32.mrb[0].mxu0
    %v3799 = vpop.f32.mrb[0].mxu0
    %3800 = vdwg.mxu0
    %3801 = vmatprep.subr.bf16.mxu0 %v2605
    %3802 = vmatpush1.bf16.msra.mxu0 %v2604
    %3803 = vmatprep.subr.bf16.mxu0 %v2613
    %3804 = vmatpush1.bf16.msra.mxu0 %v2612
    %3805 = vmatprep.subr.bf16.mxu0 %v2621
    %3806 = vmatpush1.bf16.msra.mxu0 %v2620
    %3807 = vmatprep.subr.bf16.mxu0 %v2629
    %3808 = vmatpush1.bf16.msra.mxu0 %v2628
    %3809 = vmatprep.subr.bf16.mxu0 %v2637
    %3810 = vmatpush1.bf16.msra.mxu0 %v2636
    %3811 = vmatprep.subr.bf16.mxu0 %v2645
    %3812 = vmatpush1.bf16.msra.mxu0 %v2644
    %3813 = vmatprep.subr.bf16.mxu0 %v2653
    %3814 = vmatpush1.bf16.msra.mxu0 %v2652
    %3815 = vmatprep.subr.bf16.mxu0 %v2661
    %3816 = vmatpush1.bf16.msra.mxu0 %v2660
    %3817 = vmatprep.subr.bf16.mxu0 %v2669
    %3818 = vmatpush1.bf16.msra.mxu0 %v2668
    %3819 = vmatprep.subr.bf16.mxu0 %v2677
    %3820 = vmatpush1.bf16.msra.mxu0 %v2676
    %3821 = vmatprep.subr.bf16.mxu0 %v2685
    %3822 = vmatpush1.bf16.msra.mxu0 %v2684
    %3823 = vmatprep.subr.bf16.mxu0 %v2693
    %3824 = vmatpush1.bf16.msra.mxu0 %v2692
    %3825 = vmatprep.subr.bf16.mxu0 %v2701
    %3826 = vmatpush1.bf16.msra.mxu0 %v2700
    %3827 = vmatprep.subr.bf16.mxu0 %v2709
    %3828 = vmatpush1.bf16.msra.mxu0 %v2708
    %3829 = vmatprep.subr.bf16.mxu0 %v2717
    %3830 = vmatpush1.bf16.msra.mxu0 %v2716
    %3831 = vmatprep.subr.bf16.mxu0 %v2725
    %3832 = vmatpush1.bf16.msra.mxu0 %v2724
    %3833 = vmatprep.mubr.bf16.mxu0 %v117
    %3834 = vmatmul.mubr.bf16.gmra.mrb[0].mxu0 %v116
    %v3835 = vpop.f32.mrb[0].mxu0
    %v3836 = vadd.f32 %v3785, %v3835
    %v3837 = vpop.f32.mrb[0].mxu0
    %v3838 = vadd.f32 %v3787, %v3837
    %v3839 = vpop.f32.mrb[0].mxu0
    %v3840 = vadd.f32 %v3789, %v3839
    %v3841 = vpop.f32.mrb[0].mxu0
    %v3842 = vadd.f32 %v3791, %v3841
    %3843 = vmatprep.mubr.bf16.mxu0 %v125
    %3844 = vmatmul.mubr.bf16.gmra.mrb[0].mxu0 %v124
    %v3845 = vpop.f32.mrb[0].mxu0
    %v3846 = vadd.f32 %v3795, %v3845
    %v3847 = vpop.f32.mrb[0].mxu0
    %v3848 = vadd.f32 %v3797, %v3847
    %v3849 = vpop.f32.mrb[0].mxu0
    %v3850 = vpop.f32.mrb[0].mxu0
    %3851 = vdwg.mxu0
    %3852 = vmatprep.subr.bf16.mxu0 %v2223
    %3853 = vmatpush1.bf16.msra.mxu0 %v2222
    %3854 = vmatprep.subr.bf16.mxu0 %v2231
    %3855 = vmatpush1.bf16.msra.mxu0 %v2230
    %3856 = vmatprep.subr.bf16.mxu0 %v2239
    %3857 = vmatpush1.bf16.msra.mxu0 %v2238
    %3858 = vmatprep.subr.bf16.mxu0 %v2247
    %3859 = vmatpush1.bf16.msra.mxu0 %v2246
    %3860 = vmatprep.subr.bf16.mxu0 %v2255
    %3861 = vmatpush1.bf16.msra.mxu0 %v2254
    %3862 = vmatprep.subr.bf16.mxu0 %v2263
    %3863 = vmatpush1.bf16.msra.mxu0 %v2262
    %3864 = vmatprep.subr.bf16.mxu0 %v2271
    %3865 = vmatpush1.bf16.msra.mxu0 %v2270
    %3866 = vmatprep.subr.bf16.mxu0 %v2279
    %3867 = vmatpush1.bf16.msra.mxu0 %v2278
    %3868 = vmatprep.subr.bf16.mxu0 %v2287
    %3869 = vmatpush1.bf16.msra.mxu0 %v2286
    %3870 = vmatprep.subr.bf16.mxu0 %v2295
    %3871 = vmatpush1.bf16.msra.mxu0 %v2294
    %3872 = vmatprep.subr.bf16.mxu0 %v2303
    %3873 = vmatpush1.bf16.msra.mxu0 %v2302
    %3874 = vmatprep.subr.bf16.mxu0 %v2311
    %3875 = vmatpush1.bf16.msra.mxu0 %v2310
    %3876 = vmatprep.subr.bf16.mxu0 %v2319
    %3877 = vmatpush1.bf16.msra.mxu0 %v2318
    %3878 = vmatprep.subr.bf16.mxu0 %v2327
    %3879 = vmatpush1.bf16.msra.mxu0 %v2326
    %3880 = vmatprep.subr.bf16.mxu0 %v2335
    %3881 = vmatpush1.bf16.msra.mxu0 %v2334
    %3882 = vmatprep.subr.bf16.mxu0 %v2343
    %3883 = vmatpush1.bf16.msra.mxu0 %v2342
    %3884 = vmatprep.mubr.bf16.mxu0 %v111
    %3885 = vmatmul.mubr.bf16.gmra.mrb[0].mxu0 %v110
    %v3886 = vpop.f32.mrb[0].mxu0
    %v3887 = vadd.f32 %v667, %v3886
    %v3888 = vpop.f32.mrb[0].mxu0
    %v3889 = vadd.f32 %v671, %v3888
    %v3890 = vpop.f32.mrb[0].mxu0
    %v3891 = vadd.f32 %v667, %v3890
    %v3892 = vpop.f32.mrb[0].mxu0
    %v3893 = vadd.f32 %v671, %v3892
    %3894 = vmatprep.mubr.bf16.mxu0 %v119
    %3895 = vmatmul.mubr.bf16.gmra.mrb[0].mxu0 %v118
    %v3896 = vpop.f32.mrb[0].mxu0
    %v3897 = vadd.f32 %v667, %v3896
    %v3898 = vpop.f32.mrb[0].mxu0
    %v3899 = vadd.f32 %v671, %v3898
    %v3900 = vpop.f32.mrb[0].mxu0
    %v3901 = vpop.f32.mrb[0].mxu0
    %3902 = vdwg.mxu0
    %3903 = vmatprep.subr.bf16.mxu0 %v2351
    %3904 = vmatpush1.bf16.msra.mxu0 %v2350
    %3905 = vmatprep.subr.bf16.mxu0 %v2359
    %3906 = vmatpush1.bf16.msra.mxu0 %v2358
    %3907 = vmatprep.subr.bf16.mxu0 %v2367
    %3908 = vmatpush1.bf16.msra.mxu0 %v2366
    %3909 = vmatprep.subr.bf16.mxu0 %v2375
    %3910 = vmatpush1.bf16.msra.mxu0 %v2374
    %3911 = vmatprep.subr.bf16.mxu0 %v2383
    %3912 = vmatpush1.bf16.msra.mxu0 %v2382
    %3913 = vmatprep.subr.bf16.mxu0 %v2391
    %3914 = vmatpush1.bf16.msra.mxu0 %v2390
    %3915 = vmatprep.subr.bf16.mxu0 %v2399
    %3916 = vmatpush1.bf16.msra.mxu0 %v2398
    %3917 = vmatprep.subr.bf16.mxu0 %v2407
    %3918 = vmatpush1.bf16.msra.mxu0 %v2406
    %3919 = vmatprep.subr.bf16.mxu0 %v2415
    %3920 = vmatpush1.bf16.msra.mxu0 %v2414
    %3921 = vmatprep.subr.bf16.mxu0 %v2423
    %3922 = vmatpush1.bf16.msra.mxu0 %v2422
    %3923 = vmatprep.subr.bf16.mxu0 %v2431
    %3924 = vmatpush1.bf16.msra.mxu0 %v2430
    %3925 = vmatprep.subr.bf16.mxu0 %v2439
    %3926 = vmatpush1.bf16.msra.mxu0 %v2438
    %3927 = vmatprep.subr.bf16.mxu0 %v2447
    %3928 = vmatpush1.bf16.msra.mxu0 %v2446
    %3929 = vmatprep.subr.bf16.mxu0 %v2455
    %3930 = vmatpush1.bf16.msra.mxu0 %v2454
    %3931 = vmatprep.subr.bf16.mxu0 %v2463
    %3932 = vmatpush1.bf16.msra.mxu0 %v2462
    %3933 = vmatprep.subr.bf16.mxu0 %v2471
    %3934 = vmatpush1.bf16.msra.mxu0 %v2470
    %3935 = vmatprep.mubr.bf16.mxu0 %v113
    %3936 = vmatmul.mubr.bf16.gmra.mrb[0].mxu0 %v112
    %v3937 = vpop.f32.mrb[0].mxu0
    %v3938 = vadd.f32 %v3887, %v3937
    %v3939 = vpop.f32.mrb[0].mxu0
    %v3940 = vadd.f32 %v3889, %v3939
    %v3941 = vpop.f32.mrb[0].mxu0
    %v3942 = vadd.f32 %v3891, %v3941
    %v3943 = vpop.f32.mrb[0].mxu0
    %v3944 = vadd.f32 %v3893, %v3943
    %3945 = vmatprep.mubr.bf16.mxu0 %v121
    %3946 = vmatmul.mubr.bf16.gmra.mrb[0].mxu0 %v120
    %v3947 = vpop.f32.mrb[0].mxu0
    %v3948 = vadd.f32 %v3897, %v3947
    %v3949 = vpop.f32.mrb[0].mxu0
    %v3950 = vadd.f32 %v3899, %v3949
    %v3951 = vpop.f32.mrb[0].mxu0
    %v3952 = vpop.f32.mrb[0].mxu0
    %3953 = vdwg.mxu0
    %3954 = vmatprep.subr.bf16.mxu0 %v2479
    %3955 = vmatpush1.bf16.msra.mxu0 %v2478
    %3956 = vmatprep.subr.bf16.mxu0 %v2487
    %3957 = vmatpush1.bf16.msra.mxu0 %v2486
    %3958 = vmatprep.subr.bf16.mxu0 %v2495
    %3959 = vmatpush1.bf16.msra.mxu0 %v2494
    %3960 = vmatprep.subr.bf16.mxu0 %v2503
    %3961 = vmatpush1.bf16.msra.mxu0 %v2502
    %3962 = vmatprep.subr.bf16.mxu0 %v2511
    %3963 = vmatpush1.bf16.msra.mxu0 %v2510
    %3964 = vmatprep.subr.bf16.mxu0 %v2519
    %3965 = vmatpush1.bf16.msra.mxu0 %v2518
    %3966 = vmatprep.subr.bf16.mxu0 %v2527
    %3967 = vmatpush1.bf16.msra.mxu0 %v2526
    %3968 = vmatprep.subr.bf16.mxu0 %v2535
    %3969 = vmatpush1.bf16.msra.mxu0 %v2534
    %3970 = vmatprep.subr.bf16.mxu0 %v2543
    %3971 = vmatpush1.bf16.msra.mxu0 %v2542
    %3972 = vmatprep.subr.bf16.mxu0 %v2551
    %3973 = vmatpush1.bf16.msra.mxu0 %v2550
    %3974 = vmatprep.subr.bf16.mxu0 %v2559
    %3975 = vmatpush1.bf16.msra.mxu0 %v2558
    %3976 = vmatprep.subr.bf16.mxu0 %v2567
    %3977 = vmatpush1.bf16.msra.mxu0 %v2566
    %3978 = vmatprep.subr.bf16.mxu0 %v2575
    %3979 = vmatpush1.bf16.msra.mxu0 %v2574
    %3980 = vmatprep.subr.bf16.mxu0 %v2583
    %3981 = vmatpush1.bf16.msra.mxu0 %v2582
    %3982 = vmatprep.subr.bf16.mxu0 %v2591
    %3983 = vmatpush1.bf16.msra.mxu0 %v2590
    %3984 = vmatprep.subr.bf16.mxu0 %v2599
    %3985 = vmatpush1.bf16.msra.mxu0 %v2598
    %3986 = vmatprep.mubr.bf16.mxu0 %v115
    %3987 = vmatmul.mubr.bf16.gmra.mrb[0].mxu0 %v114
    %v3988 = vpop.f32.mrb[0].mxu0
    %v3989 = vadd.f32 %v3938, %v3988
    %v3990 = vpop.f32.mrb[0].mxu0
    %v3991 = vadd.f32 %v3940, %v3990
    %v3992 = vpop.f32.mrb[0].mxu0
    %v3993 = vadd.f32 %v3942, %v3992
    %v3994 = vpop.f32.mrb[0].mxu0
    %v3995 = vadd.f32 %v3944, %v3994
    %3996 = vmatprep.mubr.bf16.mxu0 %v123
    %3997 = vmatmul.mubr.bf16.gmra.mrb[0].mxu0 %v122
    %v3998 = vpop.f32.mrb[0].mxu0
    %v3999 = vadd.f32 %v3948, %v3998
    %v4000 = vpop.f32.mrb[0].mxu0
    %v4001 = vadd.f32 %v3950, %v4000
    %v4002 = vpop.f32.mrb[0].mxu0
    %v4003 = vpop.f32.mrb[0].mxu0
    %4004 = vdwg.mxu0
    %4005 = vmatprep.subr.bf16.mxu0 %v2607
    %4006 = vmatpush1.bf16.msra.mxu0 %v2606
    %4007 = vmatprep.subr.bf16.mxu0 %v2615
    %4008 = vmatpush1.bf16.msra.mxu0 %v2614
    %4009 = vmatprep.subr.bf16.mxu0 %v2623
    %4010 = vmatpush1.bf16.msra.mxu0 %v2622
    %4011 = vmatprep.subr.bf16.mxu0 %v2631
    %4012 = vmatpush1.bf16.msra.mxu0 %v2630
    %4013 = vmatprep.subr.bf16.mxu0 %v2639
    %4014 = vmatpush1.bf16.msra.mxu0 %v2638
    %4015 = vmatprep.subr.bf16.mxu0 %v2647
    %4016 = vmatpush1.bf16.msra.mxu0 %v2646
    %4017 = vmatprep.subr.bf16.mxu0 %v2655
    %4018 = vmatpush1.bf16.msra.mxu0 %v2654
    %4019 = vmatprep.subr.bf16.mxu0 %v2663
    %4020 = vmatpush1.bf16.msra.mxu0 %v2662
    %4021 = vmatprep.subr.bf16.mxu0 %v2671
    %4022 = vmatpush1.bf16.msra.mxu0 %v2670
    %4023 = vmatprep.subr.bf16.mxu0 %v2679
    %4024 = vmatpush1.bf16.msra.mxu0 %v2678
    %4025 = vmatprep.subr.bf16.mxu0 %v2687
    %4026 = vmatpush1.bf16.msra.mxu0 %v2686
    %4027 = vmatprep.subr.bf16.mxu0 %v2695
    %4028 = vmatpush1.bf16.msra.mxu0 %v2694
    %4029 = vmatprep.subr.bf16.mxu0 %v2703
    %4030 = vmatpush1.bf16.msra.mxu0 %v2702
    %4031 = vmatprep.subr.bf16.mxu0 %v2711
    %4032 = vmatpush1.bf16.msra.mxu0 %v2710
    %4033 = vmatprep.subr.bf16.mxu0 %v2719
    %4034 = vmatpush1.bf16.msra.mxu0 %v2718
    %4035 = vmatprep.subr.bf16.mxu0 %v2727
    %4036 = vmatpush1.bf16.msra.mxu0 %v2726
    %4037 = vmatprep.mubr.bf16.mxu0 %v117
    %4038 = vmatmul.mubr.bf16.gmra.mrb[0].mxu0 %v116
    %v4039 = vpop.f32.mrb[0].mxu0
    %v4040 = vadd.f32 %v3989, %v4039
    %v4041 = vpop.f32.mrb[0].mxu0
    %v4042 = vadd.f32 %v3991, %v4041
    %v4043 = vpop.f32.mrb[0].mxu0
    %v4044 = vadd.f32 %v3993, %v4043
    %v4045 = vpop.f32.mrb[0].mxu0
    %v4046 = vadd.f32 %v3995, %v4045
    %4047 = vmatprep.mubr.bf16.mxu0 %v125
    %4048 = vmatmul.mubr.bf16.gmra.mrb[0].mxu0 %v124
    %v4049 = vpop.f32.mrb[0].mxu0
    %v4050 = vadd.f32 %v3999, %v4049
    %v4051 = vpop.f32.mrb[0].mxu0
    %v4052 = vadd.f32 %v4001, %v4051
    %v4053 = vpop.f32.mrb[0].mxu0
    %v4054 = vpop.f32.mrb[0].mxu0
    %4055 = vdwg.mxu0
    %v4056 = vtanh.pop %v3428
    %v4057 = vtanh.pop %v3430
    %v4058 = vtanh.pop %v3632
    %v4059 = vtanh.pop %v3634
    %v4060 = vtanh.pop %v3836
    %v4061 = vtanh.pop %v3838
    %v4062 = vtanh.pop %v4040
    %v4063 = vtanh.pop %v4042
    %v4064 = vtanh.pop %v3432
    %v4065 = vtanh.pop %v3434
    %v4066 = vtanh.pop %v3636
    %v4067 = vtanh.pop %v3638
    %v4068 = vtanh.pop %v3840
    %v4069 = vtanh.pop %v3842
    %v4070 = vtanh.pop %v4044
    %v4071 = vtanh.pop %v4046
    %v4072 = vtanh.pop %v3438
    %v4073 = vtanh.pop %v3440
    %v4074 = vtanh.pop %v3642
    %v4075 = vtanh.pop %v3644
    %v4076 = vtanh.pop %v3846
    %v4077 = vtanh.pop %v3848
    %v4078 = vtanh.pop %v4050
    %v4079 = vtanh.pop %v4052
    %v4080 = vpack.c.bf16 %v4064, %v4056
    %v4081 = vpack.c.bf16 %v4065, %v4057
    %v4082 = vpack.c.bf16 %v4066, %v4058
    %v4083 = vpack.c.bf16 %v4067, %v4059
    %v4084 = vpack.c.bf16 %v4068, %v4060
    %v4085 = vpack.c.bf16 %v4069, %v4061
    %v4086 = vpack.c.bf16 %v4070, %v4062
    %v4087 = vpack.c.bf16 %v4071, %v4063
    %v4088 = vpack.c.bf16 %v4072, %v4072
    %v4089 = vpack.c.bf16 %v4073, %v4073
    %v4090 = vpack.c.bf16 %v4074, %v4074
    %v4091 = vpack.c.bf16 %v4075, %v4075
    %v4092 = vpack.c.bf16 %v4076, %v4076
    %v4093 = vpack.c.bf16 %v4077, %v4077
    %v4094 = vpack.c.bf16 %v4078, %v4078
    %v4095 = vpack.c.bf16 %v4079, %v4079
    %v4096 = vld [vmem:[#allocation8] sm:$0xf]
    %v4097 = vld [vmem:[#allocation8 + $0x4] sm:$0xf]
    %v4098 = vld [vmem:[#allocation8 + $0x8] sm:$0xf]
    %v4099 = vld [vmem:[#allocation8 + $0xc] sm:$0xf]
    %v4100 = vld [vmem:[#allocation8 + $0x10] sm:$0xf]
    %v4101 = vld [vmem:[#allocation8 + $0x14] sm:$0xf]
    %v4102 = vld [vmem:[#allocation8 + $0x18] sm:$0xf]
    %v4103 = vld [vmem:[#allocation8 + $0x1c] sm:$0xf]
    %v4104 = vld [vmem:[#allocation8 + $0x20] sm:$0xf]
    %v4105 = vld [vmem:[#allocation8 + $0x24] sm:$0xf]
    %v4106 = vld [vmem:[#allocation8 + $0x28] sm:$0xf]
    %v4107 = vld [vmem:[#allocation8 + $0x2c] sm:$0xf]
    %v4108 = vld [vmem:[#allocation8 + $0x30] sm:$0xf]
    %v4109 = vld [vmem:[#allocation8 + $0x34] sm:$0xf]
    %v4110 = vld [vmem:[#allocation8 + $0x38] sm:$0xf]
    %v4111 = vld [vmem:[#allocation8 + $0x3c] sm:$0xf]
    %v4112 = vld [vmem:[#allocation8 + $0x40] sm:$0xf]
    %v4113 = vld [vmem:[#allocation8 + $0x44] sm:$0xf]
    %v4114 = vld [vmem:[#allocation8 + $0x48] sm:$0xf]
    %v4115 = vld [vmem:[#allocation8 + $0x4c] sm:$0xf]
    %v4116 = vld [vmem:[#allocation8 + $0x50] sm:$0xf]
    %v4117 = vld [vmem:[#allocation8 + $0x54] sm:$0xf]
    %v4118 = vld [vmem:[#allocation8 + $0x58] sm:$0xf]
    %v4119 = vld [vmem:[#allocation8 + $0x5c] sm:$0xf]
    %v4120 = vld [vmem:[#allocation8 + $0x60] sm:$0xf]
    %v4121 = vld [vmem:[#allocation8 + $0x64] sm:$0xf]
    %v4122 = vld [vmem:[#allocation8 + $0x68] sm:$0xf]
    %v4123 = vld [vmem:[#allocation8 + $0x6c] sm:$0xf]
    %v4124 = vld [vmem:[#allocation8 + $0x70] sm:$0xf]
    %v4125 = vld [vmem:[#allocation8 + $0x74] sm:$0xf]
    %v4126 = vld [vmem:[#allocation8 + $0x78] sm:$0xf]
    %v4127 = vld [vmem:[#allocation8 + $0x7c] sm:$0xf]
    %v4128 = vld [vmem:[#allocation8 + $0x80] sm:$0xf]
    %v4129 = vld [vmem:[#allocation8 + $0x84] sm:$0xf]
    %v4130 = vld [vmem:[#allocation8 + $0x88] sm:$0xf]
    %v4131 = vld [vmem:[#allocation8 + $0x8c] sm:$0xf]
    %v4132 = vld [vmem:[#allocation8 + $0x90] sm:$0xf]
    %v4133 = vld [vmem:[#allocation8 + $0x94] sm:$0xf]
    %v4134 = vld [vmem:[#allocation8 + $0x98] sm:$0xf]
    %v4135 = vld [vmem:[#allocation8 + $0x9c] sm:$0xf]
    %v4136 = vld [vmem:[#allocation8 + $0xa0] sm:$0xf]
    %v4137 = vld [vmem:[#allocation8 + $0xa4] sm:$0xf]
    %v4138 = vld [vmem:[#allocation8 + $0xa8] sm:$0xf]
    %v4139 = vld [vmem:[#allocation8 + $0xac] sm:$0xf]
    %v4140 = vld [vmem:[#allocation8 + $0xb0] sm:$0xf]
    %v4141 = vld [vmem:[#allocation8 + $0xb4] sm:$0xf]
    %v4142 = vld [vmem:[#allocation8 + $0xb8] sm:$0xf]
    %v4143 = vld [vmem:[#allocation8 + $0xbc] sm:$0xf]
    %v4144 = vld [vmem:[#allocation8 + $0xc0] sm:$0xf]
    %v4145 = vld [vmem:[#allocation8 + $0xc4] sm:$0xf]
    %v4146 = vld [vmem:[#allocation8 + $0xc8] sm:$0xf]
    %v4147 = vld [vmem:[#allocation8 + $0xcc] sm:$0xf]
    %v4148 = vld [vmem:[#allocation8 + $0xd0] sm:$0xf]
    %v4149 = vld [vmem:[#allocation8 + $0xd4] sm:$0xf]
    %v4150 = vld [vmem:[#allocation8 + $0xd8] sm:$0xf]
    %v4151 = vld [vmem:[#allocation8 + $0xdc] sm:$0xf]
    %v4152 = vld [vmem:[#allocation8 + $0xe0] sm:$0xf]
    %v4153 = vld [vmem:[#allocation8 + $0xe4] sm:$0xf]
    %v4154 = vld [vmem:[#allocation8 + $0xe8] sm:$0xf]
    %v4155 = vld [vmem:[#allocation8 + $0xec] sm:$0xf]
    %v4156 = vld [vmem:[#allocation8 + $0xf0] sm:$0xf]
    %v4157 = vld [vmem:[#allocation8 + $0xf4] sm:$0xf]
    %v4158 = vld [vmem:[#allocation8 + $0xf8] sm:$0xf]
    %v4159 = vld [vmem:[#allocation8 + $0xfc] sm:$0xf]
    %v4160 = vld [vmem:[#allocation8 + $0x100] sm:$0xf]
    %v4161 = vld [vmem:[#allocation8 + $0x104] sm:$0xf]
    %v4162 = vld [vmem:[#allocation8 + $0x108] sm:$0xf]
    %v4163 = vld [vmem:[#allocation8 + $0x10c] sm:$0xf]
    %v4164 = vld [vmem:[#allocation8 + $0x110] sm:$0xf]
    %v4165 = vld [vmem:[#allocation8 + $0x114] sm:$0xf]
    %v4166 = vld [vmem:[#allocation8 + $0x118] sm:$0xf]
    %v4167 = vld [vmem:[#allocation8 + $0x11c] sm:$0xf]
    %v4168 = vld [vmem:[#allocation8 + $0x120] sm:$0xf]
    %v4169 = vld [vmem:[#allocation8 + $0x124] sm:$0xf]
    %v4170 = vld [vmem:[#allocation8 + $0x128] sm:$0xf]
    %v4171 = vld [vmem:[#allocation8 + $0x12c] sm:$0xf]
    %v4172 = vld [vmem:[#allocation8 + $0x130] sm:$0xf]
    %v4173 = vld [vmem:[#allocation8 + $0x134] sm:$0xf]
    %v4174 = vld [vmem:[#allocation8 + $0x138] sm:$0xf]
    %v4175 = vld [vmem:[#allocation8 + $0x13c] sm:$0xf]
    %v4176 = vld [vmem:[#allocation8 + $0x140] sm:$0xf]
    %v4177 = vld [vmem:[#allocation8 + $0x144] sm:$0xf]
    %v4178 = vld [vmem:[#allocation8 + $0x148] sm:$0xf]
    %v4179 = vld [vmem:[#allocation8 + $0x14c] sm:$0xf]
    %v4180 = vld [vmem:[#allocation8 + $0x150] sm:$0xf]
    %v4181 = vld [vmem:[#allocation8 + $0x154] sm:$0xf]
    %v4182 = vld [vmem:[#allocation8 + $0x158] sm:$0xf]
    %v4183 = vld [vmem:[#allocation8 + $0x15c] sm:$0xf]
    %v4184 = vld [vmem:[#allocation8 + $0x160] sm:$0xf]
    %v4185 = vld [vmem:[#allocation8 + $0x164] sm:$0xf]
    %v4186 = vld [vmem:[#allocation8 + $0x168] sm:$0xf]
    %v4187 = vld [vmem:[#allocation8 + $0x16c] sm:$0xf]
    %v4188 = vld [vmem:[#allocation8 + $0x170] sm:$0xf]
    %v4189 = vld [vmem:[#allocation8 + $0x174] sm:$0xf]
    %v4190 = vld [vmem:[#allocation8 + $0x178] sm:$0xf]
    %v4191 = vld [vmem:[#allocation8 + $0x17c] sm:$0xf]
    %v4192 = vld [vmem:[#allocation8 + $0x180] sm:$0xf]
    %v4193 = vld [vmem:[#allocation8 + $0x184] sm:$0xf]
    %v4194 = vld [vmem:[#allocation8 + $0x188] sm:$0xf]
    %v4195 = vld [vmem:[#allocation8 + $0x18c] sm:$0xf]
    %v4196 = vld [vmem:[#allocation8 + $0x190] sm:$0xf]
    %v4197 = vld [vmem:[#allocation8 + $0x194] sm:$0xf]
    %v4198 = vld [vmem:[#allocation8 + $0x198] sm:$0xf]
    %v4199 = vld [vmem:[#allocation8 + $0x19c] sm:$0xf]
    %v4200 = vld [vmem:[#allocation8 + $0x1a0] sm:$0xf]
    %v4201 = vld [vmem:[#allocation8 + $0x1a4] sm:$0xf]
    %v4202 = vld [vmem:[#allocation8 + $0x1a8] sm:$0xf]
    %v4203 = vld [vmem:[#allocation8 + $0x1ac] sm:$0xf]
    %v4204 = vld [vmem:[#allocation8 + $0x1b0] sm:$0xf]
    %v4205 = vld [vmem:[#allocation8 + $0x1b4] sm:$0xf]
    %v4206 = vld [vmem:[#allocation8 + $0x1b8] sm:$0xf]
    %v4207 = vld [vmem:[#allocation8 + $0x1bc] sm:$0xf]
    %v4208 = vld [vmem:[#allocation8 + $0x1c0] sm:$0xf]
    %v4209 = vld [vmem:[#allocation8 + $0x1c4] sm:$0xf]
    %v4210 = vld [vmem:[#allocation8 + $0x1c8] sm:$0xf]
    %v4211 = vld [vmem:[#allocation8 + $0x1cc] sm:$0xf]
    %v4212 = vld [vmem:[#allocation8 + $0x1d0] sm:$0xf]
    %v4213 = vld [vmem:[#allocation8 + $0x1d4] sm:$0xf]
    %v4214 = vld [vmem:[#allocation8 + $0x1d8] sm:$0xf]
    %v4215 = vld [vmem:[#allocation8 + $0x1dc] sm:$0xf]
    %v4216 = vld [vmem:[#allocation8 + $0x1e0] sm:$0xf]
    %v4217 = vld [vmem:[#allocation8 + $0x1e4] sm:$0xf]
    %v4218 = vld [vmem:[#allocation8 + $0x1e8] sm:$0xf]
    %v4219 = vld [vmem:[#allocation8 + $0x1ec] sm:$0xf]
    %v4220 = vld [vmem:[#allocation8 + $0x1f0] sm:$0xf]
    %v4221 = vld [vmem:[#allocation8 + $0x1f4] sm:$0xf]
    %v4222 = vld [vmem:[#allocation8 + $0x1f8] sm:$0xf]
    %v4223 = vld [vmem:[#allocation8 + $0x1fc] sm:$0xf]
    %v4224 = vld [vmem:[#allocation10] sm:$0x1]
    %v4226 = vlaneseq
    %v4227 = vshrl.u32 %v4226, 7
    %v4228 = vsub.s32 0, %v4227
    %v4229 = vrot.slane %v4224, %v4228
    %v4359 = vunpack.c.l.b16 %v4096
    %v4360 = vunpack.c.l.b16 %v4097
    %v4361 = vunpack.c.l.b16 %v4098
    %v4362 = vunpack.c.l.b16 %v4099
    %v4363 = vunpack.c.l.b16 %v4100
    %v4364 = vunpack.c.l.b16 %v4101
    %v4365 = vunpack.c.l.b16 %v4102
    %v4366 = vunpack.c.l.b16 %v4103
    %v4367 = vunpack.c.l.b16 %v4104
    %v4368 = vunpack.c.l.b16 %v4105
    %v4369 = vunpack.c.l.b16 %v4106
    %v4370 = vunpack.c.l.b16 %v4107
    %v4371 = vunpack.c.l.b16 %v4108
    %v4372 = vunpack.c.l.b16 %v4109
    %v4373 = vunpack.c.l.b16 %v4110
    %v4374 = vunpack.c.l.b16 %v4111
    %v4375 = vunpack.c.l.b16 %v4112
    %v4376 = vunpack.c.l.b16 %v4113
    %v4377 = vunpack.c.l.b16 %v4114
    %v4378 = vunpack.c.l.b16 %v4115
    %v4379 = vunpack.c.l.b16 %v4116
    %v4380 = vunpack.c.l.b16 %v4117
    %v4381 = vunpack.c.l.b16 %v4118
    %v4382 = vunpack.c.l.b16 %v4119
    %v4383 = vunpack.c.l.b16 %v4120
    %v4384 = vunpack.c.l.b16 %v4121
    %v4385 = vunpack.c.l.b16 %v4122
    %v4386 = vunpack.c.l.b16 %v4123
    %v4387 = vunpack.c.l.b16 %v4124
    %v4388 = vunpack.c.l.b16 %v4125
    %v4389 = vunpack.c.l.b16 %v4126
    %v4390 = vunpack.c.l.b16 %v4127
    %v4391 = vunpack.c.l.b16 %v4128
    %v4392 = vunpack.c.l.b16 %v4129
    %v4393 = vunpack.c.l.b16 %v4130
    %v4394 = vunpack.c.l.b16 %v4131
    %v4395 = vunpack.c.l.b16 %v4132
    %v4396 = vunpack.c.l.b16 %v4133
    %v4397 = vunpack.c.l.b16 %v4134
    %v4398 = vunpack.c.l.b16 %v4135
    %v4399 = vunpack.c.l.b16 %v4136
    %v4400 = vunpack.c.l.b16 %v4137
    %v4401 = vunpack.c.l.b16 %v4138
    %v4402 = vunpack.c.l.b16 %v4139
    %v4403 = vunpack.c.l.b16 %v4140
    %v4404 = vunpack.c.l.b16 %v4141
    %v4405 = vunpack.c.l.b16 %v4142
    %v4406 = vunpack.c.l.b16 %v4143
    %v4407 = vunpack.c.l.b16 %v4144
    %v4408 = vunpack.c.l.b16 %v4145
    %v4409 = vunpack.c.l.b16 %v4146
    %v4410 = vunpack.c.l.b16 %v4147
    %v4411 = vunpack.c.l.b16 %v4148
    %v4412 = vunpack.c.l.b16 %v4149
    %v4413 = vunpack.c.l.b16 %v4150
    %v4414 = vunpack.c.l.b16 %v4151
    %v4415 = vunpack.c.l.b16 %v4152
    %v4416 = vunpack.c.l.b16 %v4153
    %v4417 = vunpack.c.l.b16 %v4154
    %v4418 = vunpack.c.l.b16 %v4155
    %v4419 = vunpack.c.l.b16 %v4156
    %v4420 = vunpack.c.l.b16 %v4157
    %v4421 = vunpack.c.l.b16 %v4158
    %v4422 = vunpack.c.l.b16 %v4159
    %v4423 = vunpack.c.l.b16 %v4160
    %v4424 = vunpack.c.l.b16 %v4161
    %v4425 = vunpack.c.l.b16 %v4162
    %v4426 = vunpack.c.l.b16 %v4163
    %v4427 = vunpack.c.l.b16 %v4164
    %v4428 = vunpack.c.l.b16 %v4165
    %v4429 = vunpack.c.l.b16 %v4166
    %v4430 = vunpack.c.l.b16 %v4167
    %v4431 = vunpack.c.l.b16 %v4168
    %v4432 = vunpack.c.l.b16 %v4169
    %v4433 = vunpack.c.l.b16 %v4170
    %v4434 = vunpack.c.l.b16 %v4171
    %v4435 = vunpack.c.l.b16 %v4172
    %v4436 = vunpack.c.l.b16 %v4173
    %v4437 = vunpack.c.l.b16 %v4174
    %v4438 = vunpack.c.l.b16 %v4175
    %v4439 = vunpack.c.l.b16 %v4176
    %v4440 = vunpack.c.l.b16 %v4177
    %v4441 = vunpack.c.l.b16 %v4178
    %v4442 = vunpack.c.l.b16 %v4179
    %v4443 = vunpack.c.l.b16 %v4180
    %v4444 = vunpack.c.l.b16 %v4181
    %v4445 = vunpack.c.l.b16 %v4182
    %v4446 = vunpack.c.l.b16 %v4183
    %v4447 = vunpack.c.l.b16 %v4184
    %v4448 = vunpack.c.l.b16 %v4185
    %v4449 = vunpack.c.l.b16 %v4186
    %v4450 = vunpack.c.l.b16 %v4187
    %v4451 = vunpack.c.l.b16 %v4188
    %v4452 = vunpack.c.l.b16 %v4189
    %v4453 = vunpack.c.l.b16 %v4190
    %v4454 = vunpack.c.l.b16 %v4191
    %v4455 = vunpack.c.l.b16 %v4192
    %v4456 = vunpack.c.l.b16 %v4193
    %v4457 = vunpack.c.l.b16 %v4194
    %v4458 = vunpack.c.l.b16 %v4195
    %v4459 = vunpack.c.l.b16 %v4196
    %v4460 = vunpack.c.l.b16 %v4197
    %v4461 = vunpack.c.l.b16 %v4198
    %v4462 = vunpack.c.l.b16 %v4199
    %v4463 = vunpack.c.l.b16 %v4200
    %v4464 = vunpack.c.l.b16 %v4201
    %v4465 = vunpack.c.l.b16 %v4202
    %v4466 = vunpack.c.l.b16 %v4203
    %v4467 = vunpack.c.l.b16 %v4204
    %v4468 = vunpack.c.l.b16 %v4205
    %v4469 = vunpack.c.l.b16 %v4206
    %v4470 = vunpack.c.l.b16 %v4207
    %v4471 = vunpack.c.l.b16 %v4208
    %v4472 = vunpack.c.l.b16 %v4209
    %v4473 = vunpack.c.l.b16 %v4210
    %v4474 = vunpack.c.l.b16 %v4211
    %v4475 = vunpack.c.l.b16 %v4212
    %v4476 = vunpack.c.l.b16 %v4213
    %v4477 = vunpack.c.l.b16 %v4214
    %v4478 = vunpack.c.l.b16 %v4215
    %v4479 = vunpack.c.l.b16 %v4216
    %v4480 = vunpack.c.l.b16 %v4217
    %v4481 = vunpack.c.l.b16 %v4218
    %v4482 = vunpack.c.l.b16 %v4219
    %v4483 = vunpack.c.l.b16 %v4220
    %v4484 = vunpack.c.l.b16 %v4221
    %v4485 = vunpack.c.l.b16 %v4222
    %v4486 = vunpack.c.l.b16 %v4223
    %v4487 = vpack.c.b16 %v4360, %v4359
    %v4488 = vpack.c.b16 %v4362, %v4361
    %v4489 = vpack.c.b16 %v4364, %v4363
    %v4490 = vpack.c.b16 %v4366, %v4365
    %v4491 = vpack.c.b16 %v4368, %v4367
    %v4492 = vpack.c.b16 %v4370, %v4369
    %v4493 = vpack.c.b16 %v4372, %v4371
    %v4494 = vpack.c.b16 %v4374, %v4373
    %v4495 = vpack.c.b16 %v4376, %v4375
    %v4496 = vpack.c.b16 %v4378, %v4377
    %v4497 = vpack.c.b16 %v4380, %v4379
    %v4498 = vpack.c.b16 %v4382, %v4381
    %v4499 = vpack.c.b16 %v4384, %v4383
    %v4500 = vpack.c.b16 %v4386, %v4385
    %v4501 = vpack.c.b16 %v4388, %v4387
    %v4502 = vpack.c.b16 %v4390, %v4389
    %v4503 = vpack.c.b16 %v4392, %v4391
    %v4504 = vpack.c.b16 %v4394, %v4393
    %v4505 = vpack.c.b16 %v4396, %v4395
    %v4506 = vpack.c.b16 %v4398, %v4397
    %v4507 = vpack.c.b16 %v4400, %v4399
    %v4508 = vpack.c.b16 %v4402, %v4401
    %v4509 = vpack.c.b16 %v4404, %v4403
    %v4510 = vpack.c.b16 %v4406, %v4405
    %v4511 = vpack.c.b16 %v4408, %v4407
    %v4512 = vpack.c.b16 %v4410, %v4409
    %v4513 = vpack.c.b16 %v4412, %v4411
    %v4514 = vpack.c.b16 %v4414, %v4413
    %v4515 = vpack.c.b16 %v4416, %v4415
    %v4516 = vpack.c.b16 %v4418, %v4417
    %v4517 = vpack.c.b16 %v4420, %v4419
    %v4518 = vpack.c.b16 %v4422, %v4421
    %v4519 = vpack.c.b16 %v4424, %v4423
    %v4520 = vpack.c.b16 %v4426, %v4425
    %v4521 = vpack.c.b16 %v4428, %v4427
    %v4522 = vpack.c.b16 %v4430, %v4429
    %v4523 = vpack.c.b16 %v4432, %v4431
    %v4524 = vpack.c.b16 %v4434, %v4433
    %v4525 = vpack.c.b16 %v4436, %v4435
    %v4526 = vpack.c.b16 %v4438, %v4437
    %v4527 = vpack.c.b16 %v4440, %v4439
    %v4528 = vpack.c.b16 %v4442, %v4441
    %v4529 = vpack.c.b16 %v4444, %v4443
    %v4530 = vpack.c.b16 %v4446, %v4445
    %v4531 = vpack.c.b16 %v4448, %v4447
    %v4532 = vpack.c.b16 %v4450, %v4449
    %v4533 = vpack.c.b16 %v4452, %v4451
    %v4534 = vpack.c.b16 %v4454, %v4453
    %v4535 = vpack.c.b16 %v4456, %v4455
    %v4536 = vpack.c.b16 %v4458, %v4457
    %v4537 = vpack.c.b16 %v4460, %v4459
    %v4538 = vpack.c.b16 %v4462, %v4461
    %v4539 = vpack.c.b16 %v4464, %v4463
    %v4540 = vpack.c.b16 %v4466, %v4465
    %v4541 = vpack.c.b16 %v4468, %v4467
    %v4542 = vpack.c.b16 %v4470, %v4469
    %v4543 = vpack.c.b16 %v4472, %v4471
    %v4544 = vpack.c.b16 %v4474, %v4473
    %v4545 = vpack.c.b16 %v4476, %v4475
    %v4546 = vpack.c.b16 %v4478, %v4477
    %v4547 = vpack.c.b16 %v4480, %v4479
    %v4548 = vpack.c.b16 %v4482, %v4481
    %v4549 = vpack.c.b16 %v4484, %v4483
    %v4550 = vpack.c.b16 %v4486, %v4485
    %4615 = vmatprep.subr.bf16.mxu0 0
    %4616 = vmatpush1.bf16.msra.mxu0 %v4487
    %4617 = vmatprep.subr.bf16.mxu0 0
    %4618 = vmatpush1.bf16.msra.mxu0 %v4488
    %4619 = vmatprep.subr.bf16.mxu0 0
    %4620 = vmatpush1.bf16.msra.mxu0 %v4489
    %4621 = vmatprep.subr.bf16.mxu0 0
    %4622 = vmatpush1.bf16.msra.mxu0 %v4490
    %4623 = vmatprep.subr.bf16.mxu0 0
    %4624 = vmatpush1.bf16.msra.mxu0 %v4491
    %4625 = vmatprep.subr.bf16.mxu0 0
    %4626 = vmatpush1.bf16.msra.mxu0 %v4492
    %4627 = vmatprep.subr.bf16.mxu0 0
    %4628 = vmatpush1.bf16.msra.mxu0 %v4493
    %4629 = vmatprep.subr.bf16.mxu0 0
    %4630 = vmatpush1.bf16.msra.mxu0 %v4494
    %4631 = vmatprep.subr.bf16.mxu0 0
    %4632 = vmatpush1.bf16.msra.mxu0 %v4495
    %4633 = vmatprep.subr.bf16.mxu0 0
    %4634 = vmatpush1.bf16.msra.mxu0 %v4496
    %4635 = vmatprep.subr.bf16.mxu0 0
    %4636 = vmatpush1.bf16.msra.mxu0 %v4497
    %4637 = vmatprep.subr.bf16.mxu0 0
    %4638 = vmatpush1.bf16.msra.mxu0 %v4498
    %4639 = vmatprep.subr.bf16.mxu0 0
    %4640 = vmatpush1.bf16.msra.mxu0 %v4499
    %4641 = vmatprep.subr.bf16.mxu0 0
    %4642 = vmatpush1.bf16.msra.mxu0 %v4500
    %4643 = vmatprep.subr.bf16.mxu0 0
    %4644 = vmatpush1.bf16.msra.mxu0 %v4501
    %4645 = vmatprep.subr.bf16.mxu0 0
    %4646 = vmatpush1.bf16.msra.mxu0 %v4502
    %4647 = vmatprep.mubr.bf16.mxu0 %v4081
    %4648 = vmatmul.mubr.bf16.gmra.mrb[0].mxu0 %v4080
    %v4649 = vpop.f32.mrb[0].mxu0
    %v4650 = vadd.f32 %v4229, %v4649
    %v4651 = vpop.f32.mrb[0].mxu0
    %v4652 = vpop.f32.mrb[0].mxu0
    %v4653 = vadd.f32 %v4229, %v4652
    %v4654 = vpop.f32.mrb[0].mxu0
    %4655 = vmatprep.mubr.bf16.mxu0 %v4089
    %4656 = vmatmul.mubr.bf16.gmra.mrb[0].mxu0 %v4088
    %v4657 = vpop.f32.mrb[0].mxu0
    %v4658 = vadd.f32 %v4229, %v4657
    %v4659 = vpop.f32.mrb[0].mxu0
    %v4660 = vpop.f32.mrb[0].mxu0
    %v4661 = vpop.f32.mrb[0].mxu0
    %4662 = vdwg.mxu0
    %4663 = vmatprep.subr.bf16.mxu0 0
    %4664 = vmatpush1.bf16.msra.mxu0 %v4503
    %4665 = vmatprep.subr.bf16.mxu0 0
    %4666 = vmatpush1.bf16.msra.mxu0 %v4504
    %4667 = vmatprep.subr.bf16.mxu0 0
    %4668 = vmatpush1.bf16.msra.mxu0 %v4505
    %4669 = vmatprep.subr.bf16.mxu0 0
    %4670 = vmatpush1.bf16.msra.mxu0 %v4506
    %4671 = vmatprep.subr.bf16.mxu0 0
    %4672 = vmatpush1.bf16.msra.mxu0 %v4507
    %4673 = vmatprep.subr.bf16.mxu0 0
    %4674 = vmatpush1.bf16.msra.mxu0 %v4508
    %4675 = vmatprep.subr.bf16.mxu0 0
    %4676 = vmatpush1.bf16.msra.mxu0 %v4509
    %4677 = vmatprep.subr.bf16.mxu0 0
    %4678 = vmatpush1.bf16.msra.mxu0 %v4510
    %4679 = vmatprep.subr.bf16.mxu0 0
    %4680 = vmatpush1.bf16.msra.mxu0 %v4511
    %4681 = vmatprep.subr.bf16.mxu0 0
    %4682 = vmatpush1.bf16.msra.mxu0 %v4512
    %4683 = vmatprep.subr.bf16.mxu0 0
    %4684 = vmatpush1.bf16.msra.mxu0 %v4513
    %4685 = vmatprep.subr.bf16.mxu0 0
    %4686 = vmatpush1.bf16.msra.mxu0 %v4514
    %4687 = vmatprep.subr.bf16.mxu0 0
    %4688 = vmatpush1.bf16.msra.mxu0 %v4515
    %4689 = vmatprep.subr.bf16.mxu0 0
    %4690 = vmatpush1.bf16.msra.mxu0 %v4516
    %4691 = vmatprep.subr.bf16.mxu0 0
    %4692 = vmatpush1.bf16.msra.mxu0 %v4517
    %4693 = vmatprep.subr.bf16.mxu0 0
    %4694 = vmatpush1.bf16.msra.mxu0 %v4518
    %4695 = vmatprep.mubr.bf16.mxu0 %v4083
    %4696 = vmatmul.mubr.bf16.gmra.mrb[0].mxu0 %v4082
    %v4697 = vpop.f32.mrb[0].mxu0
    %v4698 = vadd.f32 %v4650, %v4697
    %v4699 = vpop.f32.mrb[0].mxu0
    %v4700 = vpop.f32.mrb[0].mxu0
    %v4701 = vadd.f32 %v4653, %v4700
    %v4702 = vpop.f32.mrb[0].mxu0
    %4703 = vmatprep.mubr.bf16.mxu0 %v4091
    %4704 = vmatmul.mubr.bf16.gmra.mrb[0].mxu0 %v4090
    %v4705 = vpop.f32.mrb[0].mxu0
    %v4706 = vadd.f32 %v4658, %v4705
    %v4707 = vpop.f32.mrb[0].mxu0
    %v4708 = vpop.f32.mrb[0].mxu0
    %v4709 = vpop.f32.mrb[0].mxu0
    %4710 = vdwg.mxu0
    %4711 = vmatprep.subr.bf16.mxu0 0
    %4712 = vmatpush1.bf16.msra.mxu0 %v4519
    %4713 = vmatprep.subr.bf16.mxu0 0
    %4714 = vmatpush1.bf16.msra.mxu0 %v4520
    %4715 = vmatprep.subr.bf16.mxu0 0
    %4716 = vmatpush1.bf16.msra.mxu0 %v4521
    %4717 = vmatprep.subr.bf16.mxu0 0
    %4718 = vmatpush1.bf16.msra.mxu0 %v4522
    %4719 = vmatprep.subr.bf16.mxu0 0
    %4720 = vmatpush1.bf16.msra.mxu0 %v4523
    %4721 = vmatprep.subr.bf16.mxu0 0
    %4722 = vmatpush1.bf16.msra.mxu0 %v4524
    %4723 = vmatprep.subr.bf16.mxu0 0
    %4724 = vmatpush1.bf16.msra.mxu0 %v4525
    %4725 = vmatprep.subr.bf16.mxu0 0
    %4726 = vmatpush1.bf16.msra.mxu0 %v4526
    %4727 = vmatprep.subr.bf16.mxu0 0
    %4728 = vmatpush1.bf16.msra.mxu0 %v4527
    %4729 = vmatprep.subr.bf16.mxu0 0
    %4730 = vmatpush1.bf16.msra.mxu0 %v4528
    %4731 = vmatprep.subr.bf16.mxu0 0
    %4732 = vmatpush1.bf16.msra.mxu0 %v4529
    %4733 = vmatprep.subr.bf16.mxu0 0
    %4734 = vmatpush1.bf16.msra.mxu0 %v4530
    %4735 = vmatprep.subr.bf16.mxu0 0
    %4736 = vmatpush1.bf16.msra.mxu0 %v4531
    %4737 = vmatprep.subr.bf16.mxu0 0
    %4738 = vmatpush1.bf16.msra.mxu0 %v4532
    %4739 = vmatprep.subr.bf16.mxu0 0
    %4740 = vmatpush1.bf16.msra.mxu0 %v4533
    %4741 = vmatprep.subr.bf16.mxu0 0
    %4742 = vmatpush1.bf16.msra.mxu0 %v4534
    %4743 = vmatprep.mubr.bf16.mxu0 %v4085
    %4744 = vmatmul.mubr.bf16.gmra.mrb[0].mxu0 %v4084
    %v4745 = vpop.f32.mrb[0].mxu0
    %v4746 = vadd.f32 %v4698, %v4745
    %v4747 = vpop.f32.mrb[0].mxu0
    %v4748 = vpop.f32.mrb[0].mxu0
    %v4749 = vadd.f32 %v4701, %v4748
    %v4750 = vpop.f32.mrb[0].mxu0
    %4751 = vmatprep.mubr.bf16.mxu0 %v4093
    %4752 = vmatmul.mubr.bf16.gmra.mrb[0].mxu0 %v4092
    %v4753 = vpop.f32.mrb[0].mxu0
    %v4754 = vadd.f32 %v4706, %v4753
    %v4755 = vpop.f32.mrb[0].mxu0
    %v4756 = vpop.f32.mrb[0].mxu0
    %v4757 = vpop.f32.mrb[0].mxu0
    %4758 = vdwg.mxu0
    %4759 = vmatprep.subr.bf16.mxu0 0
    %4760 = vmatpush1.bf16.msra.mxu0 %v4535
    %4761 = vmatprep.subr.bf16.mxu0 0
    %4762 = vmatpush1.bf16.msra.mxu0 %v4536
    %4763 = vmatprep.subr.bf16.mxu0 0
    %4764 = vmatpush1.bf16.msra.mxu0 %v4537
    %4765 = vmatprep.subr.bf16.mxu0 0
    %4766 = vmatpush1.bf16.msra.mxu0 %v4538
    %4767 = vmatprep.subr.bf16.mxu0 0
    %4768 = vmatpush1.bf16.msra.mxu0 %v4539
    %4769 = vmatprep.subr.bf16.mxu0 0
    %4770 = vmatpush1.bf16.msra.mxu0 %v4540
    %4771 = vmatprep.subr.bf16.mxu0 0
    %4772 = vmatpush1.bf16.msra.mxu0 %v4541
    %4773 = vmatprep.subr.bf16.mxu0 0
    %4774 = vmatpush1.bf16.msra.mxu0 %v4542
    %4775 = vmatprep.subr.bf16.mxu0 0
    %4776 = vmatpush1.bf16.msra.mxu0 %v4543
    %4777 = vmatprep.subr.bf16.mxu0 0
    %4778 = vmatpush1.bf16.msra.mxu0 %v4544
    %4779 = vmatprep.subr.bf16.mxu0 0
    %4780 = vmatpush1.bf16.msra.mxu0 %v4545
    %4781 = vmatprep.subr.bf16.mxu0 0
    %4782 = vmatpush1.bf16.msra.mxu0 %v4546
    %4783 = vmatprep.subr.bf16.mxu0 0
    %4784 = vmatpush1.bf16.msra.mxu0 %v4547
    %4785 = vmatprep.subr.bf16.mxu0 0
    %4786 = vmatpush1.bf16.msra.mxu0 %v4548
    %4787 = vmatprep.subr.bf16.mxu0 0
    %4788 = vmatpush1.bf16.msra.mxu0 %v4549
    %4789 = vmatprep.subr.bf16.mxu0 0
    %4790 = vmatpush1.bf16.msra.mxu0 %v4550
    %4791 = vmatprep.mubr.bf16.mxu0 %v4087
    %4792 = vmatmul.mubr.bf16.gmra.mrb[0].mxu0 %v4086
    %v4793 = vpop.f32.mrb[0].mxu0
    %v4794 = vadd.f32 %v4746, %v4793
    %v4795 = vpop.f32.mrb[0].mxu0
    %v4796 = vpop.f32.mrb[0].mxu0
    %v4797 = vadd.f32 %v4749, %v4796
    %v4798 = vpop.f32.mrb[0].mxu0
    %4799 = vmatprep.mubr.bf16.mxu0 %v4095
    %4800 = vmatmul.mubr.bf16.gmra.mrb[0].mxu0 %v4094
    %v4801 = vpop.f32.mrb[0].mxu0
    %v4802 = vadd.f32 %v4754, %v4801
    %v4803 = vpop.f32.mrb[0].mxu0
    %v4804 = vpop.f32.mrb[0].mxu0
    %v4805 = vpop.f32.mrb[0].mxu0
    %4806 = vdwg.mxu0
    %v4807 = vtanh.pop %v4794
    %v4808 = vtanh.pop %v4797
    %v4809 = vtanh.pop %v4802
    %4810 = vst [vmem:[#allocation11] sm:$0xff] %v4807
    %4811 = vst [vmem:[#allocation11 + $0x8] sm:$0xff] %v4808
    %4812 = vst [vmem:[#allocation11 + $0x10] sm:$0xff] %v4809
    // Predicated region
    $region42: #{tpu_custom_call.1} parent=1 // pred_check
      _
    $region43: #{tpu_custom_call.1} parent=1 // pred_check_branch
      %4814 = sbr.rel (0) target = $region45
    $region44: #{tpu_custom_call.1} parent=1 // pred_region
      %s4816 = ssub.s32 384, 384
      %4817 = vsyncadd [#allocation4], %s4816
      %s4818 = sshll.u32 [#allocation11], 4
      %s4819 = int_to_ptr.vmem [resolvable:$true] %s4818
      %4824 = dma.vmem_to_hbm [thread:$0]  %s4819, 384, %s5, [#allocation4], 128, 128, 8
    $region45: #{tpu_custom_call.1} parent=1 // pred_fallthru
      _
    // Predicated region
    $region46: #{tpu_custom_call.1} parent=1 // pred_check
      _
    $region47: #{tpu_custom_call.1} parent=1 // pred_check_branch
      %4826 = sbr.rel (0) target = $region49
    $region48: #{tpu_custom_call.1} parent=1 // pred_region
      %4827 = dma.done [#allocation4], 384
    $region49: #{tpu_custom_call.1} parent=1 // pred_fallthru
      _
    %4828 = vsyncpa [#allocation3], 1
    %4829 = vsyncpa [#allocation6], 1
    %4830 = vsyncpa [#allocation9], 1
    %4831 = vsyncpa [#allocation4], 1

</llo_original>
